<compile_context>
chip_gen: v5e
topology: v5e:2x2
jax: 0.10.0
libtpu: 0.0.40
codegen_flags: <defaults>
</compile_context>

<pallas_src>
import functools

import jax
import jax.numpy as jnp
from jax.experimental import pallas as pl
from jax.experimental.pallas import tpu as pltpu


def _round_up(x, m):
    return -(-x // m) * m


# ---------------------------------------------------------------------------
# Fused Pallas kernel (all RepVGG layers + softmax/split) per (batch, row-tile)
# ---------------------------------------------------------------------------
def _make_fused_kernel(num_layers, tile_rows, kernel_levels, cols_p,
                       compute_dtype):
    L = num_layers
    kl = kernel_levels

    def kernel(*refs):
        # refs = (x, mask, w0, b0, ..., w_{L-1}, b_{L-1}, out)
        x_ref, msk_ref = refs[0], refs[1]
        w_refs = [refs[2 + 2 * k] for k in range(L)]
        b_refs = [refs[3 + 2 * k] for k in range(L)]
        out_ref = refs[2 + 2 * L]

        mask = msk_ref[...]                      # (npos, 1) f32 in-image mask
        src = x_ref[...]                         # (npos, Cin) bf16, row-flat

        for k in range(L):
            # ---- pack the 3x3 taps into the contraction dim (K = 9*Cin) ----
            # dx shifts (+-1, the only misaligned ones) are done once on the
            # narrow slab; dy shifts (+-cols_p, aligned) on the 3x slab.
            xl = jnp.roll(src, 1, axis=0)        # reads q-1      -> kx = 0
            xr = jnp.roll(src, -1, axis=0)       # reads q+1      -> kx = 2
            x3 = jnp.concatenate([xl, src, xr], axis=1)       # (npos, 3*Cin)
            xu = jnp.roll(x3, cols_p, axis=0)    # reads row above -> ky = 0
            xd = jnp.roll(x3, -cols_p, axis=0)   # reads row below -> ky = 2
            x9 = jnp.concatenate([xu, x3, xd], axis=1)        # (npos, 9*Cin)
            # Wrap-around contamination from the flattened rolls only lands in
            # border rows/cols that later layers never consume, and the mask
            # below re-zeroes everything out-of-image, so the math is exact.

            if k < L - 1:
                acc = jnp.dot(x9, w_refs[k][...],
                              preferred_element_type=jnp.float32)
                h = jnp.clip(acc + b_refs[k][...], 0.0, 6.0)  # bias + relu6
                # 'same' zero padding for the next layer == zero everything
                # outside the image; carried as a VMEM value (no scratch, no
                # per-step zeroing).
                src = (h * mask).astype(compute_dtype)
            else:
                # Final layer: keep only the tile_rows rows that are emitted.
                x9 = x9[L * cols_p:(L + tile_rows) * cols_p, :]
                acc = jnp.dot(x9, w_refs[k][...],
                              preferred_element_type=jnp.float32)
                h = jnp.clip(acc + b_refs[k][...], 0.0, 6.0)  # (nk_out, 2*kl)
                # Lane-dense tail: transpose (XLU) so channels sit on sublanes
                # and softmax / the single store run over a wide lane axis.
                ht = jnp.transpose(h)                         # (2*kl, nk_out)
                wml = ht[:kl, :]
                mx = jnp.max(wml, axis=0, keepdims=True)
                e = jnp.exp(wml - mx)
                denom = jnp.sum(e, axis=0, keepdims=True)
                wm = e * pl.reciprocal(denom, approx=True)
                out_ref[...] = jnp.concatenate([wm, ht[kl:, :]], axis=0)

    return kernel


# ---------------------------------------------------------------------------
# Parameter construction / RepVGG branch folding
# ---------------------------------------------------------------------------
def init_guidance_net(key, in_channels, mid_channels, num_branches,
                      num_layers, kernel_levels):
    layer_dims = []
    for i in range(num_layers - 1):
        layer_dims.append((mid_channels if i > 0 else in_channels, mid_channels))
    layer_dims.append((mid_channels if num_layers > 1 else in_channels,
                       kernel_levels * 2))
    params = []
    for (cin, cout) in layer_dims:
        layer = {"conv3": [], "conv1": []}
        for _ in range(num_branches):
            key, k1, k2 = jax.random.split(key, 3)
            w = 0.1 * jax.random.normal(k1, (cout, cin, 3, 3), jnp.float32)
            b = 0.1 * jax.random.normal(k2, (cout,), jnp.float32)
            layer["conv3"].append((w, b))
        for _ in range(num_branches):
            key, k1, k2 = jax.random.split(key, 3)
            w = 0.1 * jax.random.normal(k1, (cout, cin, 1, 1), jnp.float32)
            b = 0.1 * jax.random.normal(k2, (cout,), jnp.float32)
            layer["conv1"].append((w, b))
        params.append(layer)
    return params


def _fold_repvgg_layer(layer, compute_dtype):
    """Fold all conv3x3/conv1x1 branches (+ identity when Cin==Cout) into one
    effective 3x3 conv (everything is linear before relu6).  Returns
    w_eff (9*Cin, Cout) ordered (ky, kx, Cin) to match the in-kernel im2col
    lane order, and b_eff (1, Cout) f32."""
    cout, cin = layer["conv3"][0][0].shape[:2]
    w3 = sum(w for w, _ in layer["conv3"])              # (Cout, Cin, 3, 3)
    w1 = sum(w for w, _ in layer["conv1"])              # (Cout, Cin, 1, 1)
    w_eff = w3.at[:, :, 1, 1].add(w1[:, :, 0, 0])
    if cin == cout:
        w_eff = w_eff.at[:, :, 1, 1].add(jnp.eye(cout, dtype=jnp.float32))
    b_eff = (sum(b for _, b in layer["conv3"])
             + sum(b for _, b in layer["conv1"]))
    w_eff = jnp.transpose(w_eff, (2, 3, 1, 0)).reshape(9 * cin, cout)
    return w_eff.astype(compute_dtype), b_eff.reshape(1, cout).astype(jnp.float32)


# ---------------------------------------------------------------------------
# VMEM budgeting / tiling
# ---------------------------------------------------------------------------
def _vmem_budget_bytes():
    """Generation-aware budgets (v5e/v6e: 128 MiB VMEM, v7x: 64 MiB)."""
    cap = 64 * 1024 * 1024
    try:
        cap = int(pltpu.get_tpu_info().vmem_capacity_bytes)
    except Exception:
        pass
    tile_budget = min(cap * 3 // 8, 48 * 1024 * 1024)
    vmem_limit = min(cap * 3 // 4, 96 * 1024 * 1024)
    return tile_budget, vmem_limit


def _pick_tile_rows(hgt, wid, L, c_in, couts, budget_bytes):
    """Largest divisor of H whose fused working set fits the budget."""
    cols_p = _round_up(wid + 2 * L, 8)
    c_max = max([c_in] + list(couts))
    best = 1
    for tm in range(1, hgt + 1):
        if hgt % tm:
            continue
        npos = (tm + 2 * L) * cols_p
        est = (2 * npos * c_in * 2               # input tile (double-buffered)
               + 2 * npos * 4                    # mask
               + npos * 9 * c_max * 2            # packed im2col slab (bf16)
               + npos * 3 * c_max * 2            # dx-concat intermediate
               + npos * c_max * (4 + 2 + 2)      # f32 acc + carried activation
               + 2 * 2 * couts[-1] * tm * cols_p * 4)   # output (double-buf)
        if est <= budget_bytes:
            best = tm
    return best


# ---------------------------------------------------------------------------
# GuidanceNet forward (matches the PyTorch module: returns NCHW maps)
# ---------------------------------------------------------------------------
def guidance_net_forward(x_nchw, params, kernel_levels, tile_rows=None,
                         compute_dtype=jnp.bfloat16):
    n, c_in, hgt, wid = x_nchw.shape
    L = len(params)
    kl = kernel_levels

    folded = [_fold_repvgg_layer(layer, compute_dtype) for layer in params]
    couts = [w.shape[1] for w, _ in folded]
    assert couts[-1] == 2 * kl

    tile_budget, vmem_limit = _vmem_budget_bytes()
    if tile_rows is None:
        tile_rows = _pick_tile_rows(hgt, wid, L, c_in, couts, tile_budget)
    assert hgt % tile_rows == 0, "tile_rows must divide H"
    tm = tile_rows
    ntiles = hgt // tm

    rows_p = tm + 2 * L
    cols_p = _round_up(wid + 2 * L, 8)           # row pitch (sublane aligned)
    npos = rows_p * cols_p
    nk_out = tm * cols_p

    # ---- XLA glue (layout only): NHWC, zero pad, flatten rows per tile ----
    # TODO(synk): the per-tile stacking duplicates the 2L halo rows in HBM; a
    # pl.Element row-offset window (or manual-DMA overlapping copy) on the
    # single padded array would avoid this extra copy / redundant HBM read.
    x = jnp.transpose(x_nchw, (0, 2, 3, 1)).astype(compute_dtype)      # NHWC
    xpad = jnp.pad(x, ((0, 0), (L, L), (L, cols_p - wid - L), (0, 0)))
    tiles = [xpad[:, t * tm:t * tm + rows_p].reshape(n, npos, c_in)
             for t in range(ntiles)]
    x_tiles = jnp.stack(tiles, axis=1)                   # (N, ntiles, npos, Cin)

    # Per-tile in-image mask over the flattened padded grid (tiny).
    r_idx = jnp.arange(rows_p)[:, None]
    c_idx = jnp.arange(cols_p)[None, :]
    masks = []
    for t in range(ntiles):
        rg = r_idx + t * tm
        m = ((rg >= L) & (rg < L + hgt) & (c_idx >= L) & (c_idx < L + wid))
        masks.append(m.astype(jnp.float32).reshape(npos, 1))
    mask = jnp.stack(masks, axis=0)                       # (ntiles, npos, 1)

    kernel = _make_fused_kernel(L, tm, kl, cols_p, compute_dtype)

    in_specs = [
        pl.BlockSpec((None, None, npos, c_in), lambda i, j: (i, j, 0, 0)),
        pl.BlockSpec((None, npos, 1), lambda i, j: (j, 0, 0)),
    ]
    weight_args = []
    for w_eff, b_eff in folded:
        in_specs.append(pl.BlockSpec(w_eff.shape, lambda i, j: (0, 0)))
        in_specs.append(pl.BlockSpec(b_eff.shape, lambda i, j: (0, 0)))
        weight_args += [w_eff, b_eff]

    out_spec = pl.BlockSpec((None, None, 2 * kl, nk_out),
                            lambda i, j: (i, j, 0, 0))
    out_shape = jax.ShapeDtypeStruct((n, ntiles, 2 * kl, nk_out), jnp.float32)

    y = pl.pallas_call(
        kernel,
        grid=(n, ntiles),
        in_specs=in_specs,
        out_specs=out_spec,
        out_shape=out_shape,
        compiler_params=pltpu.CompilerParams(
            dimension_semantics=("parallel", "parallel"),
            vmem_limit_bytes=vmem_limit),
    )(x_tiles, mask, *weight_args)

    # TODO(synk): for very large tiles, chunk the M (rows) dim with an inner
    # fori_loop + fused epilogue to bound the f32 temporary footprint.

    # Crop padded columns, stitch tiles, split wm/gm (tiny XLA ops).
    y = y.reshape(n, ntiles, 2 * kl, tm, cols_p)[:, :, :, :, L:L + wid]
    y = jnp.transpose(y, (0, 2, 1, 3, 4)).reshape(n, 2 * kl, hgt, wid)
    return y[:, :kl], y[:, kl:]


# ---------------------------------------------------------------------------
# Pure-JAX (f32) reference mirroring the PyTorch forward branch-by-branch
# ---------------------------------------------------------------------------
def _ref_guidance_net(x_nchw, params, kernel_levels):
    def conv(x, w, b):
        y = jax.lax.conv_general_dilated(
            x, w, window_strides=(1, 1), padding="SAME",
            dimension_numbers=("NCHW", "OIHW", "NCHW"))
        return y + b[None, :, None, None]

    x = x_nchw.astype(jnp.float32)
    for layer in params:
        cout, cin = layer["conv3"][0][0].shape[:2]
        nb = len(layer["conv3"])
        h = conv(x, *layer["conv3"][nb - 1])
        for i in range(nb - 1):
            h = h + conv(x, *layer["conv3"][i])
        for i in range(nb):
            h = h + conv(x, *layer["conv1"][i])
        if cin == cout:
            h = h + x
        x = jnp.clip(h, 0.0, 6.0)
    wm = jax.nn.softmax(x[:, :kernel_levels], axis=1)
    gm = x[:, kernel_levels:]
    return wm, gm


if __name__ == "__main__":
    in_channels, mid_channels = 4, 32
    num_branches, num_layers, kernel_levels = 2, 3, 4
    N, H, W = 2, 16, 16

    key = jax.random.PRNGKey(0)
    kp, kx = jax.random.split(key)
    params = init_guidance_net(kp, in_channels, mid_channels, num_branches,
                               num_layers, kernel_levels)
    x = jax.random.normal(kx, (N, in_channels, H, W), jnp.float32)

    fwd = jax.jit(functools.partial(guidance_net_forward,
                                    kernel_levels=kernel_levels,
                                    tile_rows=8))
    weight_map, guidance_map = fwd(x, params)
    jax.block_until_ready((weight_map, guidance_map))

    assert weight_map.shape == (N, kernel_levels, H, W)
    assert guidance_map.shape == (N, kernel_levels, H, W)

    wm_ref, gm_ref = _ref_guidance_net(x, params, kernel_levels)
    # bf16 matmuls + approx reciprocal -> looser tolerance than a pure-f32 run.
    assert jnp.allclose(weight_map, wm_ref, atol=5e-2, rtol=5e-2)
    assert jnp.allclose(guidance_map, gm_ref, atol=5e-2, rtol=5e-2)

    print("KERNEL_OK")
</pallas_src>

<mosaic_0001>
module attributes {stable_mosaic.version = 11 : i64} {
  func.func @kernel(%arg0: i32, %arg1: i32, %arg2: memref<1x1x336x4xbf16, #tpu.memory_space<vmem>>, %arg3: memref<1x336x1xf32, #tpu.memory_space<vmem>>, %arg4: memref<36x32xbf16, #tpu.memory_space<vmem>>, %arg5: memref<1x32xf32, #tpu.memory_space<vmem>>, %arg6: memref<288x32xbf16, #tpu.memory_space<vmem>>, %arg7: memref<1x32xf32, #tpu.memory_space<vmem>>, %arg8: memref<288x8xbf16, #tpu.memory_space<vmem>>, %arg9: memref<1x8xf32, #tpu.memory_space<vmem>>, %arg10: memref<1x1x8x192xf32, #tpu.memory_space<vmem>>) attributes {dimension_semantics = [#tpu.dimension_semantics<parallel>, #tpu.dimension_semantics<parallel>], iteration_bounds = array<i64: 2, 2>, scalar_prefetch = 0 : i64, scratch_operands = 0 : i64, tpu.core_type = #tpu.core_type<tc>, window_params = [{transform_indices = @transform_0, window_bounds = array<i64: 1, 1, 336, 4>}, {transform_indices = @transform_1, window_bounds = array<i64: 1, 336, 1>}, {pipeline_mode = #tpu.pipeline_mode<synchronous>, transform_indices = @transform_2, window_bounds = array<i64: 36, 32>}, {pipeline_mode = #tpu.pipeline_mode<synchronous>, transform_indices = @transform_3, window_bounds = array<i64: 1, 32>}, {pipeline_mode = #tpu.pipeline_mode<synchronous>, transform_indices = @transform_4, window_bounds = array<i64: 288, 32>}, {pipeline_mode = #tpu.pipeline_mode<synchronous>, transform_indices = @transform_5, window_bounds = array<i64: 1, 32>}, {pipeline_mode = #tpu.pipeline_mode<synchronous>, transform_indices = @transform_6, window_bounds = array<i64: 288, 8>}, {pipeline_mode = #tpu.pipeline_mode<synchronous>, transform_indices = @transform_7, window_bounds = array<i64: 1, 8>}, {transform_indices = @transform_8, window_bounds = array<i64: 1, 1, 8, 192>}]} {
    %c0 = arith.constant 0 : index
    %c0_0 = arith.constant 0 : index
    %c0_1 = arith.constant 0 : index
    %0 = vector.load %arg3[%c0, %c0_0, %c0_1] : memref<1x336x1xf32, #tpu.memory_space<vmem>>, vector<1x336x1xf32>
    %1 = vector.shape_cast %0 : vector<1x336x1xf32> to vector<336x1xf32>
    %c0_2 = arith.constant 0 : index
    %c0_3 = arith.constant 0 : index
    %c0_4 = arith.constant 0 : index
    %c0_5 = arith.constant 0 : index
    %2 = vector.load %arg2[%c0_2, %c0_3, %c0_4, %c0_5] : memref<1x1x336x4xbf16, #tpu.memory_space<vmem>>, vector<1x1x336x4xbf16>
    %3 = vector.shape_cast %2 : vector<1x1x336x4xbf16> to vector<336x4xbf16>
    %4 = vector.extract_strided_slice %3 {offsets = [335, 0], sizes = [1, 4], strides = [1, 1]} : vector<336x4xbf16> to vector<1x4xbf16>
    %5 = vector.extract_strided_slice %3 {offsets = [0, 0], sizes = [335, 4], strides = [1, 1]} : vector<336x4xbf16> to vector<335x4xbf16>
    %6 = tpu.concatenate %4, %5 in 0 : vector<1x4xbf16>, vector<335x4xbf16> -> vector<336x4xbf16>
    %7 = vector.extract_strided_slice %3 {offsets = [1, 0], sizes = [335, 4], strides = [1, 1]} : vector<336x4xbf16> to vector<335x4xbf16>
    %8 = vector.extract_strided_slice %3 {offsets = [0, 0], sizes = [1, 4], strides = [1, 1]} : vector<336x4xbf16> to vector<1x4xbf16>
    %9 = tpu.concatenate %7, %8 in 0 : vector<335x4xbf16>, vector<1x4xbf16> -> vector<336x4xbf16>
    %10 = tpu.concatenate %6, %3, %9 in 1 : vector<336x4xbf16>, vector<336x4xbf16>, vector<336x4xbf16> -> vector<336x12xbf16>
    %11 = vector.extract_strided_slice %10 {offsets = [312, 0], sizes = [24, 12], strides = [1, 1]} : vector<336x12xbf16> to vector<24x12xbf16>
    %12 = vector.extract_strided_slice %10 {offsets = [0, 0], sizes = [312, 12], strides = [1, 1]} : vector<336x12xbf16> to vector<312x12xbf16>
    %13 = tpu.concatenate %11, %12 in 0 : vector<24x12xbf16>, vector<312x12xbf16> -> vector<336x12xbf16>
    %14 = vector.extract_strided_slice %10 {offsets = [24, 0], sizes = [312, 12], strides = [1, 1]} : vector<336x12xbf16> to vector<312x12xbf16>
    %15 = vector.extract_strided_slice %10 {offsets = [0, 0], sizes = [24, 12], strides = [1, 1]} : vector<336x12xbf16> to vector<24x12xbf16>
    %16 = tpu.concatenate %14, %15 in 0 : vector<312x12xbf16>, vector<24x12xbf16> -> vector<336x12xbf16>
    %17 = tpu.concatenate %13, %10, %16 in 1 : vector<336x12xbf16>, vector<336x12xbf16>, vector<336x12xbf16> -> vector<336x36xbf16>
    %c0_6 = arith.constant 0 : index
    %c0_7 = arith.constant 0 : index
    %18 = vector.load %arg4[%c0_6, %c0_7] : memref<36x32xbf16, #tpu.memory_space<vmem>>, vector<36x32xbf16>
    %cst = arith.constant dense<0.000000e+00> : vector<336x32xf32>
    %19 = tpu.matmul %17, %18, %cst {dimension_numbers = #tpu.dot_dimension_numbers<[1], [0], [0], [1], [0, 0, 1, 1], [], []>} : vector<336x36xbf16>, vector<36x32xbf16>, vector<336x32xf32> -> vector<336x32xf32>
    %c0_8 = arith.constant 0 : index
    %c0_9 = arith.constant 0 : index
    %20 = vector.load %arg5[%c0_8, %c0_9] : memref<1x32xf32, #tpu.memory_space<vmem>>, vector<1x32xf32>
    %21 = vector.broadcast %20 : vector<1x32xf32> to vector<336x32xf32>
    %22 = arith.addf %19, %21 : vector<336x32xf32>
    %cst_10 = arith.constant 0.000000e+00 : f32
    %cst_11 = arith.constant 6.000000e+00 : f32
    %23 = vector.broadcast %cst_10 : f32 to vector<336x32xf32>
    %24 = arith.maximumf %23, %22 : vector<336x32xf32>
    %25 = vector.broadcast %cst_11 : f32 to vector<336x32xf32>
    %26 = arith.minimumf %25, %24 : vector<336x32xf32>
    %27 = vector.broadcast %1 : vector<336x1xf32> to vector<336x32xf32>
    %28 = arith.mulf %26, %27 : vector<336x32xf32>
    %29 = arith.truncf %28 : vector<336x32xf32> to vector<336x32xbf16>
    %30 = vector.extract_strided_slice %29 {offsets = [335, 0], sizes = [1, 32], strides = [1, 1]} : vector<336x32xbf16> to vector<1x32xbf16>
    %31 = vector.extract_strided_slice %29 {offsets = [0, 0], sizes = [335, 32], strides = [1, 1]} : vector<336x32xbf16> to vector<335x32xbf16>
    %32 = tpu.concatenate %30, %31 in 0 : vector<1x32xbf16>, vector<335x32xbf16> -> vector<336x32xbf16>
    %33 = vector.extract_strided_slice %29 {offsets = [1, 0], sizes = [335, 32], strides = [1, 1]} : vector<336x32xbf16> to vector<335x32xbf16>
    %34 = vector.extract_strided_slice %29 {offsets = [0, 0], sizes = [1, 32], strides = [1, 1]} : vector<336x32xbf16> to vector<1x32xbf16>
    %35 = tpu.concatenate %33, %34 in 0 : vector<335x32xbf16>, vector<1x32xbf16> -> vector<336x32xbf16>
    %36 = tpu.concatenate %32, %29, %35 in 1 : vector<336x32xbf16>, vector<336x32xbf16>, vector<336x32xbf16> -> vector<336x96xbf16>
    %37 = vector.extract_strided_slice %36 {offsets = [312, 0], sizes = [24, 96], strides = [1, 1]} : vector<336x96xbf16> to vector<24x96xbf16>
    %38 = vector.extract_strided_slice %36 {offsets = [0, 0], sizes = [312, 96], strides = [1, 1]} : vector<336x96xbf16> to vector<312x96xbf16>
    %39 = tpu.concatenate %37, %38 in 0 : vector<24x96xbf16>, vector<312x96xbf16> -> vector<336x96xbf16>
    %40 = vector.extract_strided_slice %36 {offsets = [24, 0], sizes = [312, 96], strides = [1, 1]} : vector<336x96xbf16> to vector<312x96xbf16>
    %41 = vector.extract_strided_slice %36 {offsets = [0, 0], sizes = [24, 96], strides = [1, 1]} : vector<336x96xbf16> to vector<24x96xbf16>
    %42 = tpu.concatenate %40, %41 in 0 : vector<312x96xbf16>, vector<24x96xbf16> -> vector<336x96xbf16>
    %43 = tpu.concatenate %39, %36, %42 in 1 : vector<336x96xbf16>, vector<336x96xbf16>, vector<336x96xbf16> -> vector<336x288xbf16>
    %c0_12 = arith.constant 0 : index
    %c0_13 = arith.constant 0 : index
    %44 = vector.load %arg6[%c0_12, %c0_13] : memref<288x32xbf16, #tpu.memory_space<vmem>>, vector<288x32xbf16>
    %cst_14 = arith.constant dense<0.000000e+00> : vector<336x32xf32>
    %45 = tpu.matmul %43, %44, %cst_14 {dimension_numbers = #tpu.dot_dimension_numbers<[1], [0], [0], [1], [0, 0, 1, 1], [], []>} : vector<336x288xbf16>, vector<288x32xbf16>, vector<336x32xf32> -> vector<336x32xf32>
    %c0_15 = arith.constant 0 : index
    %c0_16 = arith.constant 0 : index
    %46 = vector.load %arg7[%c0_15, %c0_16] : memref<1x32xf32, #tpu.memory_space<vmem>>, vector<1x32xf32>
    %47 = vector.broadcast %46 : vector<1x32xf32> to vector<336x32xf32>
    %48 = arith.addf %45, %47 : vector<336x32xf32>
    %cst_17 = arith.constant 0.000000e+00 : f32
    %cst_18 = arith.constant 6.000000e+00 : f32
    %49 = vector.broadcast %cst_17 : f32 to vector<336x32xf32>
    %50 = arith.maximumf %49, %48 : vector<336x32xf32>
    %51 = vector.broadcast %cst_18 : f32 to vector<336x32xf32>
    %52 = arith.minimumf %51, %50 : vector<336x32xf32>
    %53 = vector.broadcast %1 : vector<336x1xf32> to vector<336x32xf32>
    %54 = arith.mulf %52, %53 : vector<336x32xf32>
    %55 = arith.truncf %54 : vector<336x32xf32> to vector<336x32xbf16>
    %56 = vector.extract_strided_slice %55 {offsets = [335, 0], sizes = [1, 32], strides = [1, 1]} : vector<336x32xbf16> to vector<1x32xbf16>
    %57 = vector.extract_strided_slice %55 {offsets = [0, 0], sizes = [335, 32], strides = [1, 1]} : vector<336x32xbf16> to vector<335x32xbf16>
    %58 = tpu.concatenate %56, %57 in 0 : vector<1x32xbf16>, vector<335x32xbf16> -> vector<336x32xbf16>
    %59 = vector.extract_strided_slice %55 {offsets = [1, 0], sizes = [335, 32], strides = [1, 1]} : vector<336x32xbf16> to vector<335x32xbf16>
    %60 = vector.extract_strided_slice %55 {offsets = [0, 0], sizes = [1, 32], strides = [1, 1]} : vector<336x32xbf16> to vector<1x32xbf16>
    %61 = tpu.concatenate %59, %60 in 0 : vector<335x32xbf16>, vector<1x32xbf16> -> vector<336x32xbf16>
    %62 = tpu.concatenate %58, %55, %61 in 1 : vector<336x32xbf16>, vector<336x32xbf16>, vector<336x32xbf16> -> vector<336x96xbf16>
    %63 = vector.extract_strided_slice %62 {offsets = [312, 0], sizes = [24, 96], strides = [1, 1]} : vector<336x96xbf16> to vector<24x96xbf16>
    %64 = vector.extract_strided_slice %62 {offsets = [0, 0], sizes = [312, 96], strides = [1, 1]} : vector<336x96xbf16> to vector<312x96xbf16>
    %65 = tpu.concatenate %63, %64 in 0 : vector<24x96xbf16>, vector<312x96xbf16> -> vector<336x96xbf16>
    %66 = vector.extract_strided_slice %62 {offsets = [24, 0], sizes = [312, 96], strides = [1, 1]} : vector<336x96xbf16> to vector<312x96xbf16>
    %67 = vector.extract_strided_slice %62 {offsets = [0, 0], sizes = [24, 96], strides = [1, 1]} : vector<336x96xbf16> to vector<24x96xbf16>
    %68 = tpu.concatenate %66, %67 in 0 : vector<312x96xbf16>, vector<24x96xbf16> -> vector<336x96xbf16>
    %69 = tpu.concatenate %65, %62, %68 in 1 : vector<336x96xbf16>, vector<336x96xbf16>, vector<336x96xbf16> -> vector<336x288xbf16>
    %70 = vector.extract_strided_slice %69 {offsets = [72, 0], sizes = [192, 288], strides = [1, 1]} : vector<336x288xbf16> to vector<192x288xbf16>
    %c0_19 = arith.constant 0 : index
    %c0_20 = arith.constant 0 : index
    %71 = vector.load %arg8[%c0_19, %c0_20] : memref<288x8xbf16, #tpu.memory_space<vmem>>, vector<288x8xbf16>
    %cst_21 = arith.constant dense<0.000000e+00> : vector<192x8xf32>
    %72 = tpu.matmul %70, %71, %cst_21 {dimension_numbers = #tpu.dot_dimension_numbers<[1], [0], [0], [1], [0, 0, 1, 1], [], []>} : vector<192x288xbf16>, vector<288x8xbf16>, vector<192x8xf32> -> vector<192x8xf32>
    %c0_22 = arith.constant 0 : index
    %c0_23 = arith.constant 0 : index
    %73 = vector.load %arg9[%c0_22, %c0_23] : memref<1x8xf32, #tpu.memory_space<vmem>>, vector<1x8xf32>
    %74 = vector.broadcast %73 : vector<1x8xf32> to vector<192x8xf32>
    %75 = arith.addf %72, %74 : vector<192x8xf32>
    %cst_24 = arith.constant 0.000000e+00 : f32
    %cst_25 = arith.constant 6.000000e+00 : f32
    %76 = vector.broadcast %cst_24 : f32 to vector<192x8xf32>
    %77 = arith.maximumf %76, %75 : vector<192x8xf32>
    %78 = vector.broadcast %cst_25 : f32 to vector<192x8xf32>
    %79 = arith.minimumf %78, %77 : vector<192x8xf32>
    %80 = tpu.transpose %79, [1, 0] : vector<192x8xf32> -> vector<8x192xf32>
    %81 = vector.extract_strided_slice %80 {offsets = [0, 0], sizes = [4, 192], strides = [1, 1]} : vector<8x192xf32> to vector<4x192xf32>
    %cst_26 = arith.constant dense<0xFF800000> : vector<192xf32>
    %82 = vector.multi_reduction <maximumf>, %81, %cst_26 [0] : vector<4x192xf32> to vector<192xf32>
    %83 = vector.shape_cast %82 : vector<192xf32> to vector<1x192xf32>
    %84 = vector.broadcast %83 : vector<1x192xf32> to vector<4x192xf32>
    %85 = arith.subf %81, %84 : vector<4x192xf32>
    %86 = math.exp %85 : vector<4x192xf32>
    %cst_27 = arith.constant dense<0.000000e+00> : vector<192xf32>
    %87 = vector.multi_reduction <add>, %86, %cst_27 [0] : vector<4x192xf32> to vector<192xf32>
    %88 = vector.shape_cast %87 : vector<192xf32> to vector<1x192xf32>
    %89 = tpu.reciprocal %88 {approx = true} : vector<1x192xf32> -> vector<1x192xf32>
    %90 = vector.broadcast %89 : vector<1x192xf32> to vector<4x192xf32>
    %91 = arith.mulf %86, %90 : vector<4x192xf32>
    %92 = vector.extract_strided_slice %80 {offsets = [4, 0], sizes = [4, 192], strides = [1, 1]} : vector<8x192xf32> to vector<4x192xf32>
    %93 = tpu.concatenate %91, %92 in 0 : vector<4x192xf32>, vector<4x192xf32> -> vector<8x192xf32>
    %c0_28 = arith.constant 0 : index
    %c0_29 = arith.constant 0 : index
    %c0_30 = arith.constant 0 : index
    %c0_31 = arith.constant 0 : index
    %94 = vector.load %arg10[%c0_28, %c0_29, %c0_30, %c0_31] : memref<1x1x8x192xf32, #tpu.memory_space<vmem>>, vector<1x1x8x192xf32>
    %95 = vector.shape_cast %94 : vector<1x1x8x192xf32> to vector<8x192xf32>
    %96 = vector.shape_cast %93 : vector<8x192xf32> to vector<1x1x8x192xf32>
    tpu.vector_store %arg10[%c0_28, %c0_29, %c0_30, %c0_31], %96 {strides = array<i32>} : memref<1x1x8x192xf32, #tpu.memory_space<vmem>>, vector<1x1x8x192xf32>,
    return
  }
  func.func @transform_0(%arg0: i32, %arg1: i32) -> (i32, i32, i32, i32) {
    %c0_i32 = arith.constant 0 : i32
    %c0_i32_0 = arith.constant 0 : i32
    %c0_i32_1 = arith.constant 0 : i32
    return %arg0, %arg1, %c0_i32, %c0_i32_0 : i32, i32, i32, i32
  }
  func.func @transform_1(%arg0: i32, %arg1: i32) -> (i32, i32, i32) {
    %c0_i32 = arith.constant 0 : i32
    %c0_i32_0 = arith.constant 0 : i32
    %c0_i32_1 = arith.constant 0 : i32
    return %arg1, %c0_i32, %c0_i32_0 : i32, i32, i32
  }
  func.func @transform_2(%arg0: i32, %arg1: i32) -> (i32, i32) {
    %c0_i32 = arith.constant 0 : i32
    %c0_i32_0 = arith.constant 0 : i32
    %c0_i32_1 = arith.constant 0 : i32
    return %c0_i32, %c0_i32_0 : i32, i32
  }
  func.func @transform_3(%arg0: i32, %arg1: i32) -> (i32, i32) {
    %c0_i32 = arith.constant 0 : i32
    %c0_i32_0 = arith.constant 0 : i32
    %c0_i32_1 = arith.constant 0 : i32
    return %c0_i32, %c0_i32_0 : i32, i32
  }
  func.func @transform_4(%arg0: i32, %arg1: i32) -> (i32, i32) {
    %c0_i32 = arith.constant 0 : i32
    %c0_i32_0 = arith.constant 0 : i32
    %c0_i32_1 = arith.constant 0 : i32
    return %c0_i32, %c0_i32_0 : i32, i32
  }
  func.func @transform_5(%arg0: i32, %arg1: i32) -> (i32, i32) {
    %c0_i32 = arith.constant 0 : i32
    %c0_i32_0 = arith.constant 0 : i32
    %c0_i32_1 = arith.constant 0 : i32
    return %c0_i32, %c0_i32_0 : i32, i32
  }
  func.func @transform_6(%arg0: i32, %arg1: i32) -> (i32, i32) {
    %c0_i32 = arith.constant 0 : i32
    %c0_i32_0 = arith.constant 0 : i32
    %c0_i32_1 = arith.constant 0 : i32
    return %c0_i32, %c0_i32_0 : i32, i32
  }
  func.func @transform_7(%arg0: i32, %arg1: i32) -> (i32, i32) {
    %c0_i32 = arith.constant 0 : i32
    %c0_i32_0 = arith.constant 0 : i32
    %c0_i32_1 = arith.constant 0 : i32
    return %c0_i32, %c0_i32_0 : i32, i32
  }
  func.func @transform_8(%arg0: i32, %arg1: i32) -> (i32, i32, i32, i32) {
    %c0_i32 = arith.constant 0 : i32
    %c0_i32_0 = arith.constant 0 : i32
    %c0_i32_1 = arith.constant 0 : i32
    return %arg0, %arg1, %c0_i32, %c0_i32_0 : i32, i32, i32, i32
  }
}

</mosaic_0001>

<llo_original>
// kernel: guidance_net_forward.1
$region0: #{guidance_net_forward.1}
  #allocation0 [shape = 'u32[]', space=smem, size = 0x4, offset = 0x4, fixed_abs, tag = 'smem constant byte address 0x4 - core index']
  #allocation1 [shape = 'u32[72,128]{1,0:T(1,128)}', space=vmem, size = 0x9000, scoped, tag = 'internal scratch']
  %s0 = inlined_call_operand.vmem [shape: bf16[2,2,336,4], index: 0, kind: input, shape index: {}]
  %s1 = inlined_call_operand.vmem [shape: f32[2,336,1], index: 1, kind: input, shape index: {}]
  %s2 = inlined_call_operand.vmem [shape: bf16[36,32], index: 2, kind: input, shape index: {}]
  %s3 = inlined_call_operand.vmem [shape: f32[1,32], index: 3, kind: input, shape index: {}]
  %s4 = inlined_call_operand.vmem [shape: bf16[288,32], index: 4, kind: input, shape index: {}]
  %s5 = inlined_call_operand.vmem [shape: f32[1,32], index: 5, kind: input, shape index: {}]
  %s6 = inlined_call_operand.vmem [shape: bf16[288,8], index: 6, kind: input, shape index: {}]
  %s7 = inlined_call_operand.vmem [shape: f32[1,8], index: 7, kind: input, shape index: {}]
  %s8 = inlined_call_operand.vmem [shape: f32[2,2,8,192], index: 8, kind: output, shape index: {}]
  %s9 = sld [smem:[#allocation0]]
  $region65: #{guidance_net_forward.1} parent=0
    _
  %s11 = ssub.s32 1, %s9
  %s12 = scalar_select 0, %s11, %s9
  loop: start=0, step=1, limit=6
  $region2: #{guidance_net_forward.1} parent=0 // loop_pre_header
    _
  $region3: #{guidance_net_forward.1} parent=0 // loop_header
    %s14 = sphi 0, %s18
    %p15 = scmp.ge.s32.totalorder %s14, 6
    %s21 = sphi 0, %s33
    %s22 = sphi 0, %s29
    %s23 = sphi 0, %s21
    %s24 = sphi 0, %s22
    %s25 = sphi 0, %s23
    %s26 = sphi 0, %s24
    %s38 = sphi 0, %s40
    %s41 = sphi 0, %s38
    %s42 = sphi 0, %s41
    %s58 = sphi 0, %s42
    %s64 = sphi 0, %s66
    %s67 = sphi 0, %s64
    %s68 = sphi 0, %s67
    %s84 = sphi 0, %s68
    %s88 = sphi 0, %s88
    %s90 = sphi 0, %s88
    %s91 = sphi 0, %s90
    %s105 = sphi 0, %s91
    %s109 = sphi 0, %s109
    %s111 = sphi 0, %s109
    %s112 = sphi 0, %s111
    %s126 = sphi 0, %s112
    %s130 = sphi 0, %s130
    %s132 = sphi 0, %s130
    %s133 = sphi 0, %s132
    %s147 = sphi 0, %s133
    %s151 = sphi 0, %s151
    %s153 = sphi 0, %s151
    %s154 = sphi 0, %s153
    %s168 = sphi 0, %s154
    %s172 = sphi 0, %s172
    %s174 = sphi 0, %s172
    %s175 = sphi 0, %s174
    %s189 = sphi 0, %s175
    %s193 = sphi 0, %s193
    %s195 = sphi 0, %s193
    %s196 = sphi 0, %s195
    %s210 = sphi 0, %s196
    %s218 = sphi 0, %s220
    %s221 = sphi 0, %s218
    %s222 = sphi 0, %s221
    %s238 = sphi 0, %s222
  $region4: #{guidance_net_forward.1} parent=0 // loop_header_branch
    %17 = sbr.rel (%p15) target = $region8
  $region5: #{guidance_net_forward.1} parent=0 // loop_body
    %s19 = ssub.s32 %s14, 1
    %s20 = ssub.s32 %s14, 2
    %s27 = sadd.s32 1, %s22
    %p28 = scmp.ge.s32.totalorder %s27, 2
    %s29 = scalar_select %p28, 0, %s27
    %s30 = sadd.s32 1, %s21
    %s31 = scalar_select %p28, %s30, %s21
    %p32 = scmp.ge.s32.totalorder %s31, 2
    %s33 = scalar_select %p32, 0, %s31
    %s34 = ssub.s32 %s21, %s33
    %s35 = ssub.s32 %s22, %s29
    %s36 = sor.u32 %s34, %s35
    %p37 = scmp.eq.s32.totalorder %s36, 0
    %s39 = sadd.s32 %s38, 1
    %s40 = scalar_select %p37, %s38, %s39
    %p43 = pneg %p37
    %p44 = scmp.eq.s32.totalorder %s14, 3
    %p45 = por %p43, %p44
    %p46 = scmp.ne.s32.totalorder %s38, %s41
    %p47 = scmp.eq.s32.totalorder %s14, 0
    %p48 = por %p46, %p47
    %p49 = scmp.ne.s32.totalorder %s38, %s41
    %p50 = scmp.eq.s32.totalorder %s19, 3
    %p51 = por %p49, %p50
    %p52 = scmp.ne.s32.totalorder %s41, %s42
    %p53 = scmp.eq.s32.totalorder %s19, 0
    %p54 = por %p52, %p53
    %p55 = scmp.ne.s32.totalorder %s41, %s42
    %p56 = scmp.eq.s32.totalorder %s20, 3
    %p57 = por %p55, %p56
    %p59 = scmp.ne.s32.totalorder %s42, %s58
    %p60 = scmp.eq.s32.totalorder %s20, 0
    %p61 = por %p59, %p60
    %s62 = ssub.s32 %s22, %s29
    %p63 = scmp.eq.s32.totalorder %s62, 0
    %s65 = sadd.s32 %s64, 1
    %s66 = scalar_select %p63, %s64, %s65
    %p69 = pneg %p63
    %p70 = scmp.eq.s32.totalorder %s14, 3
    %p71 = por %p69, %p70
    %p72 = scmp.ne.s32.totalorder %s64, %s67
    %p73 = scmp.eq.s32.totalorder %s14, 0
    %p74 = por %p72, %p73
    %p75 = scmp.ne.s32.totalorder %s64, %s67
    %p76 = scmp.eq.s32.totalorder %s19, 3
    %p77 = por %p75, %p76
    %p78 = scmp.ne.s32.totalorder %s67, %s68
    %p79 = scmp.eq.s32.totalorder %s19, 0
    %p80 = por %p78, %p79
    %p81 = scmp.ne.s32.totalorder %s67, %s68
    %p82 = scmp.eq.s32.totalorder %s20, 3
    %p83 = por %p81, %p82
    %p85 = scmp.ne.s32.totalorder %s68, %s84
    %p86 = scmp.eq.s32.totalorder %s20, 0
    %p87 = por %p85, %p86
    %s89 = sadd.s32 %s88, 1
    %p92 = scmp.eq.s32.totalorder %s14, 3
    %p93 = scmp.ne.s32.totalorder %s88, %s90
    %p94 = scmp.eq.s32.totalorder %s14, 0
    %p95 = por %p93, %p94
    %p96 = scmp.ne.s32.totalorder %s88, %s90
    %p97 = scmp.eq.s32.totalorder %s19, 3
    %p98 = por %p96, %p97
    %p99 = scmp.ne.s32.totalorder %s90, %s91
    %p100 = scmp.eq.s32.totalorder %s19, 0
    %p101 = por %p99, %p100
    %p102 = scmp.ne.s32.totalorder %s90, %s91
    %p103 = scmp.eq.s32.totalorder %s20, 3
    %p104 = por %p102, %p103
    %p106 = scmp.ne.s32.totalorder %s91, %s105
    %p107 = scmp.eq.s32.totalorder %s20, 0
    %p108 = por %p106, %p107
    %s110 = sadd.s32 %s109, 1
    %p113 = scmp.eq.s32.totalorder %s14, 3
    %p114 = scmp.ne.s32.totalorder %s109, %s111
    %p115 = scmp.eq.s32.totalorder %s14, 0
    %p116 = por %p114, %p115
    %p117 = scmp.ne.s32.totalorder %s109, %s111
    %p118 = scmp.eq.s32.totalorder %s19, 3
    %p119 = por %p117, %p118
    %p120 = scmp.ne.s32.totalorder %s111, %s112
    %p121 = scmp.eq.s32.totalorder %s19, 0
    %p122 = por %p120, %p121
    %p123 = scmp.ne.s32.totalorder %s111, %s112
    %p124 = scmp.eq.s32.totalorder %s20, 3
    %p125 = por %p123, %p124
    %p127 = scmp.ne.s32.totalorder %s112, %s126
    %p128 = scmp.eq.s32.totalorder %s20, 0
    %p129 = por %p127, %p128
    %s131 = sadd.s32 %s130, 1
    %p134 = scmp.eq.s32.totalorder %s14, 3
    %p135 = scmp.ne.s32.totalorder %s130, %s132
    %p136 = scmp.eq.s32.totalorder %s14, 0
    %p137 = por %p135, %p136
    %p138 = scmp.ne.s32.totalorder %s130, %s132
    %p139 = scmp.eq.s32.totalorder %s19, 3
    %p140 = por %p138, %p139
    %p141 = scmp.ne.s32.totalorder %s132, %s133
    %p142 = scmp.eq.s32.totalorder %s19, 0
    %p143 = por %p141, %p142
    %p144 = scmp.ne.s32.totalorder %s132, %s133
    %p145 = scmp.eq.s32.totalorder %s20, 3
    %p146 = por %p144, %p145
    %p148 = scmp.ne.s32.totalorder %s133, %s147
    %p149 = scmp.eq.s32.totalorder %s20, 0
    %p150 = por %p148, %p149
    %s152 = sadd.s32 %s151, 1
    %p155 = scmp.eq.s32.totalorder %s14, 3
    %p156 = scmp.ne.s32.totalorder %s151, %s153
    %p157 = scmp.eq.s32.totalorder %s14, 0
    %p158 = por %p156, %p157
    %p159 = scmp.ne.s32.totalorder %s151, %s153
    %p160 = scmp.eq.s32.totalorder %s19, 3
    %p161 = por %p159, %p160
    %p162 = scmp.ne.s32.totalorder %s153, %s154
    %p163 = scmp.eq.s32.totalorder %s19, 0
    %p164 = por %p162, %p163
    %p165 = scmp.ne.s32.totalorder %s153, %s154
    %p166 = scmp.eq.s32.totalorder %s20, 3
    %p167 = por %p165, %p166
    %p169 = scmp.ne.s32.totalorder %s154, %s168
    %p170 = scmp.eq.s32.totalorder %s20, 0
    %p171 = por %p169, %p170
    %s173 = sadd.s32 %s172, 1
    %p176 = scmp.eq.s32.totalorder %s14, 3
    %p177 = scmp.ne.s32.totalorder %s172, %s174
    %p178 = scmp.eq.s32.totalorder %s14, 0
    %p179 = por %p177, %p178
    %p180 = scmp.ne.s32.totalorder %s172, %s174
    %p181 = scmp.eq.s32.totalorder %s19, 3
    %p182 = por %p180, %p181
    %p183 = scmp.ne.s32.totalorder %s174, %s175
    %p184 = scmp.eq.s32.totalorder %s19, 0
    %p185 = por %p183, %p184
    %p186 = scmp.ne.s32.totalorder %s174, %s175
    %p187 = scmp.eq.s32.totalorder %s20, 3
    %p188 = por %p186, %p187
    %p190 = scmp.ne.s32.totalorder %s175, %s189
    %p191 = scmp.eq.s32.totalorder %s20, 0
    %p192 = por %p190, %p191
    %s194 = sadd.s32 %s193, 1
    %p197 = scmp.eq.s32.totalorder %s14, 3
    %p198 = scmp.ne.s32.totalorder %s193, %s195
    %p199 = scmp.eq.s32.totalorder %s14, 0
    %p200 = por %p198, %p199
    %p201 = scmp.ne.s32.totalorder %s193, %s195
    %p202 = scmp.eq.s32.totalorder %s19, 3
    %p203 = por %p201, %p202
    %p204 = scmp.ne.s32.totalorder %s195, %s196
    %p205 = scmp.eq.s32.totalorder %s19, 0
    %p206 = por %p204, %p205
    %p207 = scmp.ne.s32.totalorder %s195, %s196
    %p208 = scmp.eq.s32.totalorder %s20, 3
    %p209 = por %p207, %p208
    %p211 = scmp.ne.s32.totalorder %s196, %s210
    %p212 = scmp.eq.s32.totalorder %s20, 0
    %p213 = por %p211, %p212
    %s214 = ssub.s32 %s21, %s33
    %s215 = ssub.s32 %s22, %s29
    %s216 = sor.u32 %s214, %s215
    %p217 = scmp.eq.s32.totalorder %s216, 0
    %s219 = sadd.s32 %s218, 1
    %s220 = scalar_select %p217, %s218, %s219
    %p223 = pneg %p217
    %p224 = scmp.eq.s32.totalorder %s14, 3
    %p225 = por %p223, %p224
    %p226 = scmp.ne.s32.totalorder %s218, %s221
    %p227 = scmp.eq.s32.totalorder %s14, 0
    %p228 = por %p226, %p227
    %p229 = scmp.ne.s32.totalorder %s218, %s221
    %p230 = scmp.eq.s32.totalorder %s19, 3
    %p231 = por %p229, %p230
    %p232 = scmp.ne.s32.totalorder %s221, %s222
    %p233 = scmp.eq.s32.totalorder %s19, 0
    %p234 = por %p232, %p233
    %p235 = scmp.ne.s32.totalorder %s221, %s222
    %p236 = scmp.eq.s32.totalorder %s20, 3
    %p237 = por %p235, %p236
    %p239 = scmp.ne.s32.totalorder %s222, %s238
    %p240 = scmp.eq.s32.totalorder %s20, 0
    %p241 = por %p239, %p240
    %p242 = scmp.le.s32.totalorder 1, %s14
    %p243 = scmp.lt.s32.totalorder %s14, 5
    %p244 = pnand %p242, %p243
    %p245 = pneg %p244
    // Predicated region
    $region9: #{guidance_net_forward.1} parent=5 // pred_check
      _
    $region10: #{guidance_net_forward.1} parent=5 // pred_check_branch
      %247 = sbr.rel (%p244) target = $region12
    $region11: #{guidance_net_forward.1} parent=5 // pred_region
      %s248 = ssub.s32 %s14, 1
      // Predicated region
      $region13: #{guidance_net_forward.1} parent=11 // pred_check
        %p249 = pneg %p101
      $region14: #{guidance_net_forward.1} parent=11 // pred_check_branch
        %251 = sbr.rel (%p249) target = $region16
      $region15: #{guidance_net_forward.1} parent=11 // pred_region
        _
      $region16: #{guidance_net_forward.1} parent=11 // pred_fallthru
        _
      // Predicated region
      $region17: #{guidance_net_forward.1} parent=11 // pred_check
        %p252 = pneg %p122
      $region18: #{guidance_net_forward.1} parent=11 // pred_check_branch
        %254 = sbr.rel (%p252) target = $region20
      $region19: #{guidance_net_forward.1} parent=11 // pred_region
        _
      $region20: #{guidance_net_forward.1} parent=11 // pred_fallthru
        _
      // Predicated region
      $region21: #{guidance_net_forward.1} parent=11 // pred_check
        %p255 = pneg %p143
      $region22: #{guidance_net_forward.1} parent=11 // pred_check_branch
        %257 = sbr.rel (%p255) target = $region24
      $region23: #{guidance_net_forward.1} parent=11 // pred_region
        _
      $region24: #{guidance_net_forward.1} parent=11 // pred_fallthru
        _
      // Predicated region
      $region25: #{guidance_net_forward.1} parent=11 // pred_check
        %p258 = pneg %p164
      $region26: #{guidance_net_forward.1} parent=11 // pred_check_branch
        %260 = sbr.rel (%p258) target = $region28
      $region27: #{guidance_net_forward.1} parent=11 // pred_region
        _
      $region28: #{guidance_net_forward.1} parent=11 // pred_fallthru
        _
      // Predicated region
      $region29: #{guidance_net_forward.1} parent=11 // pred_check
        %p261 = pneg %p185
      $region30: #{guidance_net_forward.1} parent=11 // pred_check_branch
        %263 = sbr.rel (%p261) target = $region32
      $region31: #{guidance_net_forward.1} parent=11 // pred_region
        _
      $region32: #{guidance_net_forward.1} parent=11 // pred_fallthru
        _
      // Predicated region
      $region33: #{guidance_net_forward.1} parent=11 // pred_check
        %p264 = pneg %p206
      $region34: #{guidance_net_forward.1} parent=11 // pred_check_branch
        %266 = sbr.rel (%p264) target = $region36
      $region35: #{guidance_net_forward.1} parent=11 // pred_region
        _
      $region36: #{guidance_net_forward.1} parent=11 // pred_fallthru
        _
    $region12: #{guidance_net_forward.1} parent=5 // pred_fallthru
      _
    %p267 = scmp.lt.s32.totalorder %s14, 4
    // Predicated region
    $region37: #{guidance_net_forward.1} parent=5 // pred_check
      %p268 = pneg %p267
    $region38: #{guidance_net_forward.1} parent=5 // pred_check_branch
      %270 = sbr.rel (%p268) target = $region40
    $region39: #{guidance_net_forward.1} parent=5 // pred_region
      // Predicated region
      $region41: #{guidance_net_forward.1} parent=39 // pred_check
        %p271 = pneg %p48
      $region42: #{guidance_net_forward.1} parent=39 // pred_check_branch
        %273 = sbr.rel (%p271) target = $region44
      $region43: #{guidance_net_forward.1} parent=39 // pred_region
        %p274 = scmp.lt.s32.totalorder %s21, 1
        %s275 = scalar_select %p274, %s21, 1
        %p276 = scmp.lt.s32.totalorder %s22, 1
        %s277 = scalar_select %p276, %s22, 1
        %s278 = smul.addr %s277, 42
        %s279 = smul.addr %s275, 84
        %s280 = sadd.s32 %s278, %s279
        %s281 = smul.addr %s280, 4
        %s282 = scalar_lea.vmem %s0, %s281
      $region44: #{guidance_net_forward.1} parent=39 // pred_fallthru
        _
      // Predicated region
      $region45: #{guidance_net_forward.1} parent=39 // pred_check
        %p283 = pneg %p74
      $region46: #{guidance_net_forward.1} parent=39 // pred_check_branch
        %285 = sbr.rel (%p283) target = $region48
      $region47: #{guidance_net_forward.1} parent=39 // pred_region
        %p286 = scmp.lt.s32.totalorder %s22, 1
        %s287 = scalar_select %p286, %s22, 1
        %s288 = smul.addr %s287, 42
        %s289 = smul.addr %s288, 8
        %s290 = scalar_lea.vmem %s1, %s289
      $region48: #{guidance_net_forward.1} parent=39 // pred_fallthru
        _
    $region40: #{guidance_net_forward.1} parent=5 // pred_fallthru
      _
    %p291 = scmp.le.s32.totalorder 1, %s14
    %p292 = scmp.lt.s32.totalorder %s14, 5
    %p293 = pnand %p291, %p292
    %p294 = pneg %p293
    // Predicated region
    $region49: #{guidance_net_forward.1} parent=5 // pred_check
      _
    $region50: #{guidance_net_forward.1} parent=5 // pred_check_branch
      %296 = sbr.rel (%p293) target = $region52
    $region51: #{guidance_net_forward.1} parent=5 // pred_region
      %s297 = ssub.s32 %s14, 1
      %p298 = scmp.lt.s32.totalorder %s23, 1
      %s299 = scalar_select %p298, %s23, 1
      %p300 = scmp.lt.s32.totalorder %s24, 1
      %s301 = scalar_select %p300, %s24, 1
      %s302 = smul.addr %s301, 42
      %s303 = smul.addr %s299, 84
      %s304 = sadd.s32 %s302, %s303
      %s305 = smul.addr %s304, 4
      %s306 = scalar_lea.vmem %s0, %s305
      %p307 = pneg %p54
      %p308 = pneg %p51
      %p309 = scmp.lt.s32.totalorder %s24, 1
      %s310 = scalar_select %p309, %s24, 1
      %s311 = smul.addr %s310, 42
      %s312 = smul.addr %s311, 8
      %s313 = scalar_lea.vmem %s1, %s312
      %p314 = pneg %p80
      %p315 = pneg %p77
      %p316 = pneg %p101
      %p317 = pneg %p98
      %p318 = pneg %p122
      %p319 = pneg %p119
      %p320 = pneg %p143
      %p321 = pneg %p140
      %p322 = pneg %p164
      %p323 = pneg %p161
      %p324 = pneg %p185
      %p325 = pneg %p182
      %p326 = pneg %p206
      %p327 = pneg %p203
      %p328 = pneg %p234
      %p329 = pneg %p231
      %p330 = scmp.lt.s32.totalorder %s23, 1
      %s331 = scalar_select %p330, %s23, 1
      %p332 = scmp.lt.s32.totalorder %s24, 1
      %s333 = scalar_select %p332, %s24, 1
      %s334 = smul.addr %s333, 2
      %s335 = smul.addr %s331, 4
      %s336 = sadd.s32 %s334, %s335
      %s337 = smul.addr %s336, 8
      %s338 = scalar_lea.vmem %s8, %s337
      %p339 = scmp.lt.s32.totalorder %s23, 1
      %s340 = scalar_select %p339, %s23, 1
      %p341 = scmp.lt.s32.totalorder %s24, 1
      %s342 = scalar_select %p341, %s24, 1
      %s343 = smul.addr %s342, 42
      %s344 = smul.addr %s340, 84
      %s345 = sadd.s32 %s343, %s344
      %s346 = smul.addr %s345, 4
      %s347 = scalar_lea.vmem %s0, %s346
      %p348 = scmp.lt.s32.totalorder %s24, 1
      %s349 = scalar_select %p348, %s24, 1
      %s350 = smul.addr %s349, 42
      %s351 = smul.addr %s350, 8
      %s352 = scalar_lea.vmem %s1, %s351
      %p353 = scmp.lt.s32.totalorder %s23, 1
      %s354 = scalar_select %p353, %s23, 1
      %p355 = scmp.lt.s32.totalorder %s24, 1
      %s356 = scalar_select %p355, %s24, 1
      %s357 = smul.addr %s356, 2
      %s358 = smul.addr %s354, 4
      %s359 = sadd.s32 %s357, %s358
      %s360 = smul.addr %s359, 8
      %s361 = scalar_lea.vmem %s8, %s360
      %v363 = vld [vmem:[%s352] sm:$0xff]
      %v364 = vld [vmem:[%s352 + $0x8] sm:$0xff]
      %v365 = vld [vmem:[%s352 + $0x10] sm:$0xff]
      %v366 = vld [vmem:[%s352 + $0x18] sm:$0xff]
      %v367 = vld [vmem:[%s352 + $0x20] sm:$0xff]
      %v368 = vld [vmem:[%s352 + $0x28] sm:$0xff]
      %v369 = vld [vmem:[%s352 + $0x30] sm:$0xff]
      %v370 = vld [vmem:[%s352 + $0x38] sm:$0xff]
      %v371 = vld [vmem:[%s352 + $0x40] sm:$0xff]
      %v372 = vld [vmem:[%s352 + $0x48] sm:$0xff]
      %v373 = vld [vmem:[%s352 + $0x50] sm:$0xff]
      %v374 = vld [vmem:[%s352 + $0x58] sm:$0xff]
      %v375 = vld [vmem:[%s352 + $0x60] sm:$0xff]
      %v376 = vld [vmem:[%s352 + $0x68] sm:$0xff]
      %v377 = vld [vmem:[%s352 + $0x70] sm:$0xff]
      %v378 = vld [vmem:[%s352 + $0x78] sm:$0xff]
      %v379 = vld [vmem:[%s352 + $0x80] sm:$0xff]
      %v380 = vld [vmem:[%s352 + $0x88] sm:$0xff]
      %v381 = vld [vmem:[%s352 + $0x90] sm:$0xff]
      %v382 = vld [vmem:[%s352 + $0x98] sm:$0xff]
      %v383 = vld [vmem:[%s352 + $0xa0] sm:$0xff]
      %v384 = vld [vmem:[%s352 + $0xa8] sm:$0xff]
      %v385 = vld [vmem:[%s352 + $0xb0] sm:$0xff]
      %v386 = vld [vmem:[%s352 + $0xb8] sm:$0xff]
      %v387 = vld [vmem:[%s352 + $0xc0] sm:$0xff]
      %v388 = vld [vmem:[%s352 + $0xc8] sm:$0xff]
      %v389 = vld [vmem:[%s352 + $0xd0] sm:$0xff]
      %v390 = vld [vmem:[%s352 + $0xd8] sm:$0xff]
      %v391 = vld [vmem:[%s352 + $0xe0] sm:$0xff]
      %v392 = vld [vmem:[%s352 + $0xe8] sm:$0xff]
      %v393 = vld [vmem:[%s352 + $0xf0] sm:$0xff]
      %v394 = vld [vmem:[%s352 + $0xf8] sm:$0xff]
      %v395 = vld [vmem:[%s352 + $0x100] sm:$0xff]
      %v396 = vld [vmem:[%s352 + $0x108] sm:$0xff]
      %v397 = vld [vmem:[%s352 + $0x110] sm:$0xff]
      %v398 = vld [vmem:[%s352 + $0x118] sm:$0xff]
      %v399 = vld [vmem:[%s352 + $0x120] sm:$0xff]
      %v400 = vld [vmem:[%s352 + $0x128] sm:$0xff]
      %v401 = vld [vmem:[%s352 + $0x130] sm:$0xff]
      %v402 = vld [vmem:[%s352 + $0x138] sm:$0xff]
      %v403 = vld [vmem:[%s352 + $0x140] sm:$0xff]
      %v404 = vld [vmem:[%s352 + $0x148] sm:$0xff]
      %v405 = vld [vmem:[%s347] sm:$0xf]
      %v406 = vld [vmem:[%s347 + $0x4] sm:$0xf]
      %v407 = vld [vmem:[%s347 + $0x8] sm:$0xf]
      %v408 = vld [vmem:[%s347 + $0xc] sm:$0xf]
      %v409 = vld [vmem:[%s347 + $0x10] sm:$0xf]
      %v410 = vld [vmem:[%s347 + $0x14] sm:$0xf]
      %v411 = vld [vmem:[%s347 + $0x18] sm:$0xf]
      %v412 = vld [vmem:[%s347 + $0x1c] sm:$0xf]
      %v413 = vld [vmem:[%s347 + $0x20] sm:$0xf]
      %v414 = vld [vmem:[%s347 + $0x24] sm:$0xf]
      %v415 = vld [vmem:[%s347 + $0x28] sm:$0xf]
      %v416 = vld [vmem:[%s347 + $0x2c] sm:$0xf]
      %v417 = vld [vmem:[%s347 + $0x30] sm:$0xf]
      %v418 = vld [vmem:[%s347 + $0x34] sm:$0xf]
      %v419 = vld [vmem:[%s347 + $0x38] sm:$0xf]
      %v420 = vld [vmem:[%s347 + $0x3c] sm:$0xf]
      %v421 = vld [vmem:[%s347 + $0x40] sm:$0xf]
      %v422 = vld [vmem:[%s347 + $0x44] sm:$0xf]
      %v423 = vld [vmem:[%s347 + $0x48] sm:$0xf]
      %v424 = vld [vmem:[%s347 + $0x4c] sm:$0xf]
      %v425 = vld [vmem:[%s347 + $0x50] sm:$0xf]
      %v426 = vld [vmem:[%s347 + $0x54] sm:$0xf]
      %v427 = vld [vmem:[%s347 + $0x58] sm:$0xf]
      %v428 = vld [vmem:[%s347 + $0x5c] sm:$0xf]
      %v429 = vld [vmem:[%s347 + $0x60] sm:$0xf]
      %v430 = vld [vmem:[%s347 + $0x64] sm:$0xf]
      %v431 = vld [vmem:[%s347 + $0x68] sm:$0xf]
      %v432 = vld [vmem:[%s347 + $0x6c] sm:$0xf]
      %v433 = vld [vmem:[%s347 + $0x70] sm:$0xf]
      %v434 = vld [vmem:[%s347 + $0x74] sm:$0xf]
      %v435 = vld [vmem:[%s347 + $0x78] sm:$0xf]
      %v436 = vld [vmem:[%s347 + $0x7c] sm:$0xf]
      %v437 = vld [vmem:[%s347 + $0x80] sm:$0xf]
      %v438 = vld [vmem:[%s347 + $0x84] sm:$0xf]
      %v439 = vld [vmem:[%s347 + $0x88] sm:$0xf]
      %v440 = vld [vmem:[%s347 + $0x8c] sm:$0xf]
      %v441 = vld [vmem:[%s347 + $0x90] sm:$0xf]
      %v442 = vld [vmem:[%s347 + $0x94] sm:$0xf]
      %v443 = vld [vmem:[%s347 + $0x98] sm:$0xf]
      %v444 = vld [vmem:[%s347 + $0x9c] sm:$0xf]
      %v445 = vld [vmem:[%s347 + $0xa0] sm:$0xf]
      %v446 = vld [vmem:[%s347 + $0xa4] sm:$0xf]
      %v448 = vunpack.c.l.b16 %v446
      %v449 = vpack.c.b16 %v448, %v448
      %v451 = vshrl.u32 %v449, 16
      %v453 = vrot.slane %v451, 3
      %v496 = vunpack.c.l.b16 %v405
      %v497 = vunpack.c.l.b16 %v406
      %v498 = vunpack.c.l.b16 %v407
      %v499 = vunpack.c.l.b16 %v408
      %v500 = vunpack.c.l.b16 %v409
      %v501 = vunpack.c.l.b16 %v410
      %v502 = vunpack.c.l.b16 %v411
      %v503 = vunpack.c.l.b16 %v412
      %v504 = vunpack.c.l.b16 %v413
      %v505 = vunpack.c.l.b16 %v414
      %v506 = vunpack.c.l.b16 %v415
      %v507 = vunpack.c.l.b16 %v416
      %v508 = vunpack.c.l.b16 %v417
      %v509 = vunpack.c.l.b16 %v418
      %v510 = vunpack.c.l.b16 %v419
      %v511 = vunpack.c.l.b16 %v420
      %v512 = vunpack.c.l.b16 %v421
      %v513 = vunpack.c.l.b16 %v422
      %v514 = vunpack.c.l.b16 %v423
      %v515 = vunpack.c.l.b16 %v424
      %v516 = vunpack.c.l.b16 %v425
      %v517 = vunpack.c.l.b16 %v426
      %v518 = vunpack.c.l.b16 %v427
      %v519 = vunpack.c.l.b16 %v428
      %v520 = vunpack.c.l.b16 %v429
      %v521 = vunpack.c.l.b16 %v430
      %v522 = vunpack.c.l.b16 %v431
      %v523 = vunpack.c.l.b16 %v432
      %v524 = vunpack.c.l.b16 %v433
      %v525 = vunpack.c.l.b16 %v434
      %v526 = vunpack.c.l.b16 %v435
      %v527 = vunpack.c.l.b16 %v436
      %v528 = vunpack.c.l.b16 %v437
      %v529 = vunpack.c.l.b16 %v438
      %v530 = vunpack.c.l.b16 %v439
      %v531 = vunpack.c.l.b16 %v440
      %v532 = vunpack.c.l.b16 %v441
      %v533 = vunpack.c.l.b16 %v442
      %v534 = vunpack.c.l.b16 %v443
      %v535 = vunpack.c.l.b16 %v444
      %v536 = vunpack.c.l.b16 %v445
      %v537 = vpack.c.b16 %v497, %v496
      %v538 = vpack.c.b16 %v499, %v498
      %v539 = vpack.c.b16 %v501, %v500
      %v540 = vpack.c.b16 %v503, %v502
      %v541 = vpack.c.b16 %v505, %v504
      %v542 = vpack.c.b16 %v507, %v506
      %v543 = vpack.c.b16 %v509, %v508
      %v544 = vpack.c.b16 %v511, %v510
      %v545 = vpack.c.b16 %v513, %v512
      %v546 = vpack.c.b16 %v515, %v514
      %v547 = vpack.c.b16 %v517, %v516
      %v548 = vpack.c.b16 %v519, %v518
      %v549 = vpack.c.b16 %v521, %v520
      %v550 = vpack.c.b16 %v523, %v522
      %v551 = vpack.c.b16 %v525, %v524
      %v552 = vpack.c.b16 %v527, %v526
      %v553 = vpack.c.b16 %v529, %v528
      %v554 = vpack.c.b16 %v531, %v530
      %v555 = vpack.c.b16 %v533, %v532
      %v556 = vpack.c.b16 %v535, %v534
      %v557 = vpack.c.b16 %v448, %v536
      %vm558 = vsmask.f32 256
      %v560 = vshrl.u32 %v537, 16
      %v562 = vrot.slane %v560, 7
      %v563 = vshll.u32 %v537, 16
      %v565 = vor.u32 %v562, %v563
      %v567 = vshrl.u32 %v538, 16
      %v569 = vrot.slane %v567, 7
      %v570 = vshll.u32 %v538, 16
      %v572 = vor.u32 %v569, %v570
      %v573 = vsel %vm558, %v562, %v572
      %v575 = vshrl.u32 %v539, 16
      %v577 = vrot.slane %v575, 7
      %v578 = vshll.u32 %v539, 16
      %v580 = vor.u32 %v577, %v578
      %v581 = vsel %vm558, %v569, %v580
      %v583 = vshrl.u32 %v540, 16
      %v585 = vrot.slane %v583, 7
      %v586 = vshll.u32 %v540, 16
      %v588 = vor.u32 %v585, %v586
      %v589 = vsel %vm558, %v577, %v588
      %v591 = vshrl.u32 %v541, 16
      %v593 = vrot.slane %v591, 7
      %v594 = vshll.u32 %v541, 16
      %v596 = vor.u32 %v593, %v594
      %v597 = vsel %vm558, %v585, %v596
      %v599 = vshrl.u32 %v542, 16
      %v601 = vrot.slane %v599, 7
      %v602 = vshll.u32 %v542, 16
      %v604 = vor.u32 %v601, %v602
      %v605 = vsel %vm558, %v593, %v604
      %v607 = vshrl.u32 %v543, 16
      %v609 = vrot.slane %v607, 7
      %v610 = vshll.u32 %v543, 16
      %v612 = vor.u32 %v609, %v610
      %v613 = vsel %vm558, %v601, %v612
      %v615 = vshrl.u32 %v544, 16
      %v617 = vrot.slane %v615, 7
      %v618 = vshll.u32 %v544, 16
      %v620 = vor.u32 %v617, %v618
      %v621 = vsel %vm558, %v609, %v620
      %v623 = vshrl.u32 %v545, 16
      %v625 = vrot.slane %v623, 7
      %v626 = vshll.u32 %v545, 16
      %v628 = vor.u32 %v625, %v626
      %v629 = vsel %vm558, %v617, %v628
      %v631 = vshrl.u32 %v546, 16
      %v633 = vrot.slane %v631, 7
      %v634 = vshll.u32 %v546, 16
      %v636 = vor.u32 %v633, %v634
      %v637 = vsel %vm558, %v625, %v636
      %v639 = vshrl.u32 %v547, 16
      %v641 = vrot.slane %v639, 7
      %v642 = vshll.u32 %v547, 16
      %v644 = vor.u32 %v641, %v642
      %v645 = vsel %vm558, %v633, %v644
      %v647 = vshrl.u32 %v548, 16
      %v649 = vrot.slane %v647, 7
      %v650 = vshll.u32 %v548, 16
      %v652 = vor.u32 %v649, %v650
      %v653 = vsel %vm558, %v641, %v652
      %v655 = vshrl.u32 %v549, 16
      %v657 = vrot.slane %v655, 7
      %v658 = vshll.u32 %v549, 16
      %v660 = vor.u32 %v657, %v658
      %v661 = vsel %vm558, %v649, %v660
      %v663 = vshrl.u32 %v550, 16
      %v665 = vrot.slane %v663, 7
      %v666 = vshll.u32 %v550, 16
      %v668 = vor.u32 %v665, %v666
      %v669 = vsel %vm558, %v657, %v668
      %v671 = vshrl.u32 %v551, 16
      %v673 = vrot.slane %v671, 7
      %v674 = vshll.u32 %v551, 16
      %v676 = vor.u32 %v673, %v674
      %v677 = vsel %vm558, %v665, %v676
      %v679 = vshrl.u32 %v552, 16
      %v681 = vrot.slane %v679, 7
      %v682 = vshll.u32 %v552, 16
      %v684 = vor.u32 %v681, %v682
      %v685 = vsel %vm558, %v673, %v684
      %v687 = vshrl.u32 %v553, 16
      %v689 = vrot.slane %v687, 7
      %v690 = vshll.u32 %v553, 16
      %v692 = vor.u32 %v689, %v690
      %v693 = vsel %vm558, %v681, %v692
      %v695 = vshrl.u32 %v554, 16
      %v697 = vrot.slane %v695, 7
      %v698 = vshll.u32 %v554, 16
      %v700 = vor.u32 %v697, %v698
      %v701 = vsel %vm558, %v689, %v700
      %v703 = vshrl.u32 %v555, 16
      %v705 = vrot.slane %v703, 7
      %v706 = vshll.u32 %v555, 16
      %v708 = vor.u32 %v705, %v706
      %v709 = vsel %vm558, %v697, %v708
      %v711 = vshrl.u32 %v556, 16
      %v713 = vrot.slane %v711, 7
      %v714 = vshll.u32 %v556, 16
      %v716 = vor.u32 %v713, %v714
      %v717 = vsel %vm558, %v705, %v716
      %v719 = vshrl.u32 %v557, 16
      %v721 = vrot.slane %v719, 7
      %v722 = vshll.u32 %v557, 16
      %v724 = vor.u32 %v721, %v722
      %v725 = vsel %vm558, %v713, %v724
      %vm727 = vcmask 1040384
      %vm728 = vmand %vm727, %vm558
      %v729 = vsel %vm728, %v453, %v565
      %vm730 = vsmask.f32 7424
      %v731 = vrot.slane %v563, 1
      %v732 = vor.u32 %v560, %v731
      %v733 = vrot.slane %v570, 1
      %v734 = vsel %vm730, %v732, %v733
      %v735 = vor.u32 %v567, %v733
      %v736 = vrot.slane %v578, 1
      %v737 = vsel %vm730, %v735, %v736
      %v738 = vor.u32 %v575, %v736
      %v739 = vrot.slane %v586, 1
      %v740 = vsel %vm730, %v738, %v739
      %v741 = vor.u32 %v583, %v739
      %v742 = vrot.slane %v594, 1
      %v743 = vsel %vm730, %v741, %v742
      %v744 = vor.u32 %v591, %v742
      %v745 = vrot.slane %v602, 1
      %v746 = vsel %vm730, %v744, %v745
      %v747 = vor.u32 %v599, %v745
      %v748 = vrot.slane %v610, 1
      %v749 = vsel %vm730, %v747, %v748
      %v750 = vor.u32 %v607, %v748
      %v751 = vrot.slane %v618, 1
      %v752 = vsel %vm730, %v750, %v751
      %v753 = vor.u32 %v615, %v751
      %v754 = vrot.slane %v626, 1
      %v755 = vsel %vm730, %v753, %v754
      %v756 = vor.u32 %v623, %v754
      %v757 = vrot.slane %v634, 1
      %v758 = vsel %vm730, %v756, %v757
      %v759 = vor.u32 %v631, %v757
      %v760 = vrot.slane %v642, 1
      %v761 = vsel %vm730, %v759, %v760
      %v762 = vor.u32 %v639, %v760
      %v763 = vrot.slane %v650, 1
      %v764 = vsel %vm730, %v762, %v763
      %v765 = vor.u32 %v647, %v763
      %v766 = vrot.slane %v658, 1
      %v767 = vsel %vm730, %v765, %v766
      %v768 = vor.u32 %v655, %v766
      %v769 = vrot.slane %v666, 1
      %v770 = vsel %vm730, %v768, %v769
      %v771 = vor.u32 %v663, %v769
      %v772 = vrot.slane %v674, 1
      %v773 = vsel %vm730, %v771, %v772
      %v774 = vor.u32 %v671, %v772
      %v775 = vrot.slane %v682, 1
      %v776 = vsel %vm730, %v774, %v775
      %v777 = vor.u32 %v679, %v775
      %v778 = vrot.slane %v690, 1
      %v779 = vsel %vm730, %v777, %v778
      %v780 = vor.u32 %v687, %v778
      %v781 = vrot.slane %v698, 1
      %v782 = vsel %vm730, %v780, %v781
      %v783 = vor.u32 %v695, %v781
      %v784 = vrot.slane %v706, 1
      %v785 = vsel %vm730, %v783, %v784
      %v786 = vor.u32 %v703, %v784
      %v787 = vrot.slane %v714, 1
      %v788 = vsel %vm730, %v786, %v787
      %v789 = vor.u32 %v711, %v787
      %v790 = vrot.slane %v722, 1
      %v791 = vsel %vm730, %v789, %v790
      %v792 = vor.u32 %v719, %v790
      %v794 = vpack.c.b16 %v496, %v496
      %v796 = vshll.u32 %v794, 16
      %v798 = vrot.slane %v796, 1
      %vm800 = vcmask 1047552
      %vm801 = vmand %vm800, %vm730
      %v802 = vsel %vm801, %v792, %v798
      %803 = vrot.lane.b32.xlu0 %v537, 4
      %v804 = vpop.permute.xlu0 %803
      %805 = vrot.lane.b32.xlu0 %v538, 4
      %v806 = vpop.permute.xlu0 %805
      %807 = vrot.lane.b32.xlu0 %v539, 4
      %v808 = vpop.permute.xlu0 %807
      %809 = vrot.lane.b32.xlu0 %v540, 4
      %v810 = vpop.permute.xlu0 %809
      %811 = vrot.lane.b32.xlu0 %v541, 4
      %v812 = vpop.permute.xlu0 %811
      %813 = vrot.lane.b32.xlu0 %v542, 4
      %v814 = vpop.permute.xlu0 %813
      %815 = vrot.lane.b32.xlu0 %v543, 4
      %v816 = vpop.permute.xlu0 %815
      %817 = vrot.lane.b32.xlu0 %v544, 4
      %v818 = vpop.permute.xlu0 %817
      %819 = vrot.lane.b32.xlu0 %v545, 4
      %v820 = vpop.permute.xlu0 %819
      %821 = vrot.lane.b32.xlu0 %v546, 4
      %v822 = vpop.permute.xlu0 %821
      %823 = vrot.lane.b32.xlu0 %v547, 4
      %v824 = vpop.permute.xlu0 %823
      %825 = vrot.lane.b32.xlu0 %v548, 4
      %v826 = vpop.permute.xlu0 %825
      %827 = vrot.lane.b32.xlu0 %v549, 4
      %v828 = vpop.permute.xlu0 %827
      %829 = vrot.lane.b32.xlu0 %v550, 4
      %v830 = vpop.permute.xlu0 %829
      %831 = vrot.lane.b32.xlu0 %v551, 4
      %v832 = vpop.permute.xlu0 %831
      %833 = vrot.lane.b32.xlu0 %v552, 4
      %v834 = vpop.permute.xlu0 %833
      %835 = vrot.lane.b32.xlu0 %v553, 4
      %v836 = vpop.permute.xlu0 %835
      %837 = vrot.lane.b32.xlu0 %v554, 4
      %v838 = vpop.permute.xlu0 %837
      %839 = vrot.lane.b32.xlu0 %v555, 4
      %v840 = vpop.permute.xlu0 %839
      %841 = vrot.lane.b32.xlu0 %v556, 4
      %v842 = vpop.permute.xlu0 %841
      %843 = vrot.lane.b32.xlu0 %v557, 4
      %v844 = vpop.permute.xlu0 %843
      %846 = vrot.lane.b32.xlu0 %v734, 8
      %v847 = vpop.permute.xlu0 %846
      %848 = vrot.lane.b32.xlu0 %v737, 8
      %v849 = vpop.permute.xlu0 %848
      %850 = vrot.lane.b32.xlu0 %v740, 8
      %v851 = vpop.permute.xlu0 %850
      %852 = vrot.lane.b32.xlu0 %v743, 8
      %v853 = vpop.permute.xlu0 %852
      %854 = vrot.lane.b32.xlu0 %v746, 8
      %v855 = vpop.permute.xlu0 %854
      %856 = vrot.lane.b32.xlu0 %v749, 8
      %v857 = vpop.permute.xlu0 %856
      %858 = vrot.lane.b32.xlu0 %v752, 8
      %v859 = vpop.permute.xlu0 %858
      %860 = vrot.lane.b32.xlu0 %v755, 8
      %v861 = vpop.permute.xlu0 %860
      %862 = vrot.lane.b32.xlu0 %v758, 8
      %v863 = vpop.permute.xlu0 %862
      %864 = vrot.lane.b32.xlu0 %v761, 8
      %v865 = vpop.permute.xlu0 %864
      %866 = vrot.lane.b32.xlu0 %v764, 8
      %v867 = vpop.permute.xlu0 %866
      %868 = vrot.lane.b32.xlu0 %v767, 8
      %v869 = vpop.permute.xlu0 %868
      %870 = vrot.lane.b32.xlu0 %v770, 8
      %v871 = vpop.permute.xlu0 %870
      %872 = vrot.lane.b32.xlu0 %v773, 8
      %v873 = vpop.permute.xlu0 %872
      %874 = vrot.lane.b32.xlu0 %v776, 8
      %v875 = vpop.permute.xlu0 %874
      %876 = vrot.lane.b32.xlu0 %v779, 8
      %v877 = vpop.permute.xlu0 %876
      %878 = vrot.lane.b32.xlu0 %v782, 8
      %v879 = vpop.permute.xlu0 %878
      %880 = vrot.lane.b32.xlu0 %v785, 8
      %v881 = vpop.permute.xlu0 %880
      %882 = vrot.lane.b32.xlu0 %v788, 8
      %v883 = vpop.permute.xlu0 %882
      %884 = vrot.lane.b32.xlu0 %v791, 8
      %v885 = vpop.permute.xlu0 %884
      %886 = vrot.lane.b32.xlu0 %v802, 8
      %v887 = vpop.permute.xlu0 %886
      %vm888 = vcmask 31744
      %v891 = vsel %vm888, %v729, %v804
      %v894 = vsel %vm888, %v573, %v806
      %v897 = vsel %vm888, %v581, %v808
      %v900 = vsel %vm888, %v589, %v810
      %v903 = vsel %vm888, %v597, %v812
      %v906 = vsel %vm888, %v605, %v814
      %v909 = vsel %vm888, %v613, %v816
      %v912 = vsel %vm888, %v621, %v818
      %v915 = vsel %vm888, %v629, %v820
      %v918 = vsel %vm888, %v637, %v822
      %v921 = vsel %vm888, %v645, %v824
      %v924 = vsel %vm888, %v653, %v826
      %v927 = vsel %vm888, %v661, %v828
      %v930 = vsel %vm888, %v669, %v830
      %v933 = vsel %vm888, %v677, %v832
      %v936 = vsel %vm888, %v685, %v834
      %v939 = vsel %vm888, %v693, %v836
      %v942 = vsel %vm888, %v701, %v838
      %v945 = vsel %vm888, %v709, %v840
      %v948 = vsel %vm888, %v717, %v842
      %v951 = vsel %vm888, %v725, %v844
      %vm952 = vcmask 64512
      %v954 = vsel %vm952, %v891, %v847
      %v956 = vsel %vm952, %v894, %v849
      %v958 = vsel %vm952, %v897, %v851
      %v960 = vsel %vm952, %v900, %v853
      %v962 = vsel %vm952, %v903, %v855
      %v964 = vsel %vm952, %v906, %v857
      %v966 = vsel %vm952, %v909, %v859
      %v968 = vsel %vm952, %v912, %v861
      %v970 = vsel %vm952, %v915, %v863
      %v972 = vsel %vm952, %v918, %v865
      %v974 = vsel %vm952, %v921, %v867
      %v976 = vsel %vm952, %v924, %v869
      %v978 = vsel %vm952, %v927, %v871
      %v980 = vsel %vm952, %v930, %v873
      %v982 = vsel %vm952, %v933, %v875
      %v984 = vsel %vm952, %v936, %v877
      %v986 = vsel %vm952, %v939, %v879
      %v988 = vsel %vm952, %v942, %v881
      %v990 = vsel %vm952, %v945, %v883
      %v992 = vsel %vm952, %v948, %v885
      %v994 = vsel %vm952, %v951, %v887
      %vm997 = vcmask 1043456
      %v998 = vrot.slane %v992, 4
      %v999 = vrot.slane %v994, 4
      %v1000 = vsel %vm997, %v998, %v999
      %v1020 = vrot.slane %v954, 4
      %v1021 = vrot.slane %v956, 4
      %v1022 = vsel %vm997, %v1020, %v1021
      %v1023 = vrot.slane %v958, 4
      %v1024 = vsel %vm997, %v1021, %v1023
      %v1025 = vrot.slane %v960, 4
      %v1026 = vsel %vm997, %v1023, %v1025
      %v1027 = vrot.slane %v962, 4
      %v1028 = vsel %vm997, %v1025, %v1027
      %v1029 = vrot.slane %v964, 4
      %v1030 = vsel %vm997, %v1027, %v1029
      %v1031 = vrot.slane %v966, 4
      %v1032 = vsel %vm997, %v1029, %v1031
      %v1033 = vrot.slane %v968, 4
      %v1034 = vsel %vm997, %v1031, %v1033
      %v1035 = vrot.slane %v970, 4
      %v1036 = vsel %vm997, %v1033, %v1035
      %v1037 = vrot.slane %v972, 4
      %v1038 = vsel %vm997, %v1035, %v1037
      %v1039 = vrot.slane %v974, 4
      %v1040 = vsel %vm997, %v1037, %v1039
      %v1041 = vrot.slane %v976, 4
      %v1042 = vsel %vm997, %v1039, %v1041
      %v1043 = vrot.slane %v978, 4
      %v1044 = vsel %vm997, %v1041, %v1043
      %v1045 = vrot.slane %v980, 4
      %v1046 = vsel %vm997, %v1043, %v1045
      %v1047 = vrot.slane %v982, 4
      %v1048 = vsel %vm997, %v1045, %v1047
      %v1049 = vrot.slane %v984, 4
      %v1050 = vsel %vm997, %v1047, %v1049
      %v1051 = vrot.slane %v986, 4
      %v1052 = vsel %vm997, %v1049, %v1051
      %v1053 = vrot.slane %v988, 4
      %v1054 = vsel %vm997, %v1051, %v1053
      %v1055 = vrot.slane %v990, 4
      %v1056 = vsel %vm997, %v1053, %v1055
      %v1057 = vsel %vm997, %v1055, %v998
      %vm1058 = vcmask 1043456
      %v1061 = vsel %vm1058, %v999, %v1020
      %1062 = vrot.lane.b32.xlu0 %v954, 12
      %v1063 = vpop.permute.xlu0 %1062
      %1064 = vrot.lane.b32.xlu0 %v956, 12
      %v1065 = vpop.permute.xlu0 %1064
      %1066 = vrot.lane.b32.xlu0 %v958, 12
      %v1067 = vpop.permute.xlu0 %1066
      %1068 = vrot.lane.b32.xlu0 %v960, 12
      %v1069 = vpop.permute.xlu0 %1068
      %1070 = vrot.lane.b32.xlu0 %v962, 12
      %v1071 = vpop.permute.xlu0 %1070
      %1072 = vrot.lane.b32.xlu0 %v964, 12
      %v1073 = vpop.permute.xlu0 %1072
      %1074 = vrot.lane.b32.xlu0 %v966, 12
      %v1075 = vpop.permute.xlu0 %1074
      %1076 = vrot.lane.b32.xlu0 %v968, 12
      %v1077 = vpop.permute.xlu0 %1076
      %1078 = vrot.lane.b32.xlu0 %v970, 12
      %v1079 = vpop.permute.xlu0 %1078
      %1080 = vrot.lane.b32.xlu0 %v972, 12
      %v1081 = vpop.permute.xlu0 %1080
      %1082 = vrot.lane.b32.xlu0 %v974, 12
      %v1083 = vpop.permute.xlu0 %1082
      %1084 = vrot.lane.b32.xlu0 %v976, 12
      %v1085 = vpop.permute.xlu0 %1084
      %1086 = vrot.lane.b32.xlu0 %v978, 12
      %v1087 = vpop.permute.xlu0 %1086
      %1088 = vrot.lane.b32.xlu0 %v980, 12
      %v1089 = vpop.permute.xlu0 %1088
      %1090 = vrot.lane.b32.xlu0 %v982, 12
      %v1091 = vpop.permute.xlu0 %1090
      %1092 = vrot.lane.b32.xlu0 %v984, 12
      %v1093 = vpop.permute.xlu0 %1092
      %1094 = vrot.lane.b32.xlu0 %v986, 12
      %v1095 = vpop.permute.xlu0 %1094
      %1096 = vrot.lane.b32.xlu0 %v988, 12
      %v1097 = vpop.permute.xlu0 %1096
      %1098 = vrot.lane.b32.xlu0 %v990, 12
      %v1099 = vpop.permute.xlu0 %1098
      %1100 = vrot.lane.b32.xlu0 %v992, 12
      %v1101 = vpop.permute.xlu0 %1100
      %1102 = vrot.lane.b32.xlu0 %v994, 12
      %v1103 = vpop.permute.xlu0 %1102
      %1105 = vrot.lane.b32.xlu0 %v1024, 24
      %v1106 = vpop.permute.xlu0 %1105
      %1107 = vrot.lane.b32.xlu0 %v1026, 24
      %v1108 = vpop.permute.xlu0 %1107
      %1109 = vrot.lane.b32.xlu0 %v1028, 24
      %v1110 = vpop.permute.xlu0 %1109
      %1111 = vrot.lane.b32.xlu0 %v1030, 24
      %v1112 = vpop.permute.xlu0 %1111
      %1113 = vrot.lane.b32.xlu0 %v1032, 24
      %v1114 = vpop.permute.xlu0 %1113
      %1115 = vrot.lane.b32.xlu0 %v1034, 24
      %v1116 = vpop.permute.xlu0 %1115
      %1117 = vrot.lane.b32.xlu0 %v1036, 24
      %v1118 = vpop.permute.xlu0 %1117
      %1119 = vrot.lane.b32.xlu0 %v1038, 24
      %v1120 = vpop.permute.xlu0 %1119
      %1121 = vrot.lane.b32.xlu0 %v1040, 24
      %v1122 = vpop.permute.xlu0 %1121
      %1123 = vrot.lane.b32.xlu0 %v1042, 24
      %v1124 = vpop.permute.xlu0 %1123
      %1125 = vrot.lane.b32.xlu0 %v1044, 24
      %v1126 = vpop.permute.xlu0 %1125
      %1127 = vrot.lane.b32.xlu0 %v1046, 24
      %v1128 = vpop.permute.xlu0 %1127
      %1129 = vrot.lane.b32.xlu0 %v1048, 24
      %v1130 = vpop.permute.xlu0 %1129
      %1131 = vrot.lane.b32.xlu0 %v1050, 24
      %v1132 = vpop.permute.xlu0 %1131
      %1133 = vrot.lane.b32.xlu0 %v1052, 24
      %v1134 = vpop.permute.xlu0 %1133
      %1135 = vrot.lane.b32.xlu0 %v1054, 24
      %v1136 = vpop.permute.xlu0 %1135
      %1137 = vrot.lane.b32.xlu0 %v1056, 24
      %v1138 = vpop.permute.xlu0 %1137
      %1139 = vrot.lane.b32.xlu0 %v1057, 24
      %v1140 = vpop.permute.xlu0 %1139
      %1141 = vrot.lane.b32.xlu0 %v1000, 24
      %v1142 = vpop.permute.xlu0 %1141
      %1143 = vrot.lane.b32.xlu0 %v1061, 24
      %v1144 = vpop.permute.xlu0 %1143
      %1145 = vrot.lane.b32.xlu0 %v1022, 24
      %v1146 = vpop.permute.xlu0 %1145
      %vm1147 = vcmask 97280
      %v1150 = vsel %vm1147, %v1000, %v1063
      %v1152 = vsel %vm1147, %v1061, %v1065
      %v1155 = vsel %vm1147, %v1022, %v1067
      %v1158 = vsel %vm1147, %v1024, %v1069
      %v1161 = vsel %vm1147, %v1026, %v1071
      %v1164 = vsel %vm1147, %v1028, %v1073
      %v1167 = vsel %vm1147, %v1030, %v1075
      %v1170 = vsel %vm1147, %v1032, %v1077
      %v1173 = vsel %vm1147, %v1034, %v1079
      %v1176 = vsel %vm1147, %v1036, %v1081
      %v1179 = vsel %vm1147, %v1038, %v1083
      %v1182 = vsel %vm1147, %v1040, %v1085
      %v1185 = vsel %vm1147, %v1042, %v1087
      %v1188 = vsel %vm1147, %v1044, %v1089
      %v1191 = vsel %vm1147, %v1046, %v1091
      %v1194 = vsel %vm1147, %v1048, %v1093
      %v1197 = vsel %vm1147, %v1050, %v1095
      %v1200 = vsel %vm1147, %v1052, %v1097
      %v1203 = vsel %vm1147, %v1054, %v1099
      %v1206 = vsel %vm1147, %v1056, %v1101
      %v1209 = vsel %vm1147, %v1057, %v1103
      %vm1210 = vcmask 195584
      %v1212 = vsel %vm1210, %v1150, %v1106
      %v1214 = vsel %vm1210, %v1152, %v1108
      %v1216 = vsel %vm1210, %v1155, %v1110
      %v1218 = vsel %vm1210, %v1158, %v1112
      %v1220 = vsel %vm1210, %v1161, %v1114
      %v1222 = vsel %vm1210, %v1164, %v1116
      %v1224 = vsel %vm1210, %v1167, %v1118
      %v1226 = vsel %vm1210, %v1170, %v1120
      %v1228 = vsel %vm1210, %v1173, %v1122
      %v1230 = vsel %vm1210, %v1176, %v1124
      %v1232 = vsel %vm1210, %v1179, %v1126
      %v1234 = vsel %vm1210, %v1182, %v1128
      %v1236 = vsel %vm1210, %v1185, %v1130
      %v1238 = vsel %vm1210, %v1188, %v1132
      %v1240 = vsel %vm1210, %v1191, %v1134
      %v1242 = vsel %vm1210, %v1194, %v1136
      %v1244 = vsel %vm1210, %v1197, %v1138
      %v1246 = vsel %vm1210, %v1200, %v1140
      %v1248 = vsel %vm1210, %v1203, %v1142
      %v1250 = vsel %vm1210, %v1206, %v1144
      %v1252 = vsel %vm1210, %v1209, %v1146
      %v1253 = vld [vmem:[%s2] sm:$0xf]
      %v1254 = vld [vmem:[%s2 + $0x4] sm:$0xf]
      %v1255 = vld [vmem:[%s2 + $0x8] sm:$0xf]
      %v1256 = vld [vmem:[%s2 + $0xc] sm:$0xf]
      %v1257 = vld [vmem:[%s2 + $0x10] sm:$0x3]
      %v1258 = vld [vmem:[%s3] sm:$0x1]
      %v1260 = vperm.slane %v1258, 0
      %v1267 = vunpack.c.l.b16 %v1253
      %v1268 = vunpack.c.l.b16 %v1254
      %v1269 = vunpack.c.l.b16 %v1255
      %v1270 = vunpack.c.l.b16 %v1256
      %v1271 = vunpack.c.l.b16 %v1257
      %v1272 = vpack.c.b16 %v1268, %v1267
      %v1273 = vpack.c.b16 %v1270, %v1269
      %v1274 = vpack.c.b16 %v1271, %v1271
      %vm1277 = vcmask 293888
      %v1278 = vsel %vm1277, %v1212, 0
      %v1280 = vsel %vm1277, %v1214, 0
      %v1282 = vsel %vm1277, %v1216, 0
      %v1284 = vsel %vm1277, %v1218, 0
      %v1286 = vsel %vm1277, %v1220, 0
      %v1288 = vsel %vm1277, %v1222, 0
      %v1290 = vsel %vm1277, %v1224, 0
      %v1292 = vsel %vm1277, %v1226, 0
      %v1294 = vsel %vm1277, %v1228, 0
      %v1296 = vsel %vm1277, %v1230, 0
      %v1298 = vsel %vm1277, %v1232, 0
      %v1300 = vsel %vm1277, %v1234, 0
      %v1302 = vsel %vm1277, %v1236, 0
      %v1304 = vsel %vm1277, %v1238, 0
      %v1306 = vsel %vm1277, %v1240, 0
      %v1308 = vsel %vm1277, %v1242, 0
      %v1310 = vsel %vm1277, %v1244, 0
      %v1312 = vsel %vm1277, %v1246, 0
      %v1314 = vsel %vm1277, %v1248, 0
      %v1316 = vsel %vm1277, %v1250, 0
      %v1318 = vsel %vm1277, %v1252, 0
      %vm1320 = vcmask 1041408
      %v1322 = vsel %vm1320, %v1274, 0
      %1324 = vmatpush.bf16.msra.mxu0 0
      %1325 = vmatpush.bf16.msra.mxu0 0
      %1326 = vmatpush.bf16.msra.mxu0 0
      %1327 = vmatpush.bf16.msra.mxu0 0
      %1328 = vmatpush.bf16.msra.mxu0 0
      %1329 = vmatpush.bf16.msra.mxu0 %v1322
      %1330 = vmatpush.bf16.msra.mxu0 %v1273
      %1331 = vmatpush.bf16.msra.mxu0 %v1272
      %1332 = vmatmul.bf16.gmra.mxu0 %v1278
      %v1333 = vpop.f32.mrf.mxu0
      %v1334 = vadd.f32 %v1260, %v1333
      %v1335 = vpop.f32.mrf.mxu0
      %v1336 = vadd.f32 %v1260, %v1335
      %1337 = vmatmul.bf16.gmra.mxu0 %v1280
      %v1338 = vpop.f32.mrf.mxu0
      %v1339 = vadd.f32 %v1260, %v1338
      %v1340 = vpop.f32.mrf.mxu0
      %v1341 = vadd.f32 %v1260, %v1340
      %1342 = vmatmul.bf16.gmra.mxu0 %v1282
      %v1343 = vpop.f32.mrf.mxu0
      %v1344 = vadd.f32 %v1260, %v1343
      %v1345 = vpop.f32.mrf.mxu0
      %v1346 = vadd.f32 %v1260, %v1345
      %1347 = vmatmul.bf16.gmra.mxu0 %v1284
      %v1348 = vpop.f32.mrf.mxu0
      %v1349 = vadd.f32 %v1260, %v1348
      %v1350 = vpop.f32.mrf.mxu0
      %v1351 = vadd.f32 %v1260, %v1350
      %1352 = vmatmul.bf16.gmra.mxu0 %v1286
      %v1353 = vpop.f32.mrf.mxu0
      %v1354 = vadd.f32 %v1260, %v1353
      %v1355 = vpop.f32.mrf.mxu0
      %v1356 = vadd.f32 %v1260, %v1355
      %1357 = vmatmul.bf16.gmra.mxu0 %v1288
      %v1358 = vpop.f32.mrf.mxu0
      %v1359 = vadd.f32 %v1260, %v1358
      %v1360 = vpop.f32.mrf.mxu0
      %v1361 = vadd.f32 %v1260, %v1360
      %1362 = vmatmul.bf16.gmra.mxu0 %v1290
      %v1363 = vpop.f32.mrf.mxu0
      %v1364 = vadd.f32 %v1260, %v1363
      %v1365 = vpop.f32.mrf.mxu0
      %v1366 = vadd.f32 %v1260, %v1365
      %1367 = vmatmul.bf16.gmra.mxu0 %v1292
      %v1368 = vpop.f32.mrf.mxu0
      %v1369 = vadd.f32 %v1260, %v1368
      %v1370 = vpop.f32.mrf.mxu0
      %v1371 = vadd.f32 %v1260, %v1370
      %1372 = vmatmul.bf16.gmra.mxu0 %v1294
      %v1373 = vpop.f32.mrf.mxu0
      %v1374 = vadd.f32 %v1260, %v1373
      %v1375 = vpop.f32.mrf.mxu0
      %v1376 = vadd.f32 %v1260, %v1375
      %1377 = vmatmul.bf16.gmra.mxu0 %v1296
      %v1378 = vpop.f32.mrf.mxu0
      %v1379 = vadd.f32 %v1260, %v1378
      %v1380 = vpop.f32.mrf.mxu0
      %v1381 = vadd.f32 %v1260, %v1380
      %1382 = vmatmul.bf16.gmra.mxu0 %v1298
      %v1383 = vpop.f32.mrf.mxu0
      %v1384 = vadd.f32 %v1260, %v1383
      %v1385 = vpop.f32.mrf.mxu0
      %v1386 = vadd.f32 %v1260, %v1385
      %1387 = vmatmul.bf16.gmra.mxu0 %v1300
      %v1388 = vpop.f32.mrf.mxu0
      %v1389 = vadd.f32 %v1260, %v1388
      %v1390 = vpop.f32.mrf.mxu0
      %v1391 = vadd.f32 %v1260, %v1390
      %1392 = vmatmul.bf16.gmra.mxu0 %v1302
      %v1393 = vpop.f32.mrf.mxu0
      %v1394 = vadd.f32 %v1260, %v1393
      %v1395 = vpop.f32.mrf.mxu0
      %v1396 = vadd.f32 %v1260, %v1395
      %1397 = vmatmul.bf16.gmra.mxu0 %v1304
      %v1398 = vpop.f32.mrf.mxu0
      %v1399 = vadd.f32 %v1260, %v1398
      %v1400 = vpop.f32.mrf.mxu0
      %v1401 = vadd.f32 %v1260, %v1400
      %1402 = vmatmul.bf16.gmra.mxu0 %v1306
      %v1403 = vpop.f32.mrf.mxu0
      %v1404 = vadd.f32 %v1260, %v1403
      %v1405 = vpop.f32.mrf.mxu0
      %v1406 = vadd.f32 %v1260, %v1405
      %1407 = vmatmul.bf16.gmra.mxu0 %v1308
      %v1408 = vpop.f32.mrf.mxu0
      %v1409 = vadd.f32 %v1260, %v1408
      %v1410 = vpop.f32.mrf.mxu0
      %v1411 = vadd.f32 %v1260, %v1410
      %1412 = vmatmul.bf16.gmra.mxu0 %v1310
      %v1413 = vpop.f32.mrf.mxu0
      %v1414 = vadd.f32 %v1260, %v1413
      %v1415 = vpop.f32.mrf.mxu0
      %v1416 = vadd.f32 %v1260, %v1415
      %1417 = vmatmul.bf16.gmra.mxu0 %v1312
      %v1418 = vpop.f32.mrf.mxu0
      %v1419 = vadd.f32 %v1260, %v1418
      %v1420 = vpop.f32.mrf.mxu0
      %v1421 = vadd.f32 %v1260, %v1420
      %1422 = vmatmul.bf16.gmra.mxu0 %v1314
      %v1423 = vpop.f32.mrf.mxu0
      %v1424 = vadd.f32 %v1260, %v1423
      %v1425 = vpop.f32.mrf.mxu0
      %v1426 = vadd.f32 %v1260, %v1425
      %1427 = vmatmul.bf16.gmra.mxu0 %v1316
      %v1428 = vpop.f32.mrf.mxu0
      %v1429 = vadd.f32 %v1260, %v1428
      %v1430 = vpop.f32.mrf.mxu0
      %v1431 = vadd.f32 %v1260, %v1430
      %1432 = vmatmul.bf16.gmra.mxu0 %v1318
      %v1433 = vpop.f32.mrf.mxu0
      %v1434 = vadd.f32 %v1260, %v1433
      %v1435 = vpop.f32.mrf.mxu0
      %v1436 = vadd.f32 %v1260, %v1435
      %1437 = vdwg.mxu0
      %v1438 = vmax.f32 %v1334, 0.0
      %v1439 = vmax.f32 %v1336, 0.0
      %v1440 = vmax.f32 %v1339, 0.0
      %v1441 = vmax.f32 %v1341, 0.0
      %v1442 = vmax.f32 %v1344, 0.0
      %v1443 = vmax.f32 %v1346, 0.0
      %v1444 = vmax.f32 %v1349, 0.0
      %v1445 = vmax.f32 %v1351, 0.0
      %v1446 = vmax.f32 %v1354, 0.0
      %v1447 = vmax.f32 %v1356, 0.0
      %v1448 = vmax.f32 %v1359, 0.0
      %v1449 = vmax.f32 %v1361, 0.0
      %v1450 = vmax.f32 %v1364, 0.0
      %v1451 = vmax.f32 %v1366, 0.0
      %v1452 = vmax.f32 %v1369, 0.0
      %v1453 = vmax.f32 %v1371, 0.0
      %v1454 = vmax.f32 %v1374, 0.0
      %v1455 = vmax.f32 %v1376, 0.0
      %v1456 = vmax.f32 %v1379, 0.0
      %v1457 = vmax.f32 %v1381, 0.0
      %v1458 = vmax.f32 %v1384, 0.0
      %v1459 = vmax.f32 %v1386, 0.0
      %v1460 = vmax.f32 %v1389, 0.0
      %v1461 = vmax.f32 %v1391, 0.0
      %v1462 = vmax.f32 %v1394, 0.0
      %v1463 = vmax.f32 %v1396, 0.0
      %v1464 = vmax.f32 %v1399, 0.0
      %v1465 = vmax.f32 %v1401, 0.0
      %v1466 = vmax.f32 %v1404, 0.0
      %v1467 = vmax.f32 %v1406, 0.0
      %v1468 = vmax.f32 %v1409, 0.0
      %v1469 = vmax.f32 %v1411, 0.0
      %v1470 = vmax.f32 %v1414, 0.0
      %v1471 = vmax.f32 %v1416, 0.0
      %v1472 = vmax.f32 %v1419, 0.0
      %v1473 = vmax.f32 %v1421, 0.0
      %v1474 = vmax.f32 %v1424, 0.0
      %v1475 = vmax.f32 %v1426, 0.0
      %v1476 = vmax.f32 %v1429, 0.0
      %v1477 = vmax.f32 %v1431, 0.0
      %v1478 = vmax.f32 %v1434, 0.0
      %v1479 = vmax.f32 %v1436, 0.0
      %v1480 = vmin.f32 %v1438, 6.0
      %v1481 = vmin.f32 %v1439, 6.0
      %v1482 = vmin.f32 %v1440, 6.0
      %v1483 = vmin.f32 %v1441, 6.0
      %v1484 = vmin.f32 %v1442, 6.0
      %v1485 = vmin.f32 %v1443, 6.0
      %v1486 = vmin.f32 %v1444, 6.0
      %v1487 = vmin.f32 %v1445, 6.0
      %v1488 = vmin.f32 %v1446, 6.0
      %v1489 = vmin.f32 %v1447, 6.0
      %v1490 = vmin.f32 %v1448, 6.0
      %v1491 = vmin.f32 %v1449, 6.0
      %v1492 = vmin.f32 %v1450, 6.0
      %v1493 = vmin.f32 %v1451, 6.0
      %v1494 = vmin.f32 %v1452, 6.0
      %v1495 = vmin.f32 %v1453, 6.0
      %v1496 = vmin.f32 %v1454, 6.0
      %v1497 = vmin.f32 %v1455, 6.0
      %v1498 = vmin.f32 %v1456, 6.0
      %v1499 = vmin.f32 %v1457, 6.0
      %v1500 = vmin.f32 %v1458, 6.0
      %v1501 = vmin.f32 %v1459, 6.0
      %v1502 = vmin.f32 %v1460, 6.0
      %v1503 = vmin.f32 %v1461, 6.0
      %v1504 = vmin.f32 %v1462, 6.0
      %v1505 = vmin.f32 %v1463, 6.0
      %v1506 = vmin.f32 %v1464, 6.0
      %v1507 = vmin.f32 %v1465, 6.0
      %v1508 = vmin.f32 %v1466, 6.0
      %v1509 = vmin.f32 %v1467, 6.0
      %v1510 = vmin.f32 %v1468, 6.0
      %v1511 = vmin.f32 %v1469, 6.0
      %v1512 = vmin.f32 %v1470, 6.0
      %v1513 = vmin.f32 %v1471, 6.0
      %v1514 = vmin.f32 %v1472, 6.0
      %v1515 = vmin.f32 %v1473, 6.0
      %v1516 = vmin.f32 %v1474, 6.0
      %v1517 = vmin.f32 %v1475, 6.0
      %v1518 = vmin.f32 %v1476, 6.0
      %v1519 = vmin.f32 %v1477, 6.0
      %v1520 = vmin.f32 %v1478, 6.0
      %v1521 = vmin.f32 %v1479, 6.0
      %1523 = vset.pattern.permute.xlu0 0
      %1524 = vperm.xlu0 %1523, %v363
      %v1525 = vpop.permute.xlu0 %1524
      %1528 = vset.pattern.permute.xlu0 0
      %1529 = vperm.xlu0 %1528, %v364
      %v1530 = vpop.permute.xlu0 %1529
      %1533 = vset.pattern.permute.xlu0 0
      %1534 = vperm.xlu0 %1533, %v365
      %v1535 = vpop.permute.xlu0 %1534
      %1538 = vset.pattern.permute.xlu0 0
      %1539 = vperm.xlu0 %1538, %v366
      %v1540 = vpop.permute.xlu0 %1539
      %1543 = vset.pattern.permute.xlu0 0
      %1544 = vperm.xlu0 %1543, %v367
      %v1545 = vpop.permute.xlu0 %1544
      %1548 = vset.pattern.permute.xlu0 0
      %1549 = vperm.xlu0 %1548, %v368
      %v1550 = vpop.permute.xlu0 %1549
      %1553 = vset.pattern.permute.xlu0 0
      %1554 = vperm.xlu0 %1553, %v369
      %v1555 = vpop.permute.xlu0 %1554
      %1558 = vset.pattern.permute.xlu0 0
      %1559 = vperm.xlu0 %1558, %v370
      %v1560 = vpop.permute.xlu0 %1559
      %1563 = vset.pattern.permute.xlu0 0
      %1564 = vperm.xlu0 %1563, %v371
      %v1565 = vpop.permute.xlu0 %1564
      %1568 = vset.pattern.permute.xlu0 0
      %1569 = vperm.xlu0 %1568, %v372
      %v1570 = vpop.permute.xlu0 %1569
      %1573 = vset.pattern.permute.xlu0 0
      %1574 = vperm.xlu0 %1573, %v373
      %v1575 = vpop.permute.xlu0 %1574
      %1578 = vset.pattern.permute.xlu0 0
      %1579 = vperm.xlu0 %1578, %v374
      %v1580 = vpop.permute.xlu0 %1579
      %1583 = vset.pattern.permute.xlu0 0
      %1584 = vperm.xlu0 %1583, %v375
      %v1585 = vpop.permute.xlu0 %1584
      %1588 = vset.pattern.permute.xlu0 0
      %1589 = vperm.xlu0 %1588, %v376
      %v1590 = vpop.permute.xlu0 %1589
      %1593 = vset.pattern.permute.xlu0 0
      %1594 = vperm.xlu0 %1593, %v377
      %v1595 = vpop.permute.xlu0 %1594
      %1598 = vset.pattern.permute.xlu0 0
      %1599 = vperm.xlu0 %1598, %v378
      %v1600 = vpop.permute.xlu0 %1599
      %1603 = vset.pattern.permute.xlu0 0
      %1604 = vperm.xlu0 %1603, %v379
      %v1605 = vpop.permute.xlu0 %1604
      %1608 = vset.pattern.permute.xlu0 0
      %1609 = vperm.xlu0 %1608, %v380
      %v1610 = vpop.permute.xlu0 %1609
      %1613 = vset.pattern.permute.xlu0 0
      %1614 = vperm.xlu0 %1613, %v381
      %v1615 = vpop.permute.xlu0 %1614
      %1618 = vset.pattern.permute.xlu0 0
      %1619 = vperm.xlu0 %1618, %v382
      %v1620 = vpop.permute.xlu0 %1619
      %1623 = vset.pattern.permute.xlu0 0
      %1624 = vperm.xlu0 %1623, %v383
      %v1625 = vpop.permute.xlu0 %1624
      %1628 = vset.pattern.permute.xlu0 0
      %1629 = vperm.xlu0 %1628, %v384
      %v1630 = vpop.permute.xlu0 %1629
      %1633 = vset.pattern.permute.xlu0 0
      %1634 = vperm.xlu0 %1633, %v385
      %v1635 = vpop.permute.xlu0 %1634
      %1638 = vset.pattern.permute.xlu0 0
      %1639 = vperm.xlu0 %1638, %v386
      %v1640 = vpop.permute.xlu0 %1639
      %1643 = vset.pattern.permute.xlu0 0
      %1644 = vperm.xlu0 %1643, %v387
      %v1645 = vpop.permute.xlu0 %1644
      %1648 = vset.pattern.permute.xlu0 0
      %1649 = vperm.xlu0 %1648, %v388
      %v1650 = vpop.permute.xlu0 %1649
      %1653 = vset.pattern.permute.xlu0 0
      %1654 = vperm.xlu0 %1653, %v389
      %v1655 = vpop.permute.xlu0 %1654
      %1658 = vset.pattern.permute.xlu0 0
      %1659 = vperm.xlu0 %1658, %v390
      %v1660 = vpop.permute.xlu0 %1659
      %1663 = vset.pattern.permute.xlu0 0
      %1664 = vperm.xlu0 %1663, %v391
      %v1665 = vpop.permute.xlu0 %1664
      %1668 = vset.pattern.permute.xlu0 0
      %1669 = vperm.xlu0 %1668, %v392
      %v1670 = vpop.permute.xlu0 %1669
      %1673 = vset.pattern.permute.xlu0 0
      %1674 = vperm.xlu0 %1673, %v393
      %v1675 = vpop.permute.xlu0 %1674
      %1678 = vset.pattern.permute.xlu0 0
      %1679 = vperm.xlu0 %1678, %v394
      %v1680 = vpop.permute.xlu0 %1679
      %1683 = vset.pattern.permute.xlu0 0
      %1684 = vperm.xlu0 %1683, %v395
      %v1685 = vpop.permute.xlu0 %1684
      %1688 = vset.pattern.permute.xlu0 0
      %1689 = vperm.xlu0 %1688, %v396
      %v1690 = vpop.permute.xlu0 %1689
      %1693 = vset.pattern.permute.xlu0 0
      %1694 = vperm.xlu0 %1693, %v397
      %v1695 = vpop.permute.xlu0 %1694
      %1698 = vset.pattern.permute.xlu0 0
      %1699 = vperm.xlu0 %1698, %v398
      %v1700 = vpop.permute.xlu0 %1699
      %1703 = vset.pattern.permute.xlu0 0
      %1704 = vperm.xlu0 %1703, %v399
      %v1705 = vpop.permute.xlu0 %1704
      %1708 = vset.pattern.permute.xlu0 0
      %1709 = vperm.xlu0 %1708, %v400
      %v1710 = vpop.permute.xlu0 %1709
      %1713 = vset.pattern.permute.xlu0 0
      %1714 = vperm.xlu0 %1713, %v401
      %v1715 = vpop.permute.xlu0 %1714
      %1718 = vset.pattern.permute.xlu0 0
      %1719 = vperm.xlu0 %1718, %v402
      %v1720 = vpop.permute.xlu0 %1719
      %1723 = vset.pattern.permute.xlu0 0
      %1724 = vperm.xlu0 %1723, %v403
      %v1725 = vpop.permute.xlu0 %1724
      %1728 = vset.pattern.permute.xlu0 0
      %1729 = vperm.xlu0 %1728, %v404
      %v1730 = vpop.permute.xlu0 %1729
      %v1732 = vmul.f32 %v1480, %v1525
      %v1733 = vmul.f32 %v1481, %v1530
      %v1734 = vmul.f32 %v1482, %v1535
      %v1735 = vmul.f32 %v1483, %v1540
      %v1736 = vmul.f32 %v1484, %v1545
      %v1737 = vmul.f32 %v1485, %v1550
      %v1738 = vmul.f32 %v1486, %v1555
      %v1739 = vmul.f32 %v1487, %v1560
      %v1740 = vmul.f32 %v1488, %v1565
      %v1741 = vmul.f32 %v1489, %v1570
      %v1742 = vmul.f32 %v1490, %v1575
      %v1743 = vmul.f32 %v1491, %v1580
      %v1744 = vmul.f32 %v1492, %v1585
      %v1745 = vmul.f32 %v1493, %v1590
      %v1746 = vmul.f32 %v1494, %v1595
      %v1747 = vmul.f32 %v1495, %v1600
      %v1748 = vmul.f32 %v1496, %v1605
      %v1749 = vmul.f32 %v1497, %v1610
      %v1750 = vmul.f32 %v1498, %v1615
      %v1751 = vmul.f32 %v1499, %v1620
      %v1752 = vmul.f32 %v1500, %v1625
      %v1753 = vmul.f32 %v1501, %v1630
      %v1754 = vmul.f32 %v1502, %v1635
      %v1755 = vmul.f32 %v1503, %v1640
      %v1756 = vmul.f32 %v1504, %v1645
      %v1757 = vmul.f32 %v1505, %v1650
      %v1758 = vmul.f32 %v1506, %v1655
      %v1759 = vmul.f32 %v1507, %v1660
      %v1760 = vmul.f32 %v1508, %v1665
      %v1761 = vmul.f32 %v1509, %v1670
      %v1762 = vmul.f32 %v1510, %v1675
      %v1763 = vmul.f32 %v1511, %v1680
      %v1764 = vmul.f32 %v1512, %v1685
      %v1765 = vmul.f32 %v1513, %v1690
      %v1766 = vmul.f32 %v1514, %v1695
      %v1767 = vmul.f32 %v1515, %v1700
      %v1768 = vmul.f32 %v1516, %v1705
      %v1769 = vmul.f32 %v1517, %v1710
      %v1770 = vmul.f32 %v1518, %v1715
      %v1771 = vmul.f32 %v1519, %v1720
      %v1772 = vmul.f32 %v1520, %v1725
      %v1773 = vmul.f32 %v1521, %v1730
      %v1774 = vpack.c.bf16 %v1732, %v1732
      %v1775 = vpack.c.bf16 %v1733, %v1733
      %v1776 = vpack.c.bf16 %v1734, %v1734
      %v1777 = vpack.c.bf16 %v1735, %v1735
      %v1778 = vpack.c.bf16 %v1736, %v1736
      %v1779 = vpack.c.bf16 %v1737, %v1737
      %v1780 = vpack.c.bf16 %v1738, %v1738
      %v1781 = vpack.c.bf16 %v1739, %v1739
      %v1782 = vpack.c.bf16 %v1740, %v1740
      %v1783 = vpack.c.bf16 %v1741, %v1741
      %v1784 = vpack.c.bf16 %v1742, %v1742
      %v1785 = vpack.c.bf16 %v1743, %v1743
      %v1786 = vpack.c.bf16 %v1744, %v1744
      %v1787 = vpack.c.bf16 %v1745, %v1745
      %v1788 = vpack.c.bf16 %v1746, %v1746
      %v1789 = vpack.c.bf16 %v1747, %v1747
      %v1790 = vpack.c.bf16 %v1748, %v1748
      %v1791 = vpack.c.bf16 %v1749, %v1749
      %v1792 = vpack.c.bf16 %v1750, %v1750
      %v1793 = vpack.c.bf16 %v1751, %v1751
      %v1794 = vpack.c.bf16 %v1752, %v1752
      %v1795 = vpack.c.bf16 %v1753, %v1753
      %v1796 = vpack.c.bf16 %v1754, %v1754
      %v1797 = vpack.c.bf16 %v1755, %v1755
      %v1798 = vpack.c.bf16 %v1756, %v1756
      %v1799 = vpack.c.bf16 %v1757, %v1757
      %v1800 = vpack.c.bf16 %v1758, %v1758
      %v1801 = vpack.c.bf16 %v1759, %v1759
      %v1802 = vpack.c.bf16 %v1760, %v1760
      %v1803 = vpack.c.bf16 %v1761, %v1761
      %v1804 = vpack.c.bf16 %v1762, %v1762
      %v1805 = vpack.c.bf16 %v1763, %v1763
      %v1806 = vpack.c.bf16 %v1764, %v1764
      %v1807 = vpack.c.bf16 %v1765, %v1765
      %v1808 = vpack.c.bf16 %v1766, %v1766
      %v1809 = vpack.c.bf16 %v1767, %v1767
      %v1810 = vpack.c.bf16 %v1768, %v1768
      %v1811 = vpack.c.bf16 %v1769, %v1769
      %v1812 = vpack.c.bf16 %v1770, %v1770
      %v1813 = vpack.c.bf16 %v1771, %v1771
      %v1814 = vpack.c.bf16 %v1772, %v1772
      %v1815 = vpack.c.bf16 %v1773, %v1773
      %v1817 = vunpack.c.l.b16 %v1815
      %v1818 = vpack.c.b16 %v1817, %v1817
      %v1820 = vshrl.u32 %v1818, 16
      %v1822 = vrot.slane %v1820, 3
      %v1865 = vunpack.c.l.b16 %v1774
      %v1866 = vunpack.c.l.b16 %v1775
      %v1867 = vunpack.c.l.b16 %v1776
      %v1868 = vunpack.c.l.b16 %v1777
      %v1869 = vunpack.c.l.b16 %v1778
      %v1870 = vunpack.c.l.b16 %v1779
      %v1871 = vunpack.c.l.b16 %v1780
      %v1872 = vunpack.c.l.b16 %v1781
      %v1873 = vunpack.c.l.b16 %v1782
      %v1874 = vunpack.c.l.b16 %v1783
      %v1875 = vunpack.c.l.b16 %v1784
      %v1876 = vunpack.c.l.b16 %v1785
      %v1877 = vunpack.c.l.b16 %v1786
      %v1878 = vunpack.c.l.b16 %v1787
      %v1879 = vunpack.c.l.b16 %v1788
      %v1880 = vunpack.c.l.b16 %v1789
      %v1881 = vunpack.c.l.b16 %v1790
      %v1882 = vunpack.c.l.b16 %v1791
      %v1883 = vunpack.c.l.b16 %v1792
      %v1884 = vunpack.c.l.b16 %v1793
      %v1885 = vunpack.c.l.b16 %v1794
      %v1886 = vunpack.c.l.b16 %v1795
      %v1887 = vunpack.c.l.b16 %v1796
      %v1888 = vunpack.c.l.b16 %v1797
      %v1889 = vunpack.c.l.b16 %v1798
      %v1890 = vunpack.c.l.b16 %v1799
      %v1891 = vunpack.c.l.b16 %v1800
      %v1892 = vunpack.c.l.b16 %v1801
      %v1893 = vunpack.c.l.b16 %v1802
      %v1894 = vunpack.c.l.b16 %v1803
      %v1895 = vunpack.c.l.b16 %v1804
      %v1896 = vunpack.c.l.b16 %v1805
      %v1897 = vunpack.c.l.b16 %v1806
      %v1898 = vunpack.c.l.b16 %v1807
      %v1899 = vunpack.c.l.b16 %v1808
      %v1900 = vunpack.c.l.b16 %v1809
      %v1901 = vunpack.c.l.b16 %v1810
      %v1902 = vunpack.c.l.b16 %v1811
      %v1903 = vunpack.c.l.b16 %v1812
      %v1904 = vunpack.c.l.b16 %v1813
      %v1905 = vunpack.c.l.b16 %v1814
      %v1906 = vpack.c.b16 %v1866, %v1865
      %v1907 = vpack.c.b16 %v1868, %v1867
      %v1908 = vpack.c.b16 %v1870, %v1869
      %v1909 = vpack.c.b16 %v1872, %v1871
      %v1910 = vpack.c.b16 %v1874, %v1873
      %v1911 = vpack.c.b16 %v1876, %v1875
      %v1912 = vpack.c.b16 %v1878, %v1877
      %v1913 = vpack.c.b16 %v1880, %v1879
      %v1914 = vpack.c.b16 %v1882, %v1881
      %v1915 = vpack.c.b16 %v1884, %v1883
      %v1916 = vpack.c.b16 %v1886, %v1885
      %v1917 = vpack.c.b16 %v1888, %v1887
      %v1918 = vpack.c.b16 %v1890, %v1889
      %v1919 = vpack.c.b16 %v1892, %v1891
      %v1920 = vpack.c.b16 %v1894, %v1893
      %v1921 = vpack.c.b16 %v1896, %v1895
      %v1922 = vpack.c.b16 %v1898, %v1897
      %v1923 = vpack.c.b16 %v1900, %v1899
      %v1924 = vpack.c.b16 %v1902, %v1901
      %v1925 = vpack.c.b16 %v1904, %v1903
      %v1926 = vpack.c.b16 %v1817, %v1905
      %v1928 = vshrl.u32 %v1906, 16
      %v1930 = vrot.slane %v1928, 7
      %v1931 = vshll.u32 %v1906, 16
      %v1933 = vor.u32 %v1930, %v1931
      %v1935 = vshrl.u32 %v1907, 16
      %v1937 = vrot.slane %v1935, 7
      %v1938 = vshll.u32 %v1907, 16
      %v1940 = vor.u32 %v1937, %v1938
      %v1941 = vsel %vm558, %v1930, %v1940
      %v1943 = vshrl.u32 %v1908, 16
      %v1945 = vrot.slane %v1943, 7
      %v1946 = vshll.u32 %v1908, 16
      %v1948 = vor.u32 %v1945, %v1946
      %v1949 = vsel %vm558, %v1937, %v1948
      %v1951 = vshrl.u32 %v1909, 16
      %v1953 = vrot.slane %v1951, 7
      %v1954 = vshll.u32 %v1909, 16
      %v1956 = vor.u32 %v1953, %v1954
      %v1957 = vsel %vm558, %v1945, %v1956
      %v1959 = vshrl.u32 %v1910, 16
      %v1961 = vrot.slane %v1959, 7
      %v1962 = vshll.u32 %v1910, 16
      %v1964 = vor.u32 %v1961, %v1962
      %v1965 = vsel %vm558, %v1953, %v1964
      %v1967 = vshrl.u32 %v1911, 16
      %v1969 = vrot.slane %v1967, 7
      %v1970 = vshll.u32 %v1911, 16
      %v1972 = vor.u32 %v1969, %v1970
      %v1973 = vsel %vm558, %v1961, %v1972
      %v1975 = vshrl.u32 %v1912, 16
      %v1977 = vrot.slane %v1975, 7
      %v1978 = vshll.u32 %v1912, 16
      %v1980 = vor.u32 %v1977, %v1978
      %v1981 = vsel %vm558, %v1969, %v1980
      %v1983 = vshrl.u32 %v1913, 16
      %v1985 = vrot.slane %v1983, 7
      %v1986 = vshll.u32 %v1913, 16
      %v1988 = vor.u32 %v1985, %v1986
      %v1989 = vsel %vm558, %v1977, %v1988
      %v1991 = vshrl.u32 %v1914, 16
      %v1993 = vrot.slane %v1991, 7
      %v1994 = vshll.u32 %v1914, 16
      %v1996 = vor.u32 %v1993, %v1994
      %v1997 = vsel %vm558, %v1985, %v1996
      %v1999 = vshrl.u32 %v1915, 16
      %v2001 = vrot.slane %v1999, 7
      %v2002 = vshll.u32 %v1915, 16
      %v2004 = vor.u32 %v2001, %v2002
      %v2005 = vsel %vm558, %v1993, %v2004
      %v2007 = vshrl.u32 %v1916, 16
      %v2009 = vrot.slane %v2007, 7
      %v2010 = vshll.u32 %v1916, 16
      %v2012 = vor.u32 %v2009, %v2010
      %v2013 = vsel %vm558, %v2001, %v2012
      %v2015 = vshrl.u32 %v1917, 16
      %v2017 = vrot.slane %v2015, 7
      %v2018 = vshll.u32 %v1917, 16
      %v2020 = vor.u32 %v2017, %v2018
      %v2021 = vsel %vm558, %v2009, %v2020
      %v2023 = vshrl.u32 %v1918, 16
      %v2025 = vrot.slane %v2023, 7
      %v2026 = vshll.u32 %v1918, 16
      %v2028 = vor.u32 %v2025, %v2026
      %v2029 = vsel %vm558, %v2017, %v2028
      %v2031 = vshrl.u32 %v1919, 16
      %v2033 = vrot.slane %v2031, 7
      %v2034 = vshll.u32 %v1919, 16
      %v2036 = vor.u32 %v2033, %v2034
      %v2037 = vsel %vm558, %v2025, %v2036
      %v2039 = vshrl.u32 %v1920, 16
      %v2041 = vrot.slane %v2039, 7
      %v2042 = vshll.u32 %v1920, 16
      %v2044 = vor.u32 %v2041, %v2042
      %v2045 = vsel %vm558, %v2033, %v2044
      %v2047 = vshrl.u32 %v1921, 16
      %v2049 = vrot.slane %v2047, 7
      %v2050 = vshll.u32 %v1921, 16
      %v2052 = vor.u32 %v2049, %v2050
      %v2053 = vsel %vm558, %v2041, %v2052
      %v2055 = vshrl.u32 %v1922, 16
      %v2057 = vrot.slane %v2055, 7
      %v2058 = vshll.u32 %v1922, 16
      %v2060 = vor.u32 %v2057, %v2058
      %v2061 = vsel %vm558, %v2049, %v2060
      %v2063 = vshrl.u32 %v1923, 16
      %v2065 = vrot.slane %v2063, 7
      %v2066 = vshll.u32 %v1923, 16
      %v2068 = vor.u32 %v2065, %v2066
      %v2069 = vsel %vm558, %v2057, %v2068
      %v2071 = vshrl.u32 %v1924, 16
      %v2073 = vrot.slane %v2071, 7
      %v2074 = vshll.u32 %v1924, 16
      %v2076 = vor.u32 %v2073, %v2074
      %v2077 = vsel %vm558, %v2065, %v2076
      %v2079 = vshrl.u32 %v1925, 16
      %v2081 = vrot.slane %v2079, 7
      %v2082 = vshll.u32 %v1925, 16
      %v2084 = vor.u32 %v2081, %v2082
      %v2085 = vsel %vm558, %v2073, %v2084
      %v2087 = vshrl.u32 %v1926, 16
      %v2089 = vrot.slane %v2087, 7
      %v2090 = vshll.u32 %v1926, 16
      %v2092 = vor.u32 %v2089, %v2090
      %v2093 = vsel %vm558, %v2081, %v2092
      %v2095 = vsel %vm728, %v1822, %v1933
      %v2096 = vrot.slane %v1931, 1
      %v2097 = vor.u32 %v1928, %v2096
      %v2098 = vrot.slane %v1938, 1
      %v2099 = vsel %vm730, %v2097, %v2098
      %v2100 = vor.u32 %v1935, %v2098
      %v2101 = vrot.slane %v1946, 1
      %v2102 = vsel %vm730, %v2100, %v2101
      %v2103 = vor.u32 %v1943, %v2101
      %v2104 = vrot.slane %v1954, 1
      %v2105 = vsel %vm730, %v2103, %v2104
      %v2106 = vor.u32 %v1951, %v2104
      %v2107 = vrot.slane %v1962, 1
      %v2108 = vsel %vm730, %v2106, %v2107
      %v2109 = vor.u32 %v1959, %v2107
      %v2110 = vrot.slane %v1970, 1
      %v2111 = vsel %vm730, %v2109, %v2110
      %v2112 = vor.u32 %v1967, %v2110
      %v2113 = vrot.slane %v1978, 1
      %v2114 = vsel %vm730, %v2112, %v2113
      %v2115 = vor.u32 %v1975, %v2113
      %v2116 = vrot.slane %v1986, 1
      %v2117 = vsel %vm730, %v2115, %v2116
      %v2118 = vor.u32 %v1983, %v2116
      %v2119 = vrot.slane %v1994, 1
      %v2120 = vsel %vm730, %v2118, %v2119
      %v2121 = vor.u32 %v1991, %v2119
      %v2122 = vrot.slane %v2002, 1
      %v2123 = vsel %vm730, %v2121, %v2122
      %v2124 = vor.u32 %v1999, %v2122
      %v2125 = vrot.slane %v2010, 1
      %v2126 = vsel %vm730, %v2124, %v2125
      %v2127 = vor.u32 %v2007, %v2125
      %v2128 = vrot.slane %v2018, 1
      %v2129 = vsel %vm730, %v2127, %v2128
      %v2130 = vor.u32 %v2015, %v2128
      %v2131 = vrot.slane %v2026, 1
      %v2132 = vsel %vm730, %v2130, %v2131
      %v2133 = vor.u32 %v2023, %v2131
      %v2134 = vrot.slane %v2034, 1
      %v2135 = vsel %vm730, %v2133, %v2134
      %v2136 = vor.u32 %v2031, %v2134
      %v2137 = vrot.slane %v2042, 1
      %v2138 = vsel %vm730, %v2136, %v2137
      %v2139 = vor.u32 %v2039, %v2137
      %v2140 = vrot.slane %v2050, 1
      %v2141 = vsel %vm730, %v2139, %v2140
      %v2142 = vor.u32 %v2047, %v2140
      %v2143 = vrot.slane %v2058, 1
      %v2144 = vsel %vm730, %v2142, %v2143
      %v2145 = vor.u32 %v2055, %v2143
      %v2146 = vrot.slane %v2066, 1
      %v2147 = vsel %vm730, %v2145, %v2146
      %v2148 = vor.u32 %v2063, %v2146
      %v2149 = vrot.slane %v2074, 1
      %v2150 = vsel %vm730, %v2148, %v2149
      %v2151 = vor.u32 %v2071, %v2149
      %v2152 = vrot.slane %v2082, 1
      %v2153 = vsel %vm730, %v2151, %v2152
      %v2154 = vor.u32 %v2079, %v2152
      %v2155 = vrot.slane %v2090, 1
      %v2156 = vsel %vm730, %v2154, %v2155
      %v2157 = vor.u32 %v2087, %v2155
      %v2159 = vpack.c.b16 %v1865, %v1865
      %v2161 = vshll.u32 %v2159, 16
      %v2163 = vrot.slane %v2161, 1
      %v2165 = vsel %vm801, %v2157, %v2163
      %2166 = vrot.lane.b32.xlu0 %v1906, 32
      %v2167 = vpop.permute.xlu0 %2166
      %2168 = vrot.lane.b32.xlu0 %v1907, 32
      %v2169 = vpop.permute.xlu0 %2168
      %2170 = vrot.lane.b32.xlu0 %v1908, 32
      %v2171 = vpop.permute.xlu0 %2170
      %2172 = vrot.lane.b32.xlu0 %v1909, 32
      %v2173 = vpop.permute.xlu0 %2172
      %2174 = vrot.lane.b32.xlu0 %v1910, 32
      %v2175 = vpop.permute.xlu0 %2174
      %2176 = vrot.lane.b32.xlu0 %v1911, 32
      %v2177 = vpop.permute.xlu0 %2176
      %2178 = vrot.lane.b32.xlu0 %v1912, 32
      %v2179 = vpop.permute.xlu0 %2178
      %2180 = vrot.lane.b32.xlu0 %v1913, 32
      %v2181 = vpop.permute.xlu0 %2180
      %2182 = vrot.lane.b32.xlu0 %v1914, 32
      %v2183 = vpop.permute.xlu0 %2182
      %2184 = vrot.lane.b32.xlu0 %v1915, 32
      %v2185 = vpop.permute.xlu0 %2184
      %2186 = vrot.lane.b32.xlu0 %v1916, 32
      %v2187 = vpop.permute.xlu0 %2186
      %2188 = vrot.lane.b32.xlu0 %v1917, 32
      %v2189 = vpop.permute.xlu0 %2188
      %2190 = vrot.lane.b32.xlu0 %v1918, 32
      %v2191 = vpop.permute.xlu0 %2190
      %2192 = vrot.lane.b32.xlu0 %v1919, 32
      %v2193 = vpop.permute.xlu0 %2192
      %2194 = vrot.lane.b32.xlu0 %v1920, 32
      %v2195 = vpop.permute.xlu0 %2194
      %2196 = vrot.lane.b32.xlu0 %v1921, 32
      %v2197 = vpop.permute.xlu0 %2196
      %2198 = vrot.lane.b32.xlu0 %v1922, 32
      %v2199 = vpop.permute.xlu0 %2198
      %2200 = vrot.lane.b32.xlu0 %v1923, 32
      %v2201 = vpop.permute.xlu0 %2200
      %2202 = vrot.lane.b32.xlu0 %v1924, 32
      %v2203 = vpop.permute.xlu0 %2202
      %2204 = vrot.lane.b32.xlu0 %v1925, 32
      %v2205 = vpop.permute.xlu0 %2204
      %2206 = vrot.lane.b32.xlu0 %v1926, 32
      %v2207 = vpop.permute.xlu0 %2206
      %2209 = vrot.lane.b32.xlu0 %v2099, 64
      %v2210 = vpop.permute.xlu0 %2209
      %2211 = vrot.lane.b32.xlu0 %v2102, 64
      %v2212 = vpop.permute.xlu0 %2211
      %2213 = vrot.lane.b32.xlu0 %v2105, 64
      %v2214 = vpop.permute.xlu0 %2213
      %2215 = vrot.lane.b32.xlu0 %v2108, 64
      %v2216 = vpop.permute.xlu0 %2215
      %2217 = vrot.lane.b32.xlu0 %v2111, 64
      %v2218 = vpop.permute.xlu0 %2217
      %2219 = vrot.lane.b32.xlu0 %v2114, 64
      %v2220 = vpop.permute.xlu0 %2219
      %2221 = vrot.lane.b32.xlu0 %v2117, 64
      %v2222 = vpop.permute.xlu0 %2221
      %2223 = vrot.lane.b32.xlu0 %v2120, 64
      %v2224 = vpop.permute.xlu0 %2223
      %2225 = vrot.lane.b32.xlu0 %v2123, 64
      %v2226 = vpop.permute.xlu0 %2225
      %2227 = vrot.lane.b32.xlu0 %v2126, 64
      %v2228 = vpop.permute.xlu0 %2227
      %2229 = vrot.lane.b32.xlu0 %v2129, 64
      %v2230 = vpop.permute.xlu0 %2229
      %2231 = vrot.lane.b32.xlu0 %v2132, 64
      %v2232 = vpop.permute.xlu0 %2231
      %2233 = vrot.lane.b32.xlu0 %v2135, 64
      %v2234 = vpop.permute.xlu0 %2233
      %2235 = vrot.lane.b32.xlu0 %v2138, 64
      %v2236 = vpop.permute.xlu0 %2235
      %2237 = vrot.lane.b32.xlu0 %v2141, 64
      %v2238 = vpop.permute.xlu0 %2237
      %2239 = vrot.lane.b32.xlu0 %v2144, 64
      %v2240 = vpop.permute.xlu0 %2239
      %2241 = vrot.lane.b32.xlu0 %v2147, 64
      %v2242 = vpop.permute.xlu0 %2241
      %2243 = vrot.lane.b32.xlu0 %v2150, 64
      %v2244 = vpop.permute.xlu0 %2243
      %2245 = vrot.lane.b32.xlu0 %v2153, 64
      %v2246 = vpop.permute.xlu0 %2245
      %2247 = vrot.lane.b32.xlu0 %v2156, 64
      %v2248 = vpop.permute.xlu0 %2247
      %2249 = vrot.lane.b32.xlu0 %v2165, 64
      %v2250 = vpop.permute.xlu0 %2249
      %vm2251 = vcmask 261120
      %v2254 = vsel %vm2251, %v2095, %v2167
      %v2257 = vsel %vm2251, %v1941, %v2169
      %v2260 = vsel %vm2251, %v1949, %v2171
      %v2263 = vsel %vm2251, %v1957, %v2173
      %v2266 = vsel %vm2251, %v1965, %v2175
      %v2269 = vsel %vm2251, %v1973, %v2177
      %v2272 = vsel %vm2251, %v1981, %v2179
      %v2275 = vsel %vm2251, %v1989, %v2181
      %v2278 = vsel %vm2251, %v1997, %v2183
      %v2281 = vsel %vm2251, %v2005, %v2185
      %v2284 = vsel %vm2251, %v2013, %v2187
      %v2287 = vsel %vm2251, %v2021, %v2189
      %v2290 = vsel %vm2251, %v2029, %v2191
      %v2293 = vsel %vm2251, %v2037, %v2193
      %v2296 = vsel %vm2251, %v2045, %v2195
      %v2299 = vsel %vm2251, %v2053, %v2197
      %v2302 = vsel %vm2251, %v2061, %v2199
      %v2305 = vsel %vm2251, %v2069, %v2201
      %v2308 = vsel %vm2251, %v2077, %v2203
      %v2311 = vsel %vm2251, %v2085, %v2205
      %v2314 = vsel %vm2251, %v2093, %v2207
      %vm2315 = vcmask 523264
      %v2317 = vsel %vm2315, %v2254, %v2210
      %v2319 = vsel %vm2315, %v2257, %v2212
      %v2321 = vsel %vm2315, %v2260, %v2214
      %v2323 = vsel %vm2315, %v2263, %v2216
      %v2325 = vsel %vm2315, %v2266, %v2218
      %v2327 = vsel %vm2315, %v2269, %v2220
      %v2329 = vsel %vm2315, %v2272, %v2222
      %v2331 = vsel %vm2315, %v2275, %v2224
      %v2333 = vsel %vm2315, %v2278, %v2226
      %v2335 = vsel %vm2315, %v2281, %v2228
      %v2337 = vsel %vm2315, %v2284, %v2230
      %v2339 = vsel %vm2315, %v2287, %v2232
      %v2341 = vsel %vm2315, %v2290, %v2234
      %v2343 = vsel %vm2315, %v2293, %v2236
      %v2345 = vsel %vm2315, %v2296, %v2238
      %v2347 = vsel %vm2315, %v2299, %v2240
      %v2349 = vsel %vm2315, %v2302, %v2242
      %v2351 = vsel %vm2315, %v2305, %v2244
      %v2353 = vsel %vm2315, %v2308, %v2246
      %v2355 = vsel %vm2315, %v2311, %v2248
      %v2357 = vsel %vm2315, %v2314, %v2250
      %v2360 = vrot.slane %v2355, 4
      %v2361 = vrot.slane %v2357, 4
      %v2362 = vsel %vm997, %v2360, %v2361
      %v2382 = vrot.slane %v2317, 4
      %v2383 = vrot.slane %v2319, 4
      %v2384 = vsel %vm997, %v2382, %v2383
      %v2385 = vrot.slane %v2321, 4
      %v2386 = vsel %vm997, %v2383, %v2385
      %v2387 = vrot.slane %v2323, 4
      %v2388 = vsel %vm997, %v2385, %v2387
      %v2389 = vrot.slane %v2325, 4
      %v2390 = vsel %vm997, %v2387, %v2389
      %v2391 = vrot.slane %v2327, 4
      %v2392 = vsel %vm997, %v2389, %v2391
      %v2393 = vrot.slane %v2329, 4
      %v2394 = vsel %vm997, %v2391, %v2393
      %v2395 = vrot.slane %v2331, 4
      %v2396 = vsel %vm997, %v2393, %v2395
      %v2397 = vrot.slane %v2333, 4
      %v2398 = vsel %vm997, %v2395, %v2397
      %v2399 = vrot.slane %v2335, 4
      %v2400 = vsel %vm997, %v2397, %v2399
      %v2401 = vrot.slane %v2337, 4
      %v2402 = vsel %vm997, %v2399, %v2401
      %v2403 = vrot.slane %v2339, 4
      %v2404 = vsel %vm997, %v2401, %v2403
      %v2405 = vrot.slane %v2341, 4
      %v2406 = vsel %vm997, %v2403, %v2405
      %v2407 = vrot.slane %v2343, 4
      %v2408 = vsel %vm997, %v2405, %v2407
      %v2409 = vrot.slane %v2345, 4
      %v2410 = vsel %vm997, %v2407, %v2409
      %v2411 = vrot.slane %v2347, 4
      %v2412 = vsel %vm997, %v2409, %v2411
      %v2413 = vrot.slane %v2349, 4
      %v2414 = vsel %vm997, %v2411, %v2413
      %v2415 = vrot.slane %v2351, 4
      %v2416 = vsel %vm997, %v2413, %v2415
      %v2417 = vrot.slane %v2353, 4
      %v2418 = vsel %vm997, %v2415, %v2417
      %v2419 = vsel %vm997, %v2417, %v2360
      %v2422 = vsel %vm1058, %v2361, %v2382
      %2423 = vrot.lane.b32.xlu0 %v2317, 96
      %v2424 = vpop.permute.xlu0 %2423
      %2425 = vrot.lane.b32.xlu0 %v2319, 96
      %v2426 = vpop.permute.xlu0 %2425
      %2427 = vrot.lane.b32.xlu0 %v2321, 96
      %v2428 = vpop.permute.xlu0 %2427
      %2429 = vrot.lane.b32.xlu0 %v2323, 96
      %v2430 = vpop.permute.xlu0 %2429
      %2431 = vrot.lane.b32.xlu0 %v2325, 96
      %v2432 = vpop.permute.xlu0 %2431
      %2433 = vrot.lane.b32.xlu0 %v2327, 96
      %v2434 = vpop.permute.xlu0 %2433
      %2435 = vrot.lane.b32.xlu0 %v2329, 96
      %v2436 = vpop.permute.xlu0 %2435
      %2437 = vrot.lane.b32.xlu0 %v2331, 96
      %v2438 = vpop.permute.xlu0 %2437
      %2439 = vrot.lane.b32.xlu0 %v2333, 96
      %v2440 = vpop.permute.xlu0 %2439
      %2441 = vrot.lane.b32.xlu0 %v2335, 96
      %v2442 = vpop.permute.xlu0 %2441
      %2443 = vrot.lane.b32.xlu0 %v2337, 96
      %v2444 = vpop.permute.xlu0 %2443
      %2445 = vrot.lane.b32.xlu0 %v2339, 96
      %v2446 = vpop.permute.xlu0 %2445
      %2447 = vrot.lane.b32.xlu0 %v2341, 96
      %v2448 = vpop.permute.xlu0 %2447
      %2449 = vrot.lane.b32.xlu0 %v2343, 96
      %v2450 = vpop.permute.xlu0 %2449
      %2451 = vrot.lane.b32.xlu0 %v2345, 96
      %v2452 = vpop.permute.xlu0 %2451
      %2453 = vrot.lane.b32.xlu0 %v2347, 96
      %v2454 = vpop.permute.xlu0 %2453
      %2455 = vrot.lane.b32.xlu0 %v2349, 96
      %v2456 = vpop.permute.xlu0 %2455
      %2457 = vrot.lane.b32.xlu0 %v2351, 96
      %v2458 = vpop.permute.xlu0 %2457
      %2459 = vrot.lane.b32.xlu0 %v2353, 96
      %v2460 = vpop.permute.xlu0 %2459
      %2461 = vrot.lane.b32.xlu0 %v2355, 96
      %v2462 = vpop.permute.xlu0 %2461
      %2463 = vrot.lane.b32.xlu0 %v2357, 96
      %v2464 = vpop.permute.xlu0 %2463
      %2466 = vrot.lane.b32.xlu0 %v2386, 64
      %v2467 = vpop.permute.xlu0 %2466
      %2468 = vrot.lane.b32.xlu0 %v2388, 64
      %v2469 = vpop.permute.xlu0 %2468
      %2470 = vrot.lane.b32.xlu0 %v2390, 64
      %v2471 = vpop.permute.xlu0 %2470
      %2472 = vrot.lane.b32.xlu0 %v2392, 64
      %v2473 = vpop.permute.xlu0 %2472
      %2474 = vrot.lane.b32.xlu0 %v2394, 64
      %v2475 = vpop.permute.xlu0 %2474
      %2476 = vrot.lane.b32.xlu0 %v2396, 64
      %v2477 = vpop.permute.xlu0 %2476
      %2478 = vrot.lane.b32.xlu0 %v2398, 64
      %v2479 = vpop.permute.xlu0 %2478
      %2480 = vrot.lane.b32.xlu0 %v2400, 64
      %v2481 = vpop.permute.xlu0 %2480
      %2482 = vrot.lane.b32.xlu0 %v2402, 64
      %v2483 = vpop.permute.xlu0 %2482
      %2484 = vrot.lane.b32.xlu0 %v2404, 64
      %v2485 = vpop.permute.xlu0 %2484
      %2486 = vrot.lane.b32.xlu0 %v2406, 64
      %v2487 = vpop.permute.xlu0 %2486
      %2488 = vrot.lane.b32.xlu0 %v2408, 64
      %v2489 = vpop.permute.xlu0 %2488
      %2490 = vrot.lane.b32.xlu0 %v2410, 64
      %v2491 = vpop.permute.xlu0 %2490
      %2492 = vrot.lane.b32.xlu0 %v2412, 64
      %v2493 = vpop.permute.xlu0 %2492
      %2494 = vrot.lane.b32.xlu0 %v2414, 64
      %v2495 = vpop.permute.xlu0 %2494
      %2496 = vrot.lane.b32.xlu0 %v2416, 64
      %v2497 = vpop.permute.xlu0 %2496
      %2498 = vrot.lane.b32.xlu0 %v2418, 64
      %v2499 = vpop.permute.xlu0 %2498
      %2500 = vrot.lane.b32.xlu0 %v2419, 64
      %v2501 = vpop.permute.xlu0 %2500
      %2502 = vrot.lane.b32.xlu0 %v2362, 64
      %v2503 = vpop.permute.xlu0 %2502
      %2504 = vrot.lane.b32.xlu0 %v2422, 64
      %v2505 = vpop.permute.xlu0 %2504
      %2506 = vrot.lane.b32.xlu0 %v2384, 64
      %v2507 = vpop.permute.xlu0 %2506
      %vm2508 = vcmask 785408
      %v2511 = vsel %vm2508, %v2362, %v2424
      %v2514 = vsel %vm2508, %v2422, %v2426
      %v2518 = vsel %vm2508, %v2384, %v2428
      %v2522 = vsel %vm2508, %v2386, %v2430
      %v2526 = vsel %vm2508, %v2388, %v2432
      %v2530 = vsel %vm2508, %v2390, %v2434
      %v2534 = vsel %vm2508, %v2392, %v2436
      %v2538 = vsel %vm2508, %v2394, %v2438
      %v2542 = vsel %vm2508, %v2396, %v2440
      %v2546 = vsel %vm2508, %v2398, %v2442
      %v2550 = vsel %vm2508, %v2400, %v2444
      %v2554 = vsel %vm2508, %v2402, %v2446
      %v2558 = vsel %vm2508, %v2404, %v2448
      %v2562 = vsel %vm2508, %v2406, %v2450
      %v2566 = vsel %vm2508, %v2408, %v2452
      %v2570 = vsel %vm2508, %v2410, %v2454
      %v2574 = vsel %vm2508, %v2412, %v2456
      %v2578 = vsel %vm2508, %v2414, %v2458
      %v2582 = vsel %vm2508, %v2416, %v2460
      %v2586 = vsel %vm2508, %v2418, %v2462
      %v2590 = vsel %vm2508, %v2419, %v2464
      %v2593 = vsel %vm2315, %v2424, %v2467
      %v2596 = vsel %vm2315, %v2426, %v2469
      %v2599 = vsel %vm2315, %v2428, %v2471
      %v2602 = vsel %vm2315, %v2430, %v2473
      %v2605 = vsel %vm2315, %v2432, %v2475
      %v2608 = vsel %vm2315, %v2434, %v2477
      %v2611 = vsel %vm2315, %v2436, %v2479
      %v2614 = vsel %vm2315, %v2438, %v2481
      %v2617 = vsel %vm2315, %v2440, %v2483
      %v2620 = vsel %vm2315, %v2442, %v2485
      %v2623 = vsel %vm2315, %v2444, %v2487
      %v2626 = vsel %vm2315, %v2446, %v2489
      %v2629 = vsel %vm2315, %v2448, %v2491
      %v2632 = vsel %vm2315, %v2450, %v2493
      %v2635 = vsel %vm2315, %v2452, %v2495
      %v2638 = vsel %vm2315, %v2454, %v2497
      %v2641 = vsel %vm2315, %v2456, %v2499
      %v2644 = vsel %vm2315, %v2458, %v2501
      %v2647 = vsel %vm2315, %v2460, %v2503
      %v2650 = vsel %vm2315, %v2462, %v2505
      %v2653 = vsel %vm2315, %v2464, %v2507
      %v2655 = vld [vmem:[%s4] sm:$0xf]
      %v2656 = vld [vmem:[%s4 + $0x4] sm:$0xf]
      %v2657 = vld [vmem:[%s4 + $0x8] sm:$0xf]
      %v2658 = vld [vmem:[%s4 + $0xc] sm:$0xf]
      %v2659 = vld [vmem:[%s4 + $0x10] sm:$0xf]
      %v2660 = vld [vmem:[%s4 + $0x14] sm:$0xf]
      %v2661 = vld [vmem:[%s4 + $0x18] sm:$0xf]
      %v2662 = vld [vmem:[%s4 + $0x1c] sm:$0xf]
      %v2663 = vld [vmem:[%s4 + $0x20] sm:$0xf]
      %v2664 = vld [vmem:[%s4 + $0x24] sm:$0xf]
      %v2665 = vld [vmem:[%s4 + $0x28] sm:$0xf]
      %v2666 = vld [vmem:[%s4 + $0x2c] sm:$0xf]
      %v2667 = vld [vmem:[%s4 + $0x30] sm:$0xf]
      %v2668 = vld [vmem:[%s4 + $0x34] sm:$0xf]
      %v2669 = vld [vmem:[%s4 + $0x38] sm:$0xf]
      %v2670 = vld [vmem:[%s4 + $0x3c] sm:$0xf]
      %v2671 = vld [vmem:[%s4 + $0x40] sm:$0xf]
      %v2672 = vld [vmem:[%s4 + $0x44] sm:$0xf]
      %v2673 = vld [vmem:[%s4 + $0x48] sm:$0xf]
      %v2674 = vld [vmem:[%s4 + $0x4c] sm:$0xf]
      %v2675 = vld [vmem:[%s4 + $0x50] sm:$0xf]
      %v2676 = vld [vmem:[%s4 + $0x54] sm:$0xf]
      %v2677 = vld [vmem:[%s4 + $0x58] sm:$0xf]
      %v2678 = vld [vmem:[%s4 + $0x5c] sm:$0xf]
      %v2679 = vld [vmem:[%s4 + $0x60] sm:$0xf]
      %v2680 = vld [vmem:[%s4 + $0x64] sm:$0xf]
      %v2681 = vld [vmem:[%s4 + $0x68] sm:$0xf]
      %v2682 = vld [vmem:[%s4 + $0x6c] sm:$0xf]
      %v2683 = vld [vmem:[%s4 + $0x70] sm:$0xf]
      %v2684 = vld [vmem:[%s4 + $0x74] sm:$0xf]
      %v2685 = vld [vmem:[%s4 + $0x78] sm:$0xf]
      %v2686 = vld [vmem:[%s4 + $0x7c] sm:$0xf]
      %v2687 = vld [vmem:[%s4 + $0x80] sm:$0xf]
      %v2688 = vld [vmem:[%s4 + $0x84] sm:$0xf]
      %v2689 = vld [vmem:[%s4 + $0x88] sm:$0xf]
      %v2690 = vld [vmem:[%s4 + $0x8c] sm:$0xf]
      %v2691 = vld [vmem:[%s5] sm:$0x1]
      %v2693 = vperm.slane %v2691, 0
      %v2731 = vunpack.c.l.b16 %v2655
      %v2732 = vunpack.c.l.b16 %v2656
      %v2733 = vunpack.c.l.b16 %v2657
      %v2734 = vunpack.c.l.b16 %v2658
      %v2735 = vunpack.c.l.b16 %v2659
      %v2736 = vunpack.c.l.b16 %v2660
      %v2737 = vunpack.c.l.b16 %v2661
      %v2738 = vunpack.c.l.b16 %v2662
      %v2739 = vunpack.c.l.b16 %v2663
      %v2740 = vunpack.c.l.b16 %v2664
      %v2741 = vunpack.c.l.b16 %v2665
      %v2742 = vunpack.c.l.b16 %v2666
      %v2743 = vunpack.c.l.b16 %v2667
      %v2744 = vunpack.c.l.b16 %v2668
      %v2745 = vunpack.c.l.b16 %v2669
      %v2746 = vunpack.c.l.b16 %v2670
      %v2747 = vunpack.c.l.b16 %v2671
      %v2748 = vunpack.c.l.b16 %v2672
      %v2749 = vunpack.c.l.b16 %v2673
      %v2750 = vunpack.c.l.b16 %v2674
      %v2751 = vunpack.c.l.b16 %v2675
      %v2752 = vunpack.c.l.b16 %v2676
      %v2753 = vunpack.c.l.b16 %v2677
      %v2754 = vunpack.c.l.b16 %v2678
      %v2755 = vunpack.c.l.b16 %v2679
      %v2756 = vunpack.c.l.b16 %v2680
      %v2757 = vunpack.c.l.b16 %v2681
      %v2758 = vunpack.c.l.b16 %v2682
      %v2759 = vunpack.c.l.b16 %v2683
      %v2760 = vunpack.c.l.b16 %v2684
      %v2761 = vunpack.c.l.b16 %v2685
      %v2762 = vunpack.c.l.b16 %v2686
      %v2763 = vunpack.c.l.b16 %v2687
      %v2764 = vunpack.c.l.b16 %v2688
      %v2765 = vunpack.c.l.b16 %v2689
      %v2766 = vunpack.c.l.b16 %v2690
      %v2767 = vpack.c.b16 %v2732, %v2731
      %v2768 = vpack.c.b16 %v2734, %v2733
      %v2769 = vpack.c.b16 %v2736, %v2735
      %v2770 = vpack.c.b16 %v2738, %v2737
      %v2771 = vpack.c.b16 %v2740, %v2739
      %v2772 = vpack.c.b16 %v2742, %v2741
      %v2773 = vpack.c.b16 %v2744, %v2743
      %v2774 = vpack.c.b16 %v2746, %v2745
      %v2775 = vpack.c.b16 %v2748, %v2747
      %v2776 = vpack.c.b16 %v2750, %v2749
      %v2777 = vpack.c.b16 %v2752, %v2751
      %v2778 = vpack.c.b16 %v2754, %v2753
      %v2779 = vpack.c.b16 %v2756, %v2755
      %v2780 = vpack.c.b16 %v2758, %v2757
      %v2781 = vpack.c.b16 %v2760, %v2759
      %v2782 = vpack.c.b16 %v2762, %v2761
      %v2783 = vpack.c.b16 %v2764, %v2763
      %v2784 = vpack.c.b16 %v2766, %v2765
      %v2803 = vsel %vm2251, %v2467, 0
      %v2805 = vsel %vm2251, %v2469, 0
      %v2807 = vsel %vm2251, %v2471, 0
      %v2809 = vsel %vm2251, %v2473, 0
      %v2811 = vsel %vm2251, %v2475, 0
      %v2813 = vsel %vm2251, %v2477, 0
      %v2815 = vsel %vm2251, %v2479, 0
      %v2817 = vsel %vm2251, %v2481, 0
      %v2819 = vsel %vm2251, %v2483, 0
      %v2821 = vsel %vm2251, %v2485, 0
      %v2823 = vsel %vm2251, %v2487, 0
      %v2825 = vsel %vm2251, %v2489, 0
      %v2827 = vsel %vm2251, %v2491, 0
      %v2829 = vsel %vm2251, %v2493, 0
      %v2831 = vsel %vm2251, %v2495, 0
      %v2833 = vsel %vm2251, %v2497, 0
      %v2835 = vsel %vm2251, %v2499, 0
      %v2837 = vsel %vm2251, %v2501, 0
      %v2839 = vsel %vm2251, %v2503, 0
      %v2841 = vsel %vm2251, %v2505, 0
      %v2843 = vsel %vm2251, %v2507, 0
      %2845 = vmatpush.bf16.msra.mxu0 %v2774
      %2846 = vmatpush.bf16.msra.mxu0 %v2773
      %2847 = vmatpush.bf16.msra.mxu0 %v2772
      %2848 = vmatpush.bf16.msra.mxu0 %v2771
      %2849 = vmatpush.bf16.msra.mxu0 %v2770
      %2850 = vmatpush.bf16.msra.mxu0 %v2769
      %2851 = vmatpush.bf16.msra.mxu0 %v2768
      %2852 = vmatpush.bf16.msra.mxu0 %v2767
      %2853 = vmatmul.bf16.gmra.mxu0 %v2511
      %v2854 = vpop.f32.mrf.mxu0
      %v2855 = vpop.f32.mrf.mxu0
      %2856 = vmatmul.bf16.gmra.mxu0 %v2514
      %v2857 = vpop.f32.mrf.mxu0
      %v2858 = vadd.f32 %v2693, %v2857
      %v2859 = vpop.f32.mrf.mxu0
      %v2860 = vadd.f32 %v2693, %v2859
      %2861 = vmatmul.bf16.gmra.mxu0 %v2518
      %v2862 = vpop.f32.mrf.mxu0
      %v2863 = vadd.f32 %v2693, %v2862
      %v2864 = vpop.f32.mrf.mxu0
      %v2865 = vadd.f32 %v2693, %v2864
      %2866 = vmatmul.bf16.gmra.mxu0 %v2522
      %v2867 = vpop.f32.mrf.mxu0
      %v2868 = vadd.f32 %v2693, %v2867
      %v2869 = vpop.f32.mrf.mxu0
      %v2870 = vadd.f32 %v2693, %v2869
      %2871 = vmatmul.bf16.gmra.mxu0 %v2526
      %v2872 = vpop.f32.mrf.mxu0
      %v2873 = vadd.f32 %v2693, %v2872
      %v2874 = vpop.f32.mrf.mxu0
      %v2875 = vadd.f32 %v2693, %v2874
      %2876 = vmatmul.bf16.gmra.mxu0 %v2530
      %v2877 = vpop.f32.mrf.mxu0
      %v2878 = vadd.f32 %v2693, %v2877
      %v2879 = vpop.f32.mrf.mxu0
      %v2880 = vadd.f32 %v2693, %v2879
      %2881 = vmatmul.bf16.gmra.mxu0 %v2534
      %v2882 = vpop.f32.mrf.mxu0
      %v2883 = vadd.f32 %v2693, %v2882
      %v2884 = vpop.f32.mrf.mxu0
      %v2885 = vadd.f32 %v2693, %v2884
      %2886 = vmatmul.bf16.gmra.mxu0 %v2538
      %v2887 = vpop.f32.mrf.mxu0
      %v2888 = vadd.f32 %v2693, %v2887
      %v2889 = vpop.f32.mrf.mxu0
      %v2890 = vadd.f32 %v2693, %v2889
      %2891 = vmatmul.bf16.gmra.mxu0 %v2542
      %v2892 = vpop.f32.mrf.mxu0
      %v2893 = vadd.f32 %v2693, %v2892
      %v2894 = vpop.f32.mrf.mxu0
      %v2895 = vadd.f32 %v2693, %v2894
      %2896 = vmatmul.bf16.gmra.mxu0 %v2546
      %v2897 = vpop.f32.mrf.mxu0
      %v2898 = vadd.f32 %v2693, %v2897
      %v2899 = vpop.f32.mrf.mxu0
      %v2900 = vadd.f32 %v2693, %v2899
      %2901 = vmatmul.bf16.gmra.mxu0 %v2550
      %v2902 = vpop.f32.mrf.mxu0
      %v2903 = vadd.f32 %v2693, %v2902
      %v2904 = vpop.f32.mrf.mxu0
      %v2905 = vadd.f32 %v2693, %v2904
      %2906 = vmatmul.bf16.gmra.mxu0 %v2554
      %v2907 = vpop.f32.mrf.mxu0
      %v2908 = vadd.f32 %v2693, %v2907
      %v2909 = vpop.f32.mrf.mxu0
      %v2910 = vadd.f32 %v2693, %v2909
      %2911 = vmatmul.bf16.gmra.mxu0 %v2558
      %v2912 = vpop.f32.mrf.mxu0
      %v2913 = vadd.f32 %v2693, %v2912
      %v2914 = vpop.f32.mrf.mxu0
      %v2915 = vadd.f32 %v2693, %v2914
      %2916 = vmatmul.bf16.gmra.mxu0 %v2562
      %v2917 = vpop.f32.mrf.mxu0
      %v2918 = vadd.f32 %v2693, %v2917
      %v2919 = vpop.f32.mrf.mxu0
      %v2920 = vadd.f32 %v2693, %v2919
      %2921 = vmatmul.bf16.gmra.mxu0 %v2566
      %v2922 = vpop.f32.mrf.mxu0
      %v2923 = vadd.f32 %v2693, %v2922
      %v2924 = vpop.f32.mrf.mxu0
      %v2925 = vadd.f32 %v2693, %v2924
      %2926 = vmatmul.bf16.gmra.mxu0 %v2570
      %v2927 = vpop.f32.mrf.mxu0
      %v2928 = vadd.f32 %v2693, %v2927
      %v2929 = vpop.f32.mrf.mxu0
      %v2930 = vadd.f32 %v2693, %v2929
      %2931 = vmatmul.bf16.gmra.mxu0 %v2574
      %v2932 = vpop.f32.mrf.mxu0
      %v2933 = vadd.f32 %v2693, %v2932
      %v2934 = vpop.f32.mrf.mxu0
      %v2935 = vadd.f32 %v2693, %v2934
      %2936 = vmatmul.bf16.gmra.mxu0 %v2578
      %v2937 = vpop.f32.mrf.mxu0
      %v2938 = vadd.f32 %v2693, %v2937
      %v2939 = vpop.f32.mrf.mxu0
      %v2940 = vadd.f32 %v2693, %v2939
      %2941 = vmatmul.bf16.gmra.mxu0 %v2582
      %v2942 = vpop.f32.mrf.mxu0
      %v2943 = vadd.f32 %v2693, %v2942
      %v2944 = vpop.f32.mrf.mxu0
      %v2945 = vadd.f32 %v2693, %v2944
      %2946 = vmatmul.bf16.gmra.mxu0 %v2586
      %v2947 = vpop.f32.mrf.mxu0
      %v2948 = vadd.f32 %v2693, %v2947
      %v2949 = vpop.f32.mrf.mxu0
      %v2950 = vadd.f32 %v2693, %v2949
      %2951 = vmatmul.bf16.gmra.mxu0 %v2590
      %v2952 = vpop.f32.mrf.mxu0
      %v2953 = vpop.f32.mrf.mxu0
      %2954 = vdwg.mxu0
      %2955 = vmatpush.bf16.msra.mxu0 %v2782
      %2956 = vmatpush.bf16.msra.mxu0 %v2781
      %2957 = vmatpush.bf16.msra.mxu0 %v2780
      %2958 = vmatpush.bf16.msra.mxu0 %v2779
      %2959 = vmatpush.bf16.msra.mxu0 %v2778
      %2960 = vmatpush.bf16.msra.mxu0 %v2777
      %2961 = vmatpush.bf16.msra.mxu0 %v2776
      %2962 = vmatpush.bf16.msra.mxu0 %v2775
      %2963 = vmatmul.bf16.gmra.mxu0 %v2593
      %v2964 = vpop.f32.mrf.mxu0
      %v2965 = vpop.f32.mrf.mxu0
      %2966 = vmatmul.bf16.gmra.mxu0 %v2596
      %v2967 = vpop.f32.mrf.mxu0
      %v2968 = vadd.f32 %v2858, %v2967
      %v2969 = vpop.f32.mrf.mxu0
      %v2970 = vadd.f32 %v2860, %v2969
      %2971 = vmatmul.bf16.gmra.mxu0 %v2599
      %v2972 = vpop.f32.mrf.mxu0
      %v2973 = vadd.f32 %v2863, %v2972
      %v2974 = vpop.f32.mrf.mxu0
      %v2975 = vadd.f32 %v2865, %v2974
      %2976 = vmatmul.bf16.gmra.mxu0 %v2602
      %v2977 = vpop.f32.mrf.mxu0
      %v2978 = vadd.f32 %v2868, %v2977
      %v2979 = vpop.f32.mrf.mxu0
      %v2980 = vadd.f32 %v2870, %v2979
      %2981 = vmatmul.bf16.gmra.mxu0 %v2605
      %v2982 = vpop.f32.mrf.mxu0
      %v2983 = vadd.f32 %v2873, %v2982
      %v2984 = vpop.f32.mrf.mxu0
      %v2985 = vadd.f32 %v2875, %v2984
      %2986 = vmatmul.bf16.gmra.mxu0 %v2608
      %v2987 = vpop.f32.mrf.mxu0
      %v2988 = vadd.f32 %v2878, %v2987
      %v2989 = vpop.f32.mrf.mxu0
      %v2990 = vadd.f32 %v2880, %v2989
      %2991 = vmatmul.bf16.gmra.mxu0 %v2611
      %v2992 = vpop.f32.mrf.mxu0
      %v2993 = vadd.f32 %v2883, %v2992
      %v2994 = vpop.f32.mrf.mxu0
      %v2995 = vadd.f32 %v2885, %v2994
      %2996 = vmatmul.bf16.gmra.mxu0 %v2614
      %v2997 = vpop.f32.mrf.mxu0
      %v2998 = vadd.f32 %v2888, %v2997
      %v2999 = vpop.f32.mrf.mxu0
      %v3000 = vadd.f32 %v2890, %v2999
      %3001 = vmatmul.bf16.gmra.mxu0 %v2617
      %v3002 = vpop.f32.mrf.mxu0
      %v3003 = vadd.f32 %v2893, %v3002
      %v3004 = vpop.f32.mrf.mxu0
      %v3005 = vadd.f32 %v2895, %v3004
      %3006 = vmatmul.bf16.gmra.mxu0 %v2620
      %v3007 = vpop.f32.mrf.mxu0
      %v3008 = vadd.f32 %v2898, %v3007
      %v3009 = vpop.f32.mrf.mxu0
      %v3010 = vadd.f32 %v2900, %v3009
      %3011 = vmatmul.bf16.gmra.mxu0 %v2623
      %v3012 = vpop.f32.mrf.mxu0
      %v3013 = vadd.f32 %v2903, %v3012
      %v3014 = vpop.f32.mrf.mxu0
      %v3015 = vadd.f32 %v2905, %v3014
      %3016 = vmatmul.bf16.gmra.mxu0 %v2626
      %v3017 = vpop.f32.mrf.mxu0
      %v3018 = vadd.f32 %v2908, %v3017
      %v3019 = vpop.f32.mrf.mxu0
      %v3020 = vadd.f32 %v2910, %v3019
      %3021 = vmatmul.bf16.gmra.mxu0 %v2629
      %v3022 = vpop.f32.mrf.mxu0
      %v3023 = vadd.f32 %v2913, %v3022
      %v3024 = vpop.f32.mrf.mxu0
      %v3025 = vadd.f32 %v2915, %v3024
      %3026 = vmatmul.bf16.gmra.mxu0 %v2632
      %v3027 = vpop.f32.mrf.mxu0
      %v3028 = vadd.f32 %v2918, %v3027
      %v3029 = vpop.f32.mrf.mxu0
      %v3030 = vadd.f32 %v2920, %v3029
      %3031 = vmatmul.bf16.gmra.mxu0 %v2635
      %v3032 = vpop.f32.mrf.mxu0
      %v3033 = vadd.f32 %v2923, %v3032
      %v3034 = vpop.f32.mrf.mxu0
      %v3035 = vadd.f32 %v2925, %v3034
      %3036 = vmatmul.bf16.gmra.mxu0 %v2638
      %v3037 = vpop.f32.mrf.mxu0
      %v3038 = vadd.f32 %v2928, %v3037
      %v3039 = vpop.f32.mrf.mxu0
      %v3040 = vadd.f32 %v2930, %v3039
      %3041 = vmatmul.bf16.gmra.mxu0 %v2641
      %v3042 = vpop.f32.mrf.mxu0
      %v3043 = vadd.f32 %v2933, %v3042
      %v3044 = vpop.f32.mrf.mxu0
      %v3045 = vadd.f32 %v2935, %v3044
      %3046 = vmatmul.bf16.gmra.mxu0 %v2644
      %v3047 = vpop.f32.mrf.mxu0
      %v3048 = vadd.f32 %v2938, %v3047
      %v3049 = vpop.f32.mrf.mxu0
      %v3050 = vadd.f32 %v2940, %v3049
      %3051 = vmatmul.bf16.gmra.mxu0 %v2647
      %v3052 = vpop.f32.mrf.mxu0
      %v3053 = vadd.f32 %v2943, %v3052
      %v3054 = vpop.f32.mrf.mxu0
      %v3055 = vadd.f32 %v2945, %v3054
      %3056 = vmatmul.bf16.gmra.mxu0 %v2650
      %v3057 = vpop.f32.mrf.mxu0
      %v3058 = vadd.f32 %v2948, %v3057
      %v3059 = vpop.f32.mrf.mxu0
      %v3060 = vadd.f32 %v2950, %v3059
      %3061 = vmatmul.bf16.gmra.mxu0 %v2653
      %v3062 = vpop.f32.mrf.mxu0
      %v3063 = vpop.f32.mrf.mxu0
      %3064 = vdwg.mxu0
      %3065 = vmatpush.bf16.msra.mxu0 0
      %3066 = vmatpush.bf16.msra.mxu0 0
      %3067 = vmatpush.bf16.msra.mxu0 0
      %3068 = vmatpush.bf16.msra.mxu0 0
      %3069 = vmatpush.bf16.msra.mxu0 0
      %3070 = vmatpush.bf16.msra.mxu0 0
      %3071 = vmatpush.bf16.msra.mxu0 %v2784
      %3072 = vmatpush.bf16.msra.mxu0 %v2783
      %3073 = vmatmul.bf16.gmra.mxu0 %v2803
      %v3074 = vpop.f32.mrf.mxu0
      %v3075 = vpop.f32.mrf.mxu0
      %3076 = vmatmul.bf16.gmra.mxu0 %v2805
      %v3077 = vpop.f32.mrf.mxu0
      %v3078 = vadd.f32 %v2968, %v3077
      %v3079 = vpop.f32.mrf.mxu0
      %v3080 = vadd.f32 %v2970, %v3079
      %3081 = vmatmul.bf16.gmra.mxu0 %v2807
      %v3082 = vpop.f32.mrf.mxu0
      %v3083 = vadd.f32 %v2973, %v3082
      %v3084 = vpop.f32.mrf.mxu0
      %v3085 = vadd.f32 %v2975, %v3084
      %3086 = vmatmul.bf16.gmra.mxu0 %v2809
      %v3087 = vpop.f32.mrf.mxu0
      %v3088 = vadd.f32 %v2978, %v3087
      %v3089 = vpop.f32.mrf.mxu0
      %v3090 = vadd.f32 %v2980, %v3089
      %3091 = vmatmul.bf16.gmra.mxu0 %v2811
      %v3092 = vpop.f32.mrf.mxu0
      %v3093 = vadd.f32 %v2983, %v3092
      %v3094 = vpop.f32.mrf.mxu0
      %v3095 = vadd.f32 %v2985, %v3094
      %3096 = vmatmul.bf16.gmra.mxu0 %v2813
      %v3097 = vpop.f32.mrf.mxu0
      %v3098 = vadd.f32 %v2988, %v3097
      %v3099 = vpop.f32.mrf.mxu0
      %v3100 = vadd.f32 %v2990, %v3099
      %3101 = vmatmul.bf16.gmra.mxu0 %v2815
      %v3102 = vpop.f32.mrf.mxu0
      %v3103 = vadd.f32 %v2993, %v3102
      %v3104 = vpop.f32.mrf.mxu0
      %v3105 = vadd.f32 %v2995, %v3104
      %3106 = vmatmul.bf16.gmra.mxu0 %v2817
      %v3107 = vpop.f32.mrf.mxu0
      %v3108 = vadd.f32 %v2998, %v3107
      %v3109 = vpop.f32.mrf.mxu0
      %v3110 = vadd.f32 %v3000, %v3109
      %3111 = vmatmul.bf16.gmra.mxu0 %v2819
      %v3112 = vpop.f32.mrf.mxu0
      %v3113 = vadd.f32 %v3003, %v3112
      %v3114 = vpop.f32.mrf.mxu0
      %v3115 = vadd.f32 %v3005, %v3114
      %3116 = vmatmul.bf16.gmra.mxu0 %v2821
      %v3117 = vpop.f32.mrf.mxu0
      %v3118 = vadd.f32 %v3008, %v3117
      %v3119 = vpop.f32.mrf.mxu0
      %v3120 = vadd.f32 %v3010, %v3119
      %3121 = vmatmul.bf16.gmra.mxu0 %v2823
      %v3122 = vpop.f32.mrf.mxu0
      %v3123 = vadd.f32 %v3013, %v3122
      %v3124 = vpop.f32.mrf.mxu0
      %v3125 = vadd.f32 %v3015, %v3124
      %3126 = vmatmul.bf16.gmra.mxu0 %v2825
      %v3127 = vpop.f32.mrf.mxu0
      %v3128 = vadd.f32 %v3018, %v3127
      %v3129 = vpop.f32.mrf.mxu0
      %v3130 = vadd.f32 %v3020, %v3129
      %3131 = vmatmul.bf16.gmra.mxu0 %v2827
      %v3132 = vpop.f32.mrf.mxu0
      %v3133 = vadd.f32 %v3023, %v3132
      %v3134 = vpop.f32.mrf.mxu0
      %v3135 = vadd.f32 %v3025, %v3134
      %3136 = vmatmul.bf16.gmra.mxu0 %v2829
      %v3137 = vpop.f32.mrf.mxu0
      %v3138 = vadd.f32 %v3028, %v3137
      %v3139 = vpop.f32.mrf.mxu0
      %v3140 = vadd.f32 %v3030, %v3139
      %3141 = vmatmul.bf16.gmra.mxu0 %v2831
      %v3142 = vpop.f32.mrf.mxu0
      %v3143 = vadd.f32 %v3033, %v3142
      %v3144 = vpop.f32.mrf.mxu0
      %v3145 = vadd.f32 %v3035, %v3144
      %3146 = vmatmul.bf16.gmra.mxu0 %v2833
      %v3147 = vpop.f32.mrf.mxu0
      %v3148 = vadd.f32 %v3038, %v3147
      %v3149 = vpop.f32.mrf.mxu0
      %v3150 = vadd.f32 %v3040, %v3149
      %3151 = vmatmul.bf16.gmra.mxu0 %v2835
      %v3152 = vpop.f32.mrf.mxu0
      %v3153 = vadd.f32 %v3043, %v3152
      %v3154 = vpop.f32.mrf.mxu0
      %v3155 = vadd.f32 %v3045, %v3154
      %3156 = vmatmul.bf16.gmra.mxu0 %v2837
      %v3157 = vpop.f32.mrf.mxu0
      %v3158 = vadd.f32 %v3048, %v3157
      %v3159 = vpop.f32.mrf.mxu0
      %v3160 = vadd.f32 %v3050, %v3159
      %3161 = vmatmul.bf16.gmra.mxu0 %v2839
      %v3162 = vpop.f32.mrf.mxu0
      %v3163 = vadd.f32 %v3053, %v3162
      %v3164 = vpop.f32.mrf.mxu0
      %v3165 = vadd.f32 %v3055, %v3164
      %3166 = vmatmul.bf16.gmra.mxu0 %v2841
      %v3167 = vpop.f32.mrf.mxu0
      %v3168 = vadd.f32 %v3058, %v3167
      %v3169 = vpop.f32.mrf.mxu0
      %v3170 = vadd.f32 %v3060, %v3169
      %3171 = vmatmul.bf16.gmra.mxu0 %v2843
      %v3172 = vpop.f32.mrf.mxu0
      %v3173 = vpop.f32.mrf.mxu0
      %3174 = vdwg.mxu0
      %v3175 = vmax.f32 %v3078, 0.0
      %v3176 = vmax.f32 %v3080, 0.0
      %v3177 = vmax.f32 %v3083, 0.0
      %v3178 = vmax.f32 %v3085, 0.0
      %v3179 = vmax.f32 %v3088, 0.0
      %v3180 = vmax.f32 %v3090, 0.0
      %v3181 = vmax.f32 %v3093, 0.0
      %v3182 = vmax.f32 %v3095, 0.0
      %v3183 = vmax.f32 %v3098, 0.0
      %v3184 = vmax.f32 %v3100, 0.0
      %v3185 = vmax.f32 %v3103, 0.0
      %v3186 = vmax.f32 %v3105, 0.0
      %v3187 = vmax.f32 %v3108, 0.0
      %v3188 = vmax.f32 %v3110, 0.0
      %v3189 = vmax.f32 %v3113, 0.0
      %v3190 = vmax.f32 %v3115, 0.0
      %v3191 = vmax.f32 %v3118, 0.0
      %v3192 = vmax.f32 %v3120, 0.0
      %v3193 = vmax.f32 %v3123, 0.0
      %v3194 = vmax.f32 %v3125, 0.0
      %v3195 = vmax.f32 %v3128, 0.0
      %v3196 = vmax.f32 %v3130, 0.0
      %v3197 = vmax.f32 %v3133, 0.0
      %v3198 = vmax.f32 %v3135, 0.0
      %v3199 = vmax.f32 %v3138, 0.0
      %v3200 = vmax.f32 %v3140, 0.0
      %v3201 = vmax.f32 %v3143, 0.0
      %v3202 = vmax.f32 %v3145, 0.0
      %v3203 = vmax.f32 %v3148, 0.0
      %v3204 = vmax.f32 %v3150, 0.0
      %v3205 = vmax.f32 %v3153, 0.0
      %v3206 = vmax.f32 %v3155, 0.0
      %v3207 = vmax.f32 %v3158, 0.0
      %v3208 = vmax.f32 %v3160, 0.0
      %v3209 = vmax.f32 %v3163, 0.0
      %v3210 = vmax.f32 %v3165, 0.0
      %v3211 = vmax.f32 %v3168, 0.0
      %v3212 = vmax.f32 %v3170, 0.0
      %v3213 = vmin.f32 %v3175, 6.0
      %v3214 = vmin.f32 %v3176, 6.0
      %v3215 = vmin.f32 %v3177, 6.0
      %v3216 = vmin.f32 %v3178, 6.0
      %v3217 = vmin.f32 %v3179, 6.0
      %v3218 = vmin.f32 %v3180, 6.0
      %v3219 = vmin.f32 %v3181, 6.0
      %v3220 = vmin.f32 %v3182, 6.0
      %v3221 = vmin.f32 %v3183, 6.0
      %v3222 = vmin.f32 %v3184, 6.0
      %v3223 = vmin.f32 %v3185, 6.0
      %v3224 = vmin.f32 %v3186, 6.0
      %v3225 = vmin.f32 %v3187, 6.0
      %v3226 = vmin.f32 %v3188, 6.0
      %v3227 = vmin.f32 %v3189, 6.0
      %v3228 = vmin.f32 %v3190, 6.0
      %v3229 = vmin.f32 %v3191, 6.0
      %v3230 = vmin.f32 %v3192, 6.0
      %v3231 = vmin.f32 %v3193, 6.0
      %v3232 = vmin.f32 %v3194, 6.0
      %v3233 = vmin.f32 %v3195, 6.0
      %v3234 = vmin.f32 %v3196, 6.0
      %v3235 = vmin.f32 %v3197, 6.0
      %v3236 = vmin.f32 %v3198, 6.0
      %v3237 = vmin.f32 %v3199, 6.0
      %v3238 = vmin.f32 %v3200, 6.0
      %v3239 = vmin.f32 %v3201, 6.0
      %v3240 = vmin.f32 %v3202, 6.0
      %v3241 = vmin.f32 %v3203, 6.0
      %v3242 = vmin.f32 %v3204, 6.0
      %v3243 = vmin.f32 %v3205, 6.0
      %v3244 = vmin.f32 %v3206, 6.0
      %v3245 = vmin.f32 %v3207, 6.0
      %v3246 = vmin.f32 %v3208, 6.0
      %v3247 = vmin.f32 %v3209, 6.0
      %v3248 = vmin.f32 %v3210, 6.0
      %v3249 = vmin.f32 %v3211, 6.0
      %v3250 = vmin.f32 %v3212, 6.0
      %v3251 = vmul.f32 %v3213, %v1535
      %v3252 = vmul.f32 %v3214, %v1540
      %v3253 = vmul.f32 %v3215, %v1545
      %v3254 = vmul.f32 %v3216, %v1550
      %v3255 = vmul.f32 %v3217, %v1555
      %v3256 = vmul.f32 %v3218, %v1560
      %v3257 = vmul.f32 %v3219, %v1565
      %v3258 = vmul.f32 %v3220, %v1570
      %v3259 = vmul.f32 %v3221, %v1575
      %v3260 = vmul.f32 %v3222, %v1580
      %v3261 = vmul.f32 %v3223, %v1585
      %v3262 = vmul.f32 %v3224, %v1590
      %v3263 = vmul.f32 %v3225, %v1595
      %v3264 = vmul.f32 %v3226, %v1600
      %v3265 = vmul.f32 %v3227, %v1605
      %v3266 = vmul.f32 %v3228, %v1610
      %v3267 = vmul.f32 %v3229, %v1615
      %v3268 = vmul.f32 %v3230, %v1620
      %v3269 = vmul.f32 %v3231, %v1625
      %v3270 = vmul.f32 %v3232, %v1630
      %v3271 = vmul.f32 %v3233, %v1635
      %v3272 = vmul.f32 %v3234, %v1640
      %v3273 = vmul.f32 %v3235, %v1645
      %v3274 = vmul.f32 %v3236, %v1650
      %v3275 = vmul.f32 %v3237, %v1655
      %v3276 = vmul.f32 %v3238, %v1660
      %v3277 = vmul.f32 %v3239, %v1665
      %v3278 = vmul.f32 %v3240, %v1670
      %v3279 = vmul.f32 %v3241, %v1675
      %v3280 = vmul.f32 %v3242, %v1680
      %v3281 = vmul.f32 %v3243, %v1685
      %v3282 = vmul.f32 %v3244, %v1690
      %v3283 = vmul.f32 %v3245, %v1695
      %v3284 = vmul.f32 %v3246, %v1700
      %v3285 = vmul.f32 %v3247, %v1705
      %v3286 = vmul.f32 %v3248, %v1710
      %v3287 = vmul.f32 %v3249, %v1715
      %v3288 = vmul.f32 %v3250, %v1720
      %v3289 = vpack.c.bf16 %v3251, %v3251
      %v3290 = vpack.c.bf16 %v3252, %v3252
      %v3291 = vpack.c.bf16 %v3253, %v3253
      %v3292 = vpack.c.bf16 %v3254, %v3254
      %v3293 = vpack.c.bf16 %v3255, %v3255
      %v3294 = vpack.c.bf16 %v3256, %v3256
      %v3295 = vpack.c.bf16 %v3257, %v3257
      %v3296 = vpack.c.bf16 %v3258, %v3258
      %v3297 = vpack.c.bf16 %v3259, %v3259
      %v3298 = vpack.c.bf16 %v3260, %v3260
      %v3299 = vpack.c.bf16 %v3261, %v3261
      %v3300 = vpack.c.bf16 %v3262, %v3262
      %v3301 = vpack.c.bf16 %v3263, %v3263
      %v3302 = vpack.c.bf16 %v3264, %v3264
      %v3303 = vpack.c.bf16 %v3265, %v3265
      %v3304 = vpack.c.bf16 %v3266, %v3266
      %v3305 = vpack.c.bf16 %v3267, %v3267
      %v3306 = vpack.c.bf16 %v3268, %v3268
      %v3307 = vpack.c.bf16 %v3269, %v3269
      %v3308 = vpack.c.bf16 %v3270, %v3270
      %v3309 = vpack.c.bf16 %v3271, %v3271
      %v3310 = vpack.c.bf16 %v3272, %v3272
      %v3311 = vpack.c.bf16 %v3273, %v3273
      %v3312 = vpack.c.bf16 %v3274, %v3274
      %v3313 = vpack.c.bf16 %v3275, %v3275
      %v3314 = vpack.c.bf16 %v3276, %v3276
      %v3315 = vpack.c.bf16 %v3277, %v3277
      %v3316 = vpack.c.bf16 %v3278, %v3278
      %v3317 = vpack.c.bf16 %v3279, %v3279
      %v3318 = vpack.c.bf16 %v3280, %v3280
      %v3319 = vpack.c.bf16 %v3281, %v3281
      %v3320 = vpack.c.bf16 %v3282, %v3282
      %v3321 = vpack.c.bf16 %v3283, %v3283
      %v3322 = vpack.c.bf16 %v3284, %v3284
      %v3323 = vpack.c.bf16 %v3285, %v3285
      %v3324 = vpack.c.bf16 %v3286, %v3286
      %v3325 = vpack.c.bf16 %v3287, %v3287
      %v3326 = vpack.c.bf16 %v3288, %v3288
      %v3363 = vunpack.c.l.b16 %v3289
      %v3364 = vunpack.c.l.b16 %v3290
      %v3365 = vunpack.c.l.b16 %v3291
      %v3366 = vunpack.c.l.b16 %v3292
      %v3367 = vunpack.c.l.b16 %v3293
      %v3368 = vunpack.c.l.b16 %v3294
      %v3369 = vunpack.c.l.b16 %v3295
      %v3370 = vunpack.c.l.b16 %v3296
      %v3371 = vunpack.c.l.b16 %v3297
      %v3372 = vunpack.c.l.b16 %v3298
      %v3373 = vunpack.c.l.b16 %v3299
      %v3374 = vunpack.c.l.b16 %v3300
      %v3375 = vunpack.c.l.b16 %v3301
      %v3376 = vunpack.c.l.b16 %v3302
      %v3377 = vunpack.c.l.b16 %v3303
      %v3378 = vunpack.c.l.b16 %v3304
      %v3379 = vunpack.c.l.b16 %v3305
      %v3380 = vunpack.c.l.b16 %v3306
      %v3381 = vunpack.c.l.b16 %v3307
      %v3382 = vunpack.c.l.b16 %v3308
      %v3383 = vunpack.c.l.b16 %v3309
      %v3384 = vunpack.c.l.b16 %v3310
      %v3385 = vunpack.c.l.b16 %v3311
      %v3386 = vunpack.c.l.b16 %v3312
      %v3387 = vunpack.c.l.b16 %v3313
      %v3388 = vunpack.c.l.b16 %v3314
      %v3389 = vunpack.c.l.b16 %v3315
      %v3390 = vunpack.c.l.b16 %v3316
      %v3391 = vunpack.c.l.b16 %v3317
      %v3392 = vunpack.c.l.b16 %v3318
      %v3393 = vunpack.c.l.b16 %v3319
      %v3394 = vunpack.c.l.b16 %v3320
      %v3395 = vunpack.c.l.b16 %v3321
      %v3396 = vunpack.c.l.b16 %v3322
      %v3397 = vunpack.c.l.b16 %v3323
      %v3398 = vunpack.c.l.b16 %v3324
      %v3399 = vpack.c.b16 %v3364, %v3363
      %v3400 = vpack.c.b16 %v3366, %v3365
      %v3401 = vpack.c.b16 %v3368, %v3367
      %v3402 = vpack.c.b16 %v3370, %v3369
      %v3403 = vpack.c.b16 %v3372, %v3371
      %v3404 = vpack.c.b16 %v3374, %v3373
      %v3405 = vpack.c.b16 %v3376, %v3375
      %v3406 = vpack.c.b16 %v3378, %v3377
      %v3407 = vpack.c.b16 %v3380, %v3379
      %v3408 = vpack.c.b16 %v3382, %v3381
      %v3409 = vpack.c.b16 %v3384, %v3383
      %v3410 = vpack.c.b16 %v3386, %v3385
      %v3411 = vpack.c.b16 %v3388, %v3387
      %v3412 = vpack.c.b16 %v3390, %v3389
      %v3413 = vpack.c.b16 %v3392, %v3391
      %v3414 = vpack.c.b16 %v3394, %v3393
      %v3415 = vpack.c.b16 %v3396, %v3395
      %v3416 = vpack.c.b16 %v3398, %v3397
      %v3418 = vshrl.u32 %v3399, 16
      %v3420 = vrot.slane %v3418, 7
      %v3422 = vshrl.u32 %v3400, 16
      %v3424 = vrot.slane %v3422, 7
      %v3425 = vshll.u32 %v3400, 16
      %v3427 = vor.u32 %v3424, %v3425
      %v3428 = vsel %vm558, %v3420, %v3427
      %v3430 = vshrl.u32 %v3401, 16
      %v3432 = vrot.slane %v3430, 7
      %v3433 = vshll.u32 %v3401, 16
      %v3435 = vor.u32 %v3432, %v3433
      %v3436 = vsel %vm558, %v3424, %v3435
      %v3438 = vshrl.u32 %v3402, 16
      %v3440 = vrot.slane %v3438, 7
      %v3441 = vshll.u32 %v3402, 16
      %v3443 = vor.u32 %v3440, %v3441
      %v3444 = vsel %vm558, %v3432, %v3443
      %v3446 = vshrl.u32 %v3403, 16
      %v3448 = vrot.slane %v3446, 7
      %v3449 = vshll.u32 %v3403, 16
      %v3451 = vor.u32 %v3448, %v3449
      %v3452 = vsel %vm558, %v3440, %v3451
      %v3454 = vshrl.u32 %v3404, 16
      %v3456 = vrot.slane %v3454, 7
      %v3457 = vshll.u32 %v3404, 16
      %v3459 = vor.u32 %v3456, %v3457
      %v3460 = vsel %vm558, %v3448, %v3459
      %v3462 = vshrl.u32 %v3405, 16
      %v3464 = vrot.slane %v3462, 7
      %v3465 = vshll.u32 %v3405, 16
      %v3467 = vor.u32 %v3464, %v3465
      %v3468 = vsel %vm558, %v3456, %v3467
      %v3470 = vshrl.u32 %v3406, 16
      %v3472 = vrot.slane %v3470, 7
      %v3473 = vshll.u32 %v3406, 16
      %v3475 = vor.u32 %v3472, %v3473
      %v3476 = vsel %vm558, %v3464, %v3475
      %v3478 = vshrl.u32 %v3407, 16
      %v3480 = vrot.slane %v3478, 7
      %v3481 = vshll.u32 %v3407, 16
      %v3483 = vor.u32 %v3480, %v3481
      %v3484 = vsel %vm558, %v3472, %v3483
      %v3486 = vshrl.u32 %v3408, 16
      %v3488 = vrot.slane %v3486, 7
      %v3489 = vshll.u32 %v3408, 16
      %v3491 = vor.u32 %v3488, %v3489
      %v3492 = vsel %vm558, %v3480, %v3491
      %v3494 = vshrl.u32 %v3409, 16
      %v3496 = vrot.slane %v3494, 7
      %v3497 = vshll.u32 %v3409, 16
      %v3499 = vor.u32 %v3496, %v3497
      %v3500 = vsel %vm558, %v3488, %v3499
      %v3502 = vshrl.u32 %v3410, 16
      %v3504 = vrot.slane %v3502, 7
      %v3505 = vshll.u32 %v3410, 16
      %v3507 = vor.u32 %v3504, %v3505
      %v3508 = vsel %vm558, %v3496, %v3507
      %v3510 = vshrl.u32 %v3411, 16
      %v3512 = vrot.slane %v3510, 7
      %v3513 = vshll.u32 %v3411, 16
      %v3515 = vor.u32 %v3512, %v3513
      %v3516 = vsel %vm558, %v3504, %v3515
      %v3518 = vshrl.u32 %v3412, 16
      %v3520 = vrot.slane %v3518, 7
      %v3521 = vshll.u32 %v3412, 16
      %v3523 = vor.u32 %v3520, %v3521
      %v3524 = vsel %vm558, %v3512, %v3523
      %v3526 = vshrl.u32 %v3413, 16
      %v3528 = vrot.slane %v3526, 7
      %v3529 = vshll.u32 %v3413, 16
      %v3531 = vor.u32 %v3528, %v3529
      %v3532 = vsel %vm558, %v3520, %v3531
      %v3534 = vshrl.u32 %v3414, 16
      %v3536 = vrot.slane %v3534, 7
      %v3537 = vshll.u32 %v3414, 16
      %v3539 = vor.u32 %v3536, %v3537
      %v3540 = vsel %vm558, %v3528, %v3539
      %v3542 = vshrl.u32 %v3415, 16
      %v3544 = vrot.slane %v3542, 7
      %v3545 = vshll.u32 %v3415, 16
      %v3547 = vor.u32 %v3544, %v3545
      %v3548 = vsel %vm558, %v3536, %v3547
      %v3550 = vshrl.u32 %v3416, 16
      %v3552 = vrot.slane %v3550, 7
      %v3553 = vshll.u32 %v3416, 16
      %v3555 = vor.u32 %v3552, %v3553
      %v3556 = vsel %vm558, %v3544, %v3555
      %v3559 = vunpack.c.l.b16 %v3325
      %v3560 = vunpack.c.l.b16 %v3326
      %v3561 = vpack.c.b16 %v3560, %v3559
      %v3562 = vrot.slane %v3425, 1
      %v3563 = vor.u32 %v3422, %v3562
      %v3564 = vrot.slane %v3433, 1
      %v3565 = vsel %vm730, %v3563, %v3564
      %v3566 = vor.u32 %v3430, %v3564
      %v3567 = vrot.slane %v3441, 1
      %v3568 = vsel %vm730, %v3566, %v3567
      %v3569 = vor.u32 %v3438, %v3567
      %v3570 = vrot.slane %v3449, 1
      %v3571 = vsel %vm730, %v3569, %v3570
      %v3572 = vor.u32 %v3446, %v3570
      %v3573 = vrot.slane %v3457, 1
      %v3574 = vsel %vm730, %v3572, %v3573
      %v3575 = vor.u32 %v3454, %v3573
      %v3576 = vrot.slane %v3465, 1
      %v3577 = vsel %vm730, %v3575, %v3576
      %v3578 = vor.u32 %v3462, %v3576
      %v3579 = vrot.slane %v3473, 1
      %v3580 = vsel %vm730, %v3578, %v3579
      %v3581 = vor.u32 %v3470, %v3579
      %v3582 = vrot.slane %v3481, 1
      %v3583 = vsel %vm730, %v3581, %v3582
      %v3584 = vor.u32 %v3478, %v3582
      %v3585 = vrot.slane %v3489, 1
      %v3586 = vsel %vm730, %v3584, %v3585
      %v3587 = vor.u32 %v3486, %v3585
      %v3588 = vrot.slane %v3497, 1
      %v3589 = vsel %vm730, %v3587, %v3588
      %v3590 = vor.u32 %v3494, %v3588
      %v3591 = vrot.slane %v3505, 1
      %v3592 = vsel %vm730, %v3590, %v3591
      %v3593 = vor.u32 %v3502, %v3591
      %v3594 = vrot.slane %v3513, 1
      %v3595 = vsel %vm730, %v3593, %v3594
      %v3596 = vor.u32 %v3510, %v3594
      %v3597 = vrot.slane %v3521, 1
      %v3598 = vsel %vm730, %v3596, %v3597
      %v3599 = vor.u32 %v3518, %v3597
      %v3600 = vrot.slane %v3529, 1
      %v3601 = vsel %vm730, %v3599, %v3600
      %v3602 = vor.u32 %v3526, %v3600
      %v3603 = vrot.slane %v3537, 1
      %v3604 = vsel %vm730, %v3602, %v3603
      %v3605 = vor.u32 %v3534, %v3603
      %v3606 = vrot.slane %v3545, 1
      %v3607 = vsel %vm730, %v3605, %v3606
      %v3608 = vor.u32 %v3542, %v3606
      %v3609 = vrot.slane %v3553, 1
      %v3610 = vsel %vm730, %v3608, %v3609
      %v3611 = vor.u32 %v3550, %v3609
      %v3613 = vshll.u32 %v3561, 16
      %v3615 = vrot.slane %v3613, 1
      %v3616 = vsel %vm730, %v3611, %v3615
      %3617 = vrot.lane.b32.xlu0 %v3400, 32
      %v3618 = vpop.permute.xlu0 %3617
      %3619 = vrot.lane.b32.xlu0 %v3401, 32
      %v3620 = vpop.permute.xlu0 %3619
      %3621 = vrot.lane.b32.xlu0 %v3402, 32
      %v3622 = vpop.permute.xlu0 %3621
      %3623 = vrot.lane.b32.xlu0 %v3403, 32
      %v3624 = vpop.permute.xlu0 %3623
      %3625 = vrot.lane.b32.xlu0 %v3404, 32
      %v3626 = vpop.permute.xlu0 %3625
      %3627 = vrot.lane.b32.xlu0 %v3405, 32
      %v3628 = vpop.permute.xlu0 %3627
      %3629 = vrot.lane.b32.xlu0 %v3406, 32
      %v3630 = vpop.permute.xlu0 %3629
      %3631 = vrot.lane.b32.xlu0 %v3407, 32
      %v3632 = vpop.permute.xlu0 %3631
      %3633 = vrot.lane.b32.xlu0 %v3408, 32
      %v3634 = vpop.permute.xlu0 %3633
      %3635 = vrot.lane.b32.xlu0 %v3409, 32
      %v3636 = vpop.permute.xlu0 %3635
      %3637 = vrot.lane.b32.xlu0 %v3410, 32
      %v3638 = vpop.permute.xlu0 %3637
      %3639 = vrot.lane.b32.xlu0 %v3411, 32
      %v3640 = vpop.permute.xlu0 %3639
      %3641 = vrot.lane.b32.xlu0 %v3412, 32
      %v3642 = vpop.permute.xlu0 %3641
      %3643 = vrot.lane.b32.xlu0 %v3413, 32
      %v3644 = vpop.permute.xlu0 %3643
      %3645 = vrot.lane.b32.xlu0 %v3414, 32
      %v3646 = vpop.permute.xlu0 %3645
      %3647 = vrot.lane.b32.xlu0 %v3415, 32
      %v3648 = vpop.permute.xlu0 %3647
      %3649 = vrot.lane.b32.xlu0 %v3416, 32
      %v3650 = vpop.permute.xlu0 %3649
      %3651 = vrot.lane.b32.xlu0 %v3565, 64
      %v3652 = vpop.permute.xlu0 %3651
      %3653 = vrot.lane.b32.xlu0 %v3568, 64
      %v3654 = vpop.permute.xlu0 %3653
      %3655 = vrot.lane.b32.xlu0 %v3571, 64
      %v3656 = vpop.permute.xlu0 %3655
      %3657 = vrot.lane.b32.xlu0 %v3574, 64
      %v3658 = vpop.permute.xlu0 %3657
      %3659 = vrot.lane.b32.xlu0 %v3577, 64
      %v3660 = vpop.permute.xlu0 %3659
      %3661 = vrot.lane.b32.xlu0 %v3580, 64
      %v3662 = vpop.permute.xlu0 %3661
      %3663 = vrot.lane.b32.xlu0 %v3583, 64
      %v3664 = vpop.permute.xlu0 %3663
      %3665 = vrot.lane.b32.xlu0 %v3586, 64
      %v3666 = vpop.permute.xlu0 %3665
      %3667 = vrot.lane.b32.xlu0 %v3589, 64
      %v3668 = vpop.permute.xlu0 %3667
      %3669 = vrot.lane.b32.xlu0 %v3592, 64
      %v3670 = vpop.permute.xlu0 %3669
      %3671 = vrot.lane.b32.xlu0 %v3595, 64
      %v3672 = vpop.permute.xlu0 %3671
      %3673 = vrot.lane.b32.xlu0 %v3598, 64
      %v3674 = vpop.permute.xlu0 %3673
      %3675 = vrot.lane.b32.xlu0 %v3601, 64
      %v3676 = vpop.permute.xlu0 %3675
      %3677 = vrot.lane.b32.xlu0 %v3604, 64
      %v3678 = vpop.permute.xlu0 %3677
      %3679 = vrot.lane.b32.xlu0 %v3607, 64
      %v3680 = vpop.permute.xlu0 %3679
      %3681 = vrot.lane.b32.xlu0 %v3610, 64
      %v3682 = vpop.permute.xlu0 %3681
      %3683 = vrot.lane.b32.xlu0 %v3616, 64
      %v3684 = vpop.permute.xlu0 %3683
      %v3687 = vsel %vm2251, %v3428, %v3618
      %v3690 = vsel %vm2251, %v3436, %v3620
      %v3693 = vsel %vm2251, %v3444, %v3622
      %v3696 = vsel %vm2251, %v3452, %v3624
      %v3699 = vsel %vm2251, %v3460, %v3626
      %v3702 = vsel %vm2251, %v3468, %v3628
      %v3705 = vsel %vm2251, %v3476, %v3630
      %v3708 = vsel %vm2251, %v3484, %v3632
      %v3711 = vsel %vm2251, %v3492, %v3634
      %v3714 = vsel %vm2251, %v3500, %v3636
      %v3717 = vsel %vm2251, %v3508, %v3638
      %v3720 = vsel %vm2251, %v3516, %v3640
      %v3723 = vsel %vm2251, %v3524, %v3642
      %v3726 = vsel %vm2251, %v3532, %v3644
      %v3729 = vsel %vm2251, %v3540, %v3646
      %v3732 = vsel %vm2251, %v3548, %v3648
      %v3735 = vsel %vm2251, %v3556, %v3650
      %v3737 = vsel %vm2315, %v3687, %v3652
      %v3739 = vsel %vm2315, %v3690, %v3654
      %v3741 = vsel %vm2315, %v3693, %v3656
      %v3743 = vsel %vm2315, %v3696, %v3658
      %v3745 = vsel %vm2315, %v3699, %v3660
      %v3747 = vsel %vm2315, %v3702, %v3662
      %v3749 = vsel %vm2315, %v3705, %v3664
      %v3751 = vsel %vm2315, %v3708, %v3666
      %v3753 = vsel %vm2315, %v3711, %v3668
      %v3755 = vsel %vm2315, %v3714, %v3670
      %v3757 = vsel %vm2315, %v3717, %v3672
      %v3759 = vsel %vm2315, %v3720, %v3674
      %v3761 = vsel %vm2315, %v3723, %v3676
      %v3763 = vsel %vm2315, %v3726, %v3678
      %v3765 = vsel %vm2315, %v3729, %v3680
      %v3767 = vsel %vm2315, %v3732, %v3682
      %v3769 = vsel %vm2315, %v3735, %v3684
      %v3784 = vrot.slane %v3737, 4
      %v3785 = vrot.slane %v3739, 4
      %v3786 = vsel %vm997, %v3784, %v3785
      %v3787 = vrot.slane %v3741, 4
      %v3788 = vsel %vm997, %v3785, %v3787
      %v3789 = vrot.slane %v3743, 4
      %v3790 = vsel %vm997, %v3787, %v3789
      %v3791 = vrot.slane %v3745, 4
      %v3792 = vsel %vm997, %v3789, %v3791
      %v3793 = vrot.slane %v3747, 4
      %v3794 = vsel %vm997, %v3791, %v3793
      %v3795 = vrot.slane %v3749, 4
      %v3796 = vsel %vm997, %v3793, %v3795
      %v3797 = vrot.slane %v3751, 4
      %v3798 = vsel %vm997, %v3795, %v3797
      %v3799 = vrot.slane %v3753, 4
      %v3800 = vsel %vm997, %v3797, %v3799
      %v3801 = vrot.slane %v3755, 4
      %v3802 = vsel %vm997, %v3799, %v3801
      %v3803 = vrot.slane %v3757, 4
      %v3804 = vsel %vm997, %v3801, %v3803
      %v3805 = vrot.slane %v3759, 4
      %v3806 = vsel %vm997, %v3803, %v3805
      %v3807 = vrot.slane %v3761, 4
      %v3808 = vsel %vm997, %v3805, %v3807
      %v3809 = vrot.slane %v3763, 4
      %v3810 = vsel %vm997, %v3807, %v3809
      %v3814 = vrot.slane %v3765, 4
      %v3815 = vsel %vm997, %v3809, %v3814
      %v3816 = vrot.slane %v3767, 4
      %v3817 = vsel %vm997, %v3814, %v3816
      %v3818 = vrot.slane %v3769, 4
      %v3819 = vsel %vm997, %v3816, %v3818
      %3820 = vrot.lane.b32.xlu0 %v3741, 96
      %v3821 = vpop.permute.xlu0 %3820
      %3822 = vrot.lane.b32.xlu0 %v3743, 96
      %v3823 = vpop.permute.xlu0 %3822
      %3824 = vrot.lane.b32.xlu0 %v3745, 96
      %v3825 = vpop.permute.xlu0 %3824
      %3826 = vrot.lane.b32.xlu0 %v3747, 96
      %v3827 = vpop.permute.xlu0 %3826
      %3828 = vrot.lane.b32.xlu0 %v3749, 96
      %v3829 = vpop.permute.xlu0 %3828
      %3830 = vrot.lane.b32.xlu0 %v3751, 96
      %v3831 = vpop.permute.xlu0 %3830
      %3832 = vrot.lane.b32.xlu0 %v3753, 96
      %v3833 = vpop.permute.xlu0 %3832
      %3834 = vrot.lane.b32.xlu0 %v3755, 96
      %v3835 = vpop.permute.xlu0 %3834
      %3836 = vrot.lane.b32.xlu0 %v3757, 96
      %v3837 = vpop.permute.xlu0 %3836
      %3838 = vrot.lane.b32.xlu0 %v3759, 96
      %v3839 = vpop.permute.xlu0 %3838
      %3840 = vrot.lane.b32.xlu0 %v3761, 96
      %v3841 = vpop.permute.xlu0 %3840
      %3842 = vrot.lane.b32.xlu0 %v3763, 96
      %v3843 = vpop.permute.xlu0 %3842
      %3844 = vrot.lane.b32.xlu0 %v3765, 96
      %v3845 = vpop.permute.xlu0 %3844
      %3846 = vrot.lane.b32.xlu0 %v3792, 64
      %v3847 = vpop.permute.xlu0 %3846
      %3848 = vrot.lane.b32.xlu0 %v3794, 64
      %v3849 = vpop.permute.xlu0 %3848
      %3850 = vrot.lane.b32.xlu0 %v3796, 64
      %v3851 = vpop.permute.xlu0 %3850
      %3852 = vrot.lane.b32.xlu0 %v3798, 64
      %v3853 = vpop.permute.xlu0 %3852
      %3854 = vrot.lane.b32.xlu0 %v3800, 64
      %v3855 = vpop.permute.xlu0 %3854
      %3856 = vrot.lane.b32.xlu0 %v3802, 64
      %v3857 = vpop.permute.xlu0 %3856
      %3858 = vrot.lane.b32.xlu0 %v3804, 64
      %v3859 = vpop.permute.xlu0 %3858
      %3860 = vrot.lane.b32.xlu0 %v3806, 64
      %v3861 = vpop.permute.xlu0 %3860
      %3862 = vrot.lane.b32.xlu0 %v3808, 64
      %v3863 = vpop.permute.xlu0 %3862
      %3864 = vrot.lane.b32.xlu0 %v3810, 64
      %v3865 = vpop.permute.xlu0 %3864
      %3866 = vrot.lane.b32.xlu0 %v3815, 64
      %v3867 = vpop.permute.xlu0 %3866
      %3868 = vrot.lane.b32.xlu0 %v3817, 64
      %v3869 = vpop.permute.xlu0 %3868
      %3870 = vrot.lane.b32.xlu0 %v3819, 64
      %v3871 = vpop.permute.xlu0 %3870
      %v3874 = vsel %vm2508, %v3786, %v3821
      %v3877 = vsel %vm2508, %v3788, %v3823
      %v3880 = vsel %vm2508, %v3790, %v3825
      %v3883 = vsel %vm2508, %v3792, %v3827
      %v3886 = vsel %vm2508, %v3794, %v3829
      %v3889 = vsel %vm2508, %v3796, %v3831
      %v3892 = vsel %vm2508, %v3798, %v3833
      %v3895 = vsel %vm2508, %v3800, %v3835
      %v3898 = vsel %vm2508, %v3802, %v3837
      %v3901 = vsel %vm2508, %v3804, %v3839
      %v3904 = vsel %vm2508, %v3806, %v3841
      %v3907 = vsel %vm2508, %v3808, %v3843
      %v3910 = vsel %vm2508, %v3810, %v3845
      %v3912 = vsel %vm2315, %v3821, %v3847
      %v3914 = vsel %vm2315, %v3823, %v3849
      %v3916 = vsel %vm2315, %v3825, %v3851
      %v3918 = vsel %vm2315, %v3827, %v3853
      %v3920 = vsel %vm2315, %v3829, %v3855
      %v3922 = vsel %vm2315, %v3831, %v3857
      %v3924 = vsel %vm2315, %v3833, %v3859
      %v3926 = vsel %vm2315, %v3835, %v3861
      %v3928 = vsel %vm2315, %v3837, %v3863
      %v3930 = vsel %vm2315, %v3839, %v3865
      %v3932 = vsel %vm2315, %v3841, %v3867
      %v3934 = vsel %vm2315, %v3843, %v3869
      %v3936 = vsel %vm2315, %v3845, %v3871
      %v3937 = vld [vmem:[%s6] sm:$0xf]
      %v3938 = vld [vmem:[%s6 + $0x4] sm:$0xf]
      %v3939 = vld [vmem:[%s6 + $0x8] sm:$0xf]
      %v3940 = vld [vmem:[%s6 + $0xc] sm:$0xf]
      %v3941 = vld [vmem:[%s6 + $0x10] sm:$0xf]
      %v3942 = vld [vmem:[%s6 + $0x14] sm:$0xf]
      %v3943 = vld [vmem:[%s6 + $0x18] sm:$0xf]
      %v3944 = vld [vmem:[%s6 + $0x1c] sm:$0xf]
      %v3945 = vld [vmem:[%s6 + $0x20] sm:$0xf]
      %v3946 = vld [vmem:[%s6 + $0x24] sm:$0xf]
      %v3947 = vld [vmem:[%s6 + $0x28] sm:$0xf]
      %v3948 = vld [vmem:[%s6 + $0x2c] sm:$0xf]
      %v3949 = vld [vmem:[%s6 + $0x30] sm:$0xf]
      %v3950 = vld [vmem:[%s6 + $0x34] sm:$0xf]
      %v3951 = vld [vmem:[%s6 + $0x38] sm:$0xf]
      %v3952 = vld [vmem:[%s6 + $0x3c] sm:$0xf]
      %v3953 = vld [vmem:[%s6 + $0x40] sm:$0xf]
      %v3954 = vld [vmem:[%s6 + $0x44] sm:$0xf]
      %v3955 = vld [vmem:[%s6 + $0x48] sm:$0xf]
      %v3956 = vld [vmem:[%s6 + $0x4c] sm:$0xf]
      %v3957 = vld [vmem:[%s6 + $0x50] sm:$0xf]
      %v3958 = vld [vmem:[%s6 + $0x54] sm:$0xf]
      %v3959 = vld [vmem:[%s6 + $0x58] sm:$0xf]
      %v3960 = vld [vmem:[%s6 + $0x5c] sm:$0xf]
      %v3961 = vld [vmem:[%s6 + $0x60] sm:$0xf]
      %v3962 = vld [vmem:[%s6 + $0x64] sm:$0xf]
      %v3963 = vld [vmem:[%s6 + $0x68] sm:$0xf]
      %v3964 = vld [vmem:[%s6 + $0x6c] sm:$0xf]
      %v3965 = vld [vmem:[%s6 + $0x70] sm:$0xf]
      %v3966 = vld [vmem:[%s6 + $0x74] sm:$0xf]
      %v3967 = vld [vmem:[%s6 + $0x78] sm:$0xf]
      %v3968 = vld [vmem:[%s6 + $0x7c] sm:$0xf]
      %v3969 = vld [vmem:[%s6 + $0x80] sm:$0xf]
      %v3970 = vld [vmem:[%s6 + $0x84] sm:$0xf]
      %v3971 = vld [vmem:[%s6 + $0x88] sm:$0xf]
      %v3972 = vld [vmem:[%s6 + $0x8c] sm:$0xf]
      %v3973 = vld [vmem:[%s7] sm:$0x1]
      %v3975 = vperm.slane %v3973, 0
      %v4003 = vrot.slane %v3874, 4
      %v4004 = vrot.slane %v3877, 4
      %v4005 = vsel %vm997, %v4003, %v4004
      %v4006 = vrot.slane %v3912, 4
      %v4007 = vrot.slane %v3914, 4
      %v4008 = vsel %vm997, %v4006, %v4007
      %v4009 = vrot.slane %v3847, 4
      %v4010 = vrot.slane %v3849, 4
      %v4011 = vsel %vm997, %v4009, %v4010
      %v4012 = vrot.slane %v3880, 4
      %v4013 = vsel %vm997, %v4004, %v4012
      %v4014 = vrot.slane %v3916, 4
      %v4015 = vsel %vm997, %v4007, %v4014
      %v4016 = vrot.slane %v3851, 4
      %v4017 = vsel %vm997, %v4010, %v4016
      %v4018 = vrot.slane %v3883, 4
      %v4019 = vsel %vm997, %v4012, %v4018
      %v4020 = vrot.slane %v3918, 4
      %v4021 = vsel %vm997, %v4014, %v4020
      %v4022 = vrot.slane %v3853, 4
      %v4023 = vsel %vm997, %v4016, %v4022
      %v4024 = vrot.slane %v3886, 4
      %v4025 = vsel %vm997, %v4018, %v4024
      %v4026 = vrot.slane %v3920, 4
      %v4027 = vsel %vm997, %v4020, %v4026
      %v4028 = vrot.slane %v3855, 4
      %v4029 = vsel %vm997, %v4022, %v4028
      %v4030 = vrot.slane %v3889, 4
      %v4031 = vsel %vm997, %v4024, %v4030
      %v4032 = vrot.slane %v3922, 4
      %v4033 = vsel %vm997, %v4026, %v4032
      %v4034 = vrot.slane %v3857, 4
      %v4035 = vsel %vm997, %v4028, %v4034
      %v4036 = vrot.slane %v3892, 4
      %v4037 = vsel %vm997, %v4030, %v4036
      %v4038 = vrot.slane %v3924, 4
      %v4039 = vsel %vm997, %v4032, %v4038
      %v4040 = vrot.slane %v3859, 4
      %v4041 = vsel %vm997, %v4034, %v4040
      %v4042 = vrot.slane %v3895, 4
      %v4043 = vsel %vm997, %v4036, %v4042
      %v4044 = vrot.slane %v3926, 4
      %v4045 = vsel %vm997, %v4038, %v4044
      %v4046 = vrot.slane %v3861, 4
      %v4047 = vsel %vm997, %v4040, %v4046
      %v4048 = vrot.slane %v3898, 4
      %v4049 = vsel %vm997, %v4042, %v4048
      %v4050 = vrot.slane %v3928, 4
      %v4051 = vsel %vm997, %v4044, %v4050
      %v4052 = vrot.slane %v3863, 4
      %v4053 = vsel %vm997, %v4046, %v4052
      %v4054 = vrot.slane %v3901, 4
      %v4055 = vsel %vm997, %v4048, %v4054
      %v4056 = vrot.slane %v3930, 4
      %v4057 = vsel %vm997, %v4050, %v4056
      %v4058 = vrot.slane %v3865, 4
      %v4059 = vsel %vm997, %v4052, %v4058
      %v4060 = vrot.slane %v3904, 4
      %v4061 = vsel %vm997, %v4054, %v4060
      %v4062 = vrot.slane %v3932, 4
      %v4063 = vsel %vm997, %v4056, %v4062
      %v4064 = vrot.slane %v3867, 4
      %v4065 = vsel %vm997, %v4058, %v4064
      %v4066 = vrot.slane %v3907, 4
      %v4067 = vsel %vm997, %v4060, %v4066
      %v4068 = vrot.slane %v3934, 4
      %v4069 = vsel %vm997, %v4062, %v4068
      %v4070 = vrot.slane %v3869, 4
      %v4071 = vsel %vm997, %v4064, %v4070
      %v4072 = vrot.slane %v3910, 4
      %v4073 = vsel %vm997, %v4066, %v4072
      %v4074 = vrot.slane %v3936, 4
      %v4075 = vsel %vm997, %v4068, %v4074
      %v4076 = vrot.slane %v3871, 4
      %v4077 = vsel %vm997, %v4070, %v4076
      %v4138 = vunpack.c.l.b16 %v3937
      %v4139 = vunpack.c.l.b16 %v3938
      %v4140 = vunpack.c.l.b16 %v3939
      %v4141 = vunpack.c.l.b16 %v3940
      %v4142 = vunpack.c.l.b16 %v3941
      %v4143 = vunpack.c.l.b16 %v3942
      %v4144 = vunpack.c.l.b16 %v3943
      %v4145 = vunpack.c.l.b16 %v3944
      %v4146 = vunpack.c.l.b16 %v3945
      %v4147 = vunpack.c.l.b16 %v3946
      %v4148 = vunpack.c.l.b16 %v3947
      %v4149 = vunpack.c.l.b16 %v3948
      %v4150 = vunpack.c.l.b16 %v3949
      %v4151 = vunpack.c.l.b16 %v3950
      %v4152 = vunpack.c.l.b16 %v3951
      %v4153 = vunpack.c.l.b16 %v3952
      %v4154 = vunpack.c.l.b16 %v3953
      %v4155 = vunpack.c.l.b16 %v3954
      %v4156 = vunpack.c.l.b16 %v3955
      %v4157 = vunpack.c.l.b16 %v3956
      %v4158 = vunpack.c.l.b16 %v3957
      %v4159 = vunpack.c.l.b16 %v3958
      %v4160 = vunpack.c.l.b16 %v3959
      %v4161 = vunpack.c.l.b16 %v3960
      %v4162 = vunpack.c.l.b16 %v3961
      %v4163 = vunpack.c.l.b16 %v3962
      %v4164 = vunpack.c.l.b16 %v3963
      %v4165 = vunpack.c.l.b16 %v3964
      %v4166 = vunpack.c.l.b16 %v3965
      %v4167 = vunpack.c.l.b16 %v3966
      %v4168 = vunpack.c.l.b16 %v3967
      %v4169 = vunpack.c.l.b16 %v3968
      %v4170 = vunpack.c.l.b16 %v3969
      %v4171 = vunpack.c.l.b16 %v3970
      %v4172 = vunpack.c.l.b16 %v3971
      %v4173 = vunpack.c.l.b16 %v3972
      %v4174 = vpack.c.b16 %v4139, %v4138
      %v4175 = vpack.c.b16 %v4141, %v4140
      %v4176 = vpack.c.b16 %v4143, %v4142
      %v4177 = vpack.c.b16 %v4145, %v4144
      %v4178 = vpack.c.b16 %v4147, %v4146
      %v4179 = vpack.c.b16 %v4149, %v4148
      %v4180 = vpack.c.b16 %v4151, %v4150
      %v4181 = vpack.c.b16 %v4153, %v4152
      %v4182 = vpack.c.b16 %v4155, %v4154
      %v4183 = vpack.c.b16 %v4157, %v4156
      %v4184 = vpack.c.b16 %v4159, %v4158
      %v4185 = vpack.c.b16 %v4161, %v4160
      %v4186 = vpack.c.b16 %v4163, %v4162
      %v4187 = vpack.c.b16 %v4165, %v4164
      %v4188 = vpack.c.b16 %v4167, %v4166
      %v4189 = vpack.c.b16 %v4169, %v4168
      %v4190 = vpack.c.b16 %v4171, %v4170
      %v4191 = vpack.c.b16 %v4173, %v4172
      %v4211 = vsel %vm2251, %v4011, 0
      %v4214 = vsel %vm2251, %v4017, 0
      %v4217 = vsel %vm2251, %v4023, 0
      %v4220 = vsel %vm2251, %v4029, 0
      %v4223 = vsel %vm2251, %v4035, 0
      %v4226 = vsel %vm2251, %v4041, 0
      %v4229 = vsel %vm2251, %v4047, 0
      %v4232 = vsel %vm2251, %v4053, 0
      %v4235 = vsel %vm2251, %v4059, 0
      %v4238 = vsel %vm2251, %v4065, 0
      %v4241 = vsel %vm2251, %v4071, 0
      %v4244 = vsel %vm2251, %v4077, 0
      %4246 = vmatpush.bf16.msra.mxu0 %v4181
      %4247 = vmatpush.bf16.msra.mxu0 %v4180
      %4248 = vmatpush.bf16.msra.mxu0 %v4179
      %4249 = vmatpush.bf16.msra.mxu0 %v4178
      %4250 = vmatpush.bf16.msra.mxu0 %v4177
      %4251 = vmatpush.bf16.msra.mxu0 %v4176
      %4252 = vmatpush.bf16.msra.mxu0 %v4175
      %4253 = vmatpush.bf16.msra.mxu0 %v4174
      %4254 = vmatmul.bf16.gmra.mxu0 %v4005
      %v4255 = vpop.f32.mrf.mxu0
      %v4256 = vadd.f32 %v3975, %v4255
      %v4257 = vpop.f32.mrf.mxu0
      %v4258 = vadd.f32 %v3975, %v4257
      %4259 = vmatmul.bf16.gmra.mxu0 %v4013
      %v4260 = vpop.f32.mrf.mxu0
      %v4261 = vadd.f32 %v3975, %v4260
      %v4262 = vpop.f32.mrf.mxu0
      %v4263 = vadd.f32 %v3975, %v4262
      %4264 = vmatmul.bf16.gmra.mxu0 %v4019
      %v4265 = vpop.f32.mrf.mxu0
      %v4266 = vadd.f32 %v3975, %v4265
      %v4267 = vpop.f32.mrf.mxu0
      %v4268 = vadd.f32 %v3975, %v4267
      %4269 = vmatmul.bf16.gmra.mxu0 %v4025
      %v4270 = vpop.f32.mrf.mxu0
      %v4271 = vadd.f32 %v3975, %v4270
      %v4272 = vpop.f32.mrf.mxu0
      %v4273 = vadd.f32 %v3975, %v4272
      %4274 = vmatmul.bf16.gmra.mxu0 %v4031
      %v4275 = vpop.f32.mrf.mxu0
      %v4276 = vadd.f32 %v3975, %v4275
      %v4277 = vpop.f32.mrf.mxu0
      %v4278 = vadd.f32 %v3975, %v4277
      %4279 = vmatmul.bf16.gmra.mxu0 %v4037
      %v4280 = vpop.f32.mrf.mxu0
      %v4281 = vadd.f32 %v3975, %v4280
      %v4282 = vpop.f32.mrf.mxu0
      %v4283 = vadd.f32 %v3975, %v4282
      %4284 = vmatmul.bf16.gmra.mxu0 %v4043
      %v4285 = vpop.f32.mrf.mxu0
      %v4286 = vadd.f32 %v3975, %v4285
      %v4287 = vpop.f32.mrf.mxu0
      %v4288 = vadd.f32 %v3975, %v4287
      %4289 = vmatmul.bf16.gmra.mxu0 %v4049
      %v4290 = vpop.f32.mrf.mxu0
      %v4291 = vadd.f32 %v3975, %v4290
      %v4292 = vpop.f32.mrf.mxu0
      %v4293 = vadd.f32 %v3975, %v4292
      %4294 = vmatmul.bf16.gmra.mxu0 %v4055
      %v4295 = vpop.f32.mrf.mxu0
      %v4296 = vadd.f32 %v3975, %v4295
      %v4297 = vpop.f32.mrf.mxu0
      %v4298 = vadd.f32 %v3975, %v4297
      %4299 = vmatmul.bf16.gmra.mxu0 %v4061
      %v4300 = vpop.f32.mrf.mxu0
      %v4301 = vadd.f32 %v3975, %v4300
      %v4302 = vpop.f32.mrf.mxu0
      %v4303 = vadd.f32 %v3975, %v4302
      %4304 = vmatmul.bf16.gmra.mxu0 %v4067
      %v4305 = vpop.f32.mrf.mxu0
      %v4306 = vadd.f32 %v3975, %v4305
      %v4307 = vpop.f32.mrf.mxu0
      %v4308 = vadd.f32 %v3975, %v4307
      %4309 = vmatmul.bf16.gmra.mxu0 %v4073
      %v4310 = vpop.f32.mrf.mxu0
      %v4311 = vadd.f32 %v3975, %v4310
      %v4312 = vpop.f32.mrf.mxu0
      %v4313 = vadd.f32 %v3975, %v4312
      %4314 = vdwg.mxu0
      %4315 = vmatpush.bf16.msra.mxu0 %v4189
      %4316 = vmatpush.bf16.msra.mxu0 %v4188
      %4317 = vmatpush.bf16.msra.mxu0 %v4187
      %4318 = vmatpush.bf16.msra.mxu0 %v4186
      %4319 = vmatpush.bf16.msra.mxu0 %v4185
      %4320 = vmatpush.bf16.msra.mxu0 %v4184
      %4321 = vmatpush.bf16.msra.mxu0 %v4183
      %4322 = vmatpush.bf16.msra.mxu0 %v4182
      %4323 = vmatmul.bf16.gmra.mxu0 %v4008
      %v4324 = vpop.f32.mrf.mxu0
      %v4325 = vadd.f32 %v4256, %v4324
      %v4326 = vpop.f32.mrf.mxu0
      %v4327 = vadd.f32 %v4258, %v4326
      %4328 = vmatmul.bf16.gmra.mxu0 %v4015
      %v4329 = vpop.f32.mrf.mxu0
      %v4330 = vadd.f32 %v4261, %v4329
      %v4331 = vpop.f32.mrf.mxu0
      %v4332 = vadd.f32 %v4263, %v4331
      %4333 = vmatmul.bf16.gmra.mxu0 %v4021
      %v4334 = vpop.f32.mrf.mxu0
      %v4335 = vadd.f32 %v4266, %v4334
      %v4336 = vpop.f32.mrf.mxu0
      %v4337 = vadd.f32 %v4268, %v4336
      %4338 = vmatmul.bf16.gmra.mxu0 %v4027
      %v4339 = vpop.f32.mrf.mxu0
      %v4340 = vadd.f32 %v4271, %v4339
      %v4341 = vpop.f32.mrf.mxu0
      %v4342 = vadd.f32 %v4273, %v4341
      %4343 = vmatmul.bf16.gmra.mxu0 %v4033
      %v4344 = vpop.f32.mrf.mxu0
      %v4345 = vadd.f32 %v4276, %v4344
      %v4346 = vpop.f32.mrf.mxu0
      %v4347 = vadd.f32 %v4278, %v4346
      %4348 = vmatmul.bf16.gmra.mxu0 %v4039
      %v4349 = vpop.f32.mrf.mxu0
      %v4350 = vadd.f32 %v4281, %v4349
      %v4351 = vpop.f32.mrf.mxu0
      %v4352 = vadd.f32 %v4283, %v4351
      %4353 = vmatmul.bf16.gmra.mxu0 %v4045
      %v4354 = vpop.f32.mrf.mxu0
      %v4355 = vadd.f32 %v4286, %v4354
      %v4356 = vpop.f32.mrf.mxu0
      %v4357 = vadd.f32 %v4288, %v4356
      %4358 = vmatmul.bf16.gmra.mxu0 %v4051
      %v4359 = vpop.f32.mrf.mxu0
      %v4360 = vadd.f32 %v4291, %v4359
      %v4361 = vpop.f32.mrf.mxu0
      %v4362 = vadd.f32 %v4293, %v4361
      %4363 = vmatmul.bf16.gmra.mxu0 %v4057
      %v4364 = vpop.f32.mrf.mxu0
      %v4365 = vadd.f32 %v4296, %v4364
      %v4366 = vpop.f32.mrf.mxu0
      %v4367 = vadd.f32 %v4298, %v4366
      %4368 = vmatmul.bf16.gmra.mxu0 %v4063
      %v4369 = vpop.f32.mrf.mxu0
      %v4370 = vadd.f32 %v4301, %v4369
      %v4371 = vpop.f32.mrf.mxu0
      %v4372 = vadd.f32 %v4303, %v4371
      %4373 = vmatmul.bf16.gmra.mxu0 %v4069
      %v4374 = vpop.f32.mrf.mxu0
      %v4375 = vadd.f32 %v4306, %v4374
      %v4376 = vpop.f32.mrf.mxu0
      %v4377 = vadd.f32 %v4308, %v4376
      %4378 = vmatmul.bf16.gmra.mxu0 %v4075
      %v4379 = vpop.f32.mrf.mxu0
      %v4380 = vadd.f32 %v4311, %v4379
      %v4381 = vpop.f32.mrf.mxu0
      %v4382 = vadd.f32 %v4313, %v4381
      %4383 = vdwg.mxu0
      %4384 = vmatpush.bf16.msra.mxu0 0
      %4385 = vmatpush.bf16.msra.mxu0 0
      %4386 = vmatpush.bf16.msra.mxu0 0
      %4387 = vmatpush.bf16.msra.mxu0 0
      %4388 = vmatpush.bf16.msra.mxu0 0
      %4389 = vmatpush.bf16.msra.mxu0 0
      %4390 = vmatpush.bf16.msra.mxu0 %v4191
      %4391 = vmatpush.bf16.msra.mxu0 %v4190
      %4392 = vmatmul.bf16.gmra.mxu0 %v4211
      %v4393 = vpop.f32.mrf.mxu0
      %v4394 = vadd.f32 %v4325, %v4393
      %v4395 = vpop.f32.mrf.mxu0
      %v4396 = vadd.f32 %v4327, %v4395
      %4397 = vmatmul.bf16.gmra.mxu0 %v4214
      %v4398 = vpop.f32.mrf.mxu0
      %v4399 = vadd.f32 %v4330, %v4398
      %v4400 = vpop.f32.mrf.mxu0
      %v4401 = vadd.f32 %v4332, %v4400
      %4402 = vmatmul.bf16.gmra.mxu0 %v4217
      %v4403 = vpop.f32.mrf.mxu0
      %v4404 = vadd.f32 %v4335, %v4403
      %v4405 = vpop.f32.mrf.mxu0
      %v4406 = vadd.f32 %v4337, %v4405
      %4407 = vmatmul.bf16.gmra.mxu0 %v4220
      %v4408 = vpop.f32.mrf.mxu0
      %v4409 = vadd.f32 %v4340, %v4408
      %v4410 = vpop.f32.mrf.mxu0
      %v4411 = vadd.f32 %v4342, %v4410
      %4412 = vmatmul.bf16.gmra.mxu0 %v4223
      %v4413 = vpop.f32.mrf.mxu0
      %v4414 = vadd.f32 %v4345, %v4413
      %v4415 = vpop.f32.mrf.mxu0
      %v4416 = vadd.f32 %v4347, %v4415
      %4417 = vmatmul.bf16.gmra.mxu0 %v4226
      %v4418 = vpop.f32.mrf.mxu0
      %v4419 = vadd.f32 %v4350, %v4418
      %v4420 = vpop.f32.mrf.mxu0
      %v4421 = vadd.f32 %v4352, %v4420
      %4422 = vmatmul.bf16.gmra.mxu0 %v4229
      %v4423 = vpop.f32.mrf.mxu0
      %v4424 = vadd.f32 %v4355, %v4423
      %v4425 = vpop.f32.mrf.mxu0
      %v4426 = vadd.f32 %v4357, %v4425
      %4427 = vmatmul.bf16.gmra.mxu0 %v4232
      %v4428 = vpop.f32.mrf.mxu0
      %v4429 = vadd.f32 %v4360, %v4428
      %v4430 = vpop.f32.mrf.mxu0
      %v4431 = vadd.f32 %v4362, %v4430
      %4432 = vmatmul.bf16.gmra.mxu0 %v4235
      %v4433 = vpop.f32.mrf.mxu0
      %v4434 = vadd.f32 %v4365, %v4433
      %v4435 = vpop.f32.mrf.mxu0
      %v4436 = vadd.f32 %v4367, %v4435
      %4437 = vmatmul.bf16.gmra.mxu0 %v4238
      %v4438 = vpop.f32.mrf.mxu0
      %v4439 = vadd.f32 %v4370, %v4438
      %v4440 = vpop.f32.mrf.mxu0
      %v4441 = vadd.f32 %v4372, %v4440
      %4442 = vmatmul.bf16.gmra.mxu0 %v4241
      %v4443 = vpop.f32.mrf.mxu0
      %v4444 = vadd.f32 %v4375, %v4443
      %v4445 = vpop.f32.mrf.mxu0
      %v4446 = vadd.f32 %v4377, %v4445
      %4447 = vmatmul.bf16.gmra.mxu0 %v4244
      %v4448 = vpop.f32.mrf.mxu0
      %v4449 = vadd.f32 %v4380, %v4448
      %v4450 = vpop.f32.mrf.mxu0
      %v4451 = vadd.f32 %v4382, %v4450
      %4452 = vdwg.mxu0
      %v4453 = vmax.f32 %v4394, 0.0
      %v4454 = vmax.f32 %v4396, 0.0
      %v4455 = vmax.f32 %v4399, 0.0
      %v4456 = vmax.f32 %v4401, 0.0
      %v4457 = vmax.f32 %v4404, 0.0
      %v4458 = vmax.f32 %v4406, 0.0
      %v4459 = vmax.f32 %v4409, 0.0
      %v4460 = vmax.f32 %v4411, 0.0
      %v4461 = vmax.f32 %v4414, 0.0
      %v4462 = vmax.f32 %v4416, 0.0
      %v4463 = vmax.f32 %v4419, 0.0
      %v4464 = vmax.f32 %v4421, 0.0
      %v4465 = vmax.f32 %v4424, 0.0
      %v4466 = vmax.f32 %v4426, 0.0
      %v4467 = vmax.f32 %v4429, 0.0
      %v4468 = vmax.f32 %v4431, 0.0
      %v4469 = vmax.f32 %v4434, 0.0
      %v4470 = vmax.f32 %v4436, 0.0
      %v4471 = vmax.f32 %v4439, 0.0
      %v4472 = vmax.f32 %v4441, 0.0
      %v4473 = vmax.f32 %v4444, 0.0
      %v4474 = vmax.f32 %v4446, 0.0
      %v4475 = vmax.f32 %v4449, 0.0
      %v4476 = vmax.f32 %v4451, 0.0
      %v4477 = vmin.f32 %v4453, 6.0
      %v4478 = vmin.f32 %v4454, 6.0
      %v4479 = vmin.f32 %v4455, 6.0
      %v4480 = vmin.f32 %v4456, 6.0
      %v4481 = vmin.f32 %v4457, 6.0
      %v4482 = vmin.f32 %v4458, 6.0
      %v4483 = vmin.f32 %v4459, 6.0
      %v4484 = vmin.f32 %v4460, 6.0
      %v4485 = vmin.f32 %v4461, 6.0
      %v4486 = vmin.f32 %v4462, 6.0
      %v4487 = vmin.f32 %v4463, 6.0
      %v4488 = vmin.f32 %v4464, 6.0
      %v4489 = vmin.f32 %v4465, 6.0
      %v4490 = vmin.f32 %v4466, 6.0
      %v4491 = vmin.f32 %v4467, 6.0
      %v4492 = vmin.f32 %v4468, 6.0
      %v4493 = vmin.f32 %v4469, 6.0
      %v4494 = vmin.f32 %v4470, 6.0
      %v4495 = vmin.f32 %v4471, 6.0
      %v4496 = vmin.f32 %v4472, 6.0
      %v4497 = vmin.f32 %v4473, 6.0
      %v4498 = vmin.f32 %v4474, 6.0
      %v4499 = vmin.f32 %v4475, 6.0
      %v4500 = vmin.f32 %v4476, 6.0
      %4501 = vxpose.xlu0.b32.start [1/16] %v4477, 128
      %4502 = vxpose.xlu0.b32.cont [2/16] %v4478, 128
      %4503 = vxpose.xlu0.b32.cont [3/16] %v4479, 128
      %4504 = vxpose.xlu0.b32.cont [4/16] %v4480, 128
      %4505 = vxpose.xlu0.b32.cont [5/16] %v4481, 128
      %4506 = vxpose.xlu0.b32.cont [6/16] %v4482, 128
      %4507 = vxpose.xlu0.b32.cont [7/16] %v4483, 128
      %4508 = vxpose.xlu0.b32.cont [8/16] %v4484, 128
      %4509 = vxpose.xlu0.b32.cont [9/16] %v4485, 128
      %4510 = vxpose.xlu0.b32.cont [10/16] %v4486, 128
      %4511 = vxpose.xlu0.b32.cont [11/16] %v4487, 128
      %4512 = vxpose.xlu0.b32.cont [12/16] %v4488, 128
      %4513 = vxpose.xlu0.b32.cont [13/16] %v4489, 128
      %4514 = vxpose.xlu0.b32.cont [14/16] %v4490, 128
      %4515 = vxpose.xlu0.b32.cont [15/16] %v4491, 128
      %4516 = vxpose.xlu0.b32.end [16/16] %v4492, 128
      %v4517 = vpop.trf.xlu0
      %v4518 = vpop.trf.xlu0
      %v4519 = vpop.trf.xlu0
      %v4520 = vpop.trf.xlu0
      %v4521 = vpop.trf.xlu0
      %v4522 = vpop.trf.xlu0
      %v4523 = vpop.trf.xlu0
      %v4524 = vpop.trf.xlu0
      %v4525 = vpop.trf.xlu0
      %v4526 = vpop.trf.xlu0
      %v4527 = vpop.trf.xlu0
      %v4528 = vpop.trf.xlu0
      %v4529 = vpop.trf.xlu0
      %v4530 = vpop.trf.xlu0
      %v4531 = vpop.trf.xlu0
      %v4532 = vpop.trf.xlu0
      %4533 = vxpose.xlu0.b32.start [1/16] %v4493, 128
      %4534 = vxpose.xlu0.b32.cont [2/16] %v4494, 128
      %4535 = vxpose.xlu0.b32.cont [3/16] %v4495, 128
      %4536 = vxpose.xlu0.b32.cont [4/16] %v4496, 128
      %4537 = vxpose.xlu0.b32.cont [5/16] %v4497, 128
      %4538 = vxpose.xlu0.b32.cont [6/16] %v4498, 128
      %4539 = vxpose.xlu0.b32.cont [7/16] %v4499, 128
      %4540 = vxpose.xlu0.b32.cont [8/16] %v4500, 128
      %4541 = vxpose.xlu0.b32.cont [9/16] 0.0, 128
      %4542 = vxpose.xlu0.b32.cont [10/16] 0.0, 128
      %4543 = vxpose.xlu0.b32.cont [11/16] 0.0, 128
      %4544 = vxpose.xlu0.b32.cont [12/16] 0.0, 128
      %4545 = vxpose.xlu0.b32.cont [13/16] 0.0, 128
      %4546 = vxpose.xlu0.b32.cont [14/16] 0.0, 128
      %4547 = vxpose.xlu0.b32.cont [15/16] 0.0, 128
      %4548 = vxpose.xlu0.b32.end [16/16] 0.0, 128
      %v4549 = vpop.trf.xlu0
      %v4550 = vpop.trf.xlu0
      %v4551 = vpop.trf.xlu0
      %v4552 = vpop.trf.xlu0
      %v4553 = vpop.trf.xlu0
      %v4554 = vpop.trf.xlu0
      %v4555 = vpop.trf.xlu0
      %v4556 = vpop.trf.xlu0
      %v4557 = vpop.trf.xlu0
      %v4558 = vpop.trf.xlu0
      %v4559 = vpop.trf.xlu0
      %v4560 = vpop.trf.xlu0
      %v4561 = vpop.trf.xlu0
      %v4562 = vpop.trf.xlu0
      %v4563 = vpop.trf.xlu0
      %v4564 = vpop.trf.xlu0
      %v4565 = vsel %vm1058, %v4517, -inf
      %v4566 = vrot.slane %v4565, 4
      %v4567 = vmax.f32 %v4565, %v4566
      %v4568 = vrot.slane %v4567, 2
      %v4569 = vmax.f32 %v4567, %v4568
      %v4570 = vrot.slane %v4569, 1
      %v4571 = vmax.f32 %v4569, %v4570
      %vm4572 = vcmask 519168
      %v4573 = vsel %vm4572, %v4549, -inf
      %v4574 = vrot.slane %v4573, 4
      %v4575 = vmax.f32 %v4573, %v4574
      %v4576 = vrot.slane %v4575, 2
      %v4577 = vmax.f32 %v4575, %v4576
      %v4578 = vrot.slane %v4577, 1
      %v4579 = vmax.f32 %v4577, %v4578
      %v4580 = vsub.f32 %v4517, %v4571
      %v4581 = vsub.f32 %v4549, %v4579
      %v4582 = vmul.f32 %v4580, 1.442695
      %v4583 = vpow.pop %v4582
      %v4584 = vmul.f32 %v4581, 1.442695
      %v4585 = vpow.pop %v4584
      %v4586 = vsel %vm1058, %v4583, 0.0
      %v4587 = vrot.slane %v4586, 4
      %v4588 = vadd.f32 %v4586, %v4587
      %v4589 = vrot.slane %v4588, 2
      %v4590 = vadd.f32 %v4588, %v4589
      %v4591 = vrot.slane %v4590, 1
      %v4592 = vadd.f32 %v4590, %v4591
      %v4593 = vsel %vm4572, %v4585, 0.0
      %v4594 = vrot.slane %v4593, 4
      %v4595 = vadd.f32 %v4593, %v4594
      %v4596 = vrot.slane %v4595, 2
      %v4597 = vadd.f32 %v4595, %v4596
      %v4598 = vrot.slane %v4597, 1
      %v4599 = vadd.f32 %v4597, %v4598
      %v4600 = vrcp.pop %v4592
      %v4601 = vrcp.pop %v4599
      %v4602 = vmul.f32 %v4583, %v4600
      %v4603 = vmul.f32 %v4585, %v4601
      %v4604 = vsel %vm1058, %v4602, %v4517
      %v4605 = vsel %vm1058, %v4603, %v4549
      %4606 = vst [vmem:[%s361] sm:$0xff] %v4604
      %4607 = vst.msk [vmem:[%s361 + $0x8] sm:$0xff] %vm2315, %v4605
      %p4608 = scmp.lt.s32.totalorder %s23, 1
      %s4609 = scalar_select %p4608, %s23, 1
      %p4610 = scmp.lt.s32.totalorder %s24, 1
      %s4611 = scalar_select %p4610, %s24, 1
      %s4612 = smul.addr %s4611, 2
      %s4613 = smul.addr %s4609, 4
      %s4614 = sadd.s32 %s4612, %s4613
      %s4615 = smul.addr %s4614, 8
      %s4616 = scalar_lea.vmem %s8, %s4615
      // Predicated region
      $region53: #{guidance_net_forward.1} parent=51 // pred_check
        %p4617 = pneg %p231
      $region54: #{guidance_net_forward.1} parent=51 // pred_check_branch
        %4619 = sbr.rel (%p4617) target = $region56
      $region55: #{guidance_net_forward.1} parent=51 // pred_region
        _
      $region56: #{guidance_net_forward.1} parent=51 // pred_fallthru
        _
    $region52: #{guidance_net_forward.1} parent=5 // pred_fallthru
      _
    %p4620 = scmp.le.s32.totalorder 2, %s14
    // Predicated region
    $region57: #{guidance_net_forward.1} parent=5 // pred_check
      %p4621 = pneg %p4620
    $region58: #{guidance_net_forward.1} parent=5 // pred_check_branch
      %4623 = sbr.rel (%p4621) target = $region60
    $region59: #{guidance_net_forward.1} parent=5 // pred_region
      %s4624 = ssub.s32 %s14, 2
      // Predicated region
      $region61: #{guidance_net_forward.1} parent=59 // pred_check
        %p4625 = pneg %p237
      $region62: #{guidance_net_forward.1} parent=59 // pred_check_branch
        %4627 = sbr.rel (%p4625) target = $region64
      $region63: #{guidance_net_forward.1} parent=59 // pred_region
        %p4628 = scmp.lt.s32.totalorder %s25, 1
        %s4629 = scalar_select %p4628, %s25, 1
        %p4630 = scmp.lt.s32.totalorder %s26, 1
        %s4631 = scalar_select %p4630, %s26, 1
        %s4632 = smul.addr %s4631, 2
        %s4633 = smul.addr %s4629, 4
        %s4634 = sadd.s32 %s4632, %s4633
        %s4635 = smul.addr %s4634, 8
        %s4636 = scalar_lea.vmem %s8, %s4635
      $region64: #{guidance_net_forward.1} parent=59 // pred_fallthru
        _
    $region60: #{guidance_net_forward.1} parent=5 // pred_fallthru
      _
  $region6: #{guidance_net_forward.1} parent=0 // loop_footer
    %s18 = sadd.s32 1, %s14
  $region7: #{guidance_net_forward.1} parent=0 // loop_footer_branch
    %13 = sbr.rel target = $region3
  $region8: #{guidance_net_forward.1} parent=0 // loop_exit
    _

</llo_original>
